<compile_context>
chip_gen: v7x
topology: tpu7x:2x2x1
jax: 0.10.0
libtpu: 0.0.40
codegen_flags: <defaults>
</compile_context>

<pallas_src>
import jax
import jax.numpy as jnp
from jax.experimental import pallas as pl
from jax.experimental.pallas import tpu as pltpu

NEG_SLOPE = 0.2
BN_EPS = 1e-5
LANE = 128
VMEM_LIMIT = 32 * 1024 * 1024  # safe scoped-VMEM cap on v5e/v6e/v7x


def _round_up(x, m):
    return ((x + m - 1) // m) * m


def _choose_tiles(M, cap=512):
    """Pick (TM, MT) so that MT >= 2 and even (v7x: both TensorCores busy)."""
    ntiles = max(2, 2 * pl.cdiv(M, 2 * cap))       # even target tile count
    tm = _round_up(pl.cdiv(M, ntiles), 8)          # sublane-aligned M tile
    mt = max(2, pl.cdiv(M, tm))                    # at least 2 grid steps
    if mt % 2:                                     # keep MT even for megacore
        mt += 1
    return tm, mt


def _pad2(x, rows, cols):
    r, c = x.shape
    if r == rows and c == cols:
        return x
    return jnp.pad(x, ((0, rows - r), (0, cols - c)))


def _compiler_params():
    return pltpu.CompilerParams(
        dimension_semantics=("parallel",),
        vmem_limit_bytes=VMEM_LIMIT,
    )


# ------------------------------ Pallas kernels ------------------------------ #
def _gemm_bias_act_kernel(mode):
    """GEMM tile + bias + activation.  mode in {"lrelu", "sigmoid"}."""

    def kernel(x_ref, w_ref, b_ref, o_ref):
        y = jnp.dot(x_ref[...], w_ref[...], preferred_element_type=jnp.float32)
        y = y + b_ref[...]
        if mode == "lrelu":
            y = jnp.where(y >= 0.0, y, NEG_SLOPE * y)
        else:  # sigmoid (exact; final layer is tiny)
            y = 1.0 / (1.0 + jnp.exp(-y))
        o_ref[...] = y.astype(o_ref.dtype)

    return kernel


def _gemm_stats_kernel(x_ref, w_ref, y_ref, st_ref):
    """GEMM tile -> bf16 pre-activation + per-tile (sum, sumsq) f32 partials.

    Sums are reduced from the f32 accumulator *before* the bf16 store, so the
    batch statistics stay exact.  Zero-padded M rows contribute 0 to both sums.
    """
    y = jnp.dot(x_ref[...], w_ref[...], preferred_element_type=jnp.float32)
    y_ref[...] = y.astype(y_ref.dtype)
    s = jnp.sum(y, axis=0, keepdims=True)        # (1, Np)
    q = jnp.sum(y * y, axis=0, keepdims=True)    # (1, Np)
    st_ref[...] = jnp.concatenate([s, q], axis=0)[None]   # (1, 2, Np)


# ------------------------------ layer wrappers ------------------------------ #
def gemm_bias_act(patches, w, bias, mode, out_dtype, cout):
    """Conv-as-GEMM + bias + (LeakyReLU | Sigmoid), tiled over M."""
    M, Kp = patches.shape
    _, Np = w.shape
    TM, MT = _choose_tiles(M)
    Mp = MT * TM
    x = patches if Mp == M else jnp.pad(patches, ((0, Mp - M), (0, 0)))

    out = pl.pallas_call(
        _gemm_bias_act_kernel(mode),
        out_shape=jax.ShapeDtypeStruct((Mp, Np), out_dtype),
        grid=(MT,),
        in_specs=[
            pl.BlockSpec((TM, Kp), lambda i: (i, 0)),
            pl.BlockSpec((Kp, Np), lambda i: (0, 0)),
            pl.BlockSpec((1, Np), lambda i: (0, 0)),
        ],
        out_specs=pl.BlockSpec((TM, Np), lambda i: (i, 0)),
        compiler_params=_compiler_params(),
        cost_estimate=pl.CostEstimate(
            flops=2 * Mp * Kp * Np,
            transcendentals=(Mp * Np if mode == "sigmoid" else 0),
            bytes_accessed=Mp * Kp * 2 + Kp * Np * 2
            + Mp * Np * jnp.dtype(out_dtype).itemsize,
        ),
    )(x, w, bias)
    return out[:M, :cout]


def gemm_bn_stats(patches, w, gamma_p, beta_p, cout):
    """Conv-as-GEMM (no bias) + exact batch statistics in one pass.

    Returns the bf16 pre-activation and the folded per-channel (a, b) such
    that the BN + LeakyReLU is `lrelu(y_pre * a + b)`; that affine+activation
    is applied lazily by the *consumer* (fused into its im2col glue), so no
    second Pallas pass over the activation is needed.
    """
    M, Kp = patches.shape
    _, Np = w.shape
    TM, MT = _choose_tiles(M)
    Mp = MT * TM
    x = patches if Mp == M else jnp.pad(patches, ((0, Mp - M), (0, 0)))

    y_pre, st = pl.pallas_call(
        _gemm_stats_kernel,
        out_shape=(
            jax.ShapeDtypeStruct((Mp, Np), jnp.bfloat16),
            jax.ShapeDtypeStruct((MT, 2, Np), jnp.float32),
        ),
        grid=(MT,),
        in_specs=[
            pl.BlockSpec((TM, Kp), lambda i: (i, 0)),
            pl.BlockSpec((Kp, Np), lambda i: (0, 0)),
        ],
        out_specs=(
            pl.BlockSpec((TM, Np), lambda i: (i, 0)),
            pl.BlockSpec((1, 2, Np), lambda i: (i, 0, 0)),
        ),
        compiler_params=_compiler_params(),
        cost_estimate=pl.CostEstimate(
            flops=2 * Mp * Kp * Np,
            transcendentals=0,
            bytes_accessed=Mp * Kp * 2 + Kp * Np * 2 + Mp * Np * 2
            + MT * 2 * Np * 4,
        ),
    )(x, w)

    # Tiny XLA glue: fold exact (biased, training-mode) batch stats into (a, b).
    mean = jnp.sum(st[:, 0, :], axis=0) / M                 # (Np,)
    ex2 = jnp.sum(st[:, 1, :], axis=0) / M
    var = jnp.maximum(ex2 - mean * mean, 0.0)
    a = gamma_p[0] * jax.lax.rsqrt(var + BN_EPS)            # (Np,)
    b = beta_p[0] - mean * a
    return y_pre[:M, :cout], (a[:cout], b[:cout])


# ------------------------------- JAX glue ----------------------------------- #
def im2col_nhwc(x, pre, kpad, k=4, s=2, p=1):
    """x: [N,H,W,C] (bf16) -> patches [N*Ho*Wo, kpad], feature order (kh,kw,c).

    If `pre = (a, b)` is given, the deferred BatchNorm affine + LeakyReLU of
    the *producer* layer is applied here (before the spatial zero-pad, so the
    conv's zero padding sees true zeros — matching PyTorch).  XLA fuses it
    with the pad/slice/concat of the im2col.
    """
    # TODO(synk): fuse im2col into the GEMM kernel (overlapping k=4/s=2 windows
    # need manual DMA over an ANY-space input); currently bf16 XLA glue.
    if pre is not None:
        a, b = pre
        xf = x.astype(jnp.float32) * a + b
        x = jnp.where(xf >= 0.0, xf, NEG_SLOPE * xf).astype(jnp.bfloat16)
    N, H, W, C = x.shape
    xp = jnp.pad(x, ((0, 0), (p, p), (p, p), (0, 0)))
    Ho = (H + 2 * p - k) // s + 1
    Wo = (W + 2 * p - k) // s + 1
    taps = []
    for kh in range(k):
        for kw in range(k):
            taps.append(
                xp[:, kh: kh + s * (Ho - 1) + 1: s,
                      kw: kw + s * (Wo - 1) + 1: s, :]
            )
    patches = jnp.concatenate(taps, axis=-1).reshape(N * Ho * Wo, k * k * C)
    if kpad > k * k * C:   # lane-dense K (layer 1: 48 -> 128); zeros are free
        patches = jnp.pad(patches, ((0, 0), (0, kpad - k * k * C)))
    return patches, Ho, Wo


def conv_layer(x_nhwc, arrs, m, pre, mode, out_dtype=jnp.bfloat16):
    N = x_nhwc.shape[0]
    patches, Ho, Wo = im2col_nhwc(x_nhwc, pre, m["Kp"], k=m["k"])
    if mode == "bn":
        y, nxt = gemm_bn_stats(patches, arrs["w"], arrs["g"], arrs["be"], m["cout"])
        return y.reshape(N, Ho, Wo, m["cout"]), nxt
    y = gemm_bias_act(patches, arrs["w"], arrs["b"], mode, out_dtype, m["cout"])
    return y.reshape(N, Ho, Wo, m["cout"])


def discriminator_forward(x_nchw, arrays, meta):
    # Single layout conversion at the module boundary; NHWC / bf16 in between.
    x = jnp.transpose(x_nchw, (0, 2, 3, 1)).astype(jnp.bfloat16)
    x = conv_layer(x, arrays["l1"], meta["l1"], None, "lrelu")            # Conv + LReLU
    x, pre = conv_layer(x, arrays["l2"], meta["l2"], None, "bn")          # fd  -> 2fd
    x, pre = conv_layer(x, arrays["l3"], meta["l3"], pre, "bn")           # 2fd -> 4fd
    x, pre = conv_layer(x, arrays["l4"], meta["l4"], pre, "bn")           # 4fd -> 8fd
    x = conv_layer(x, arrays["l5"], meta["l5"], pre, "sigmoid",
                   out_dtype=jnp.float32)                                 # Conv + Sigmoid
    return jnp.transpose(x, (0, 3, 1, 2))  # back to NCHW like PyTorch


# ----------------------- one-time parameter preparation --------------------- #
def prepare_params(p):
    """Hoisted out of the forward: weight transpose/pad/bf16 cast + vector pads.

    Returns (arrays pytree for jit, static Python metadata).
    """
    arrays, meta = {}, {}

    def prep(name, w, bias=None, gamma=None, beta=None):
        Cout, Cin, k, _ = w.shape
        K = k * k * Cin
        Kp = _round_up(K, LANE)
        Np = _round_up(Cout, LANE)
        # PyTorch (Cout, Cin, kh, kw) -> (kh*kw*Cin, Cout) matching patch order.
        wm = jnp.transpose(w, (2, 3, 1, 0)).reshape(K, Cout)
        arrays[name] = {"w": _pad2(wm, Kp, Np).astype(jnp.bfloat16)}
        if bias is not None:
            arrays[name]["b"] = _pad2(bias.reshape(1, Cout).astype(jnp.float32), 1, Np)
        if gamma is not None:
            arrays[name]["g"] = _pad2(gamma.reshape(1, Cout).astype(jnp.float32), 1, Np)
            arrays[name]["be"] = _pad2(beta.reshape(1, Cout).astype(jnp.float32), 1, Np)
        meta[name] = {"cout": Cout, "k": k, "Kp": Kp}

    prep("l1", p["w1"], bias=p["b1"])
    prep("l2", p["w2"], gamma=p["g2"], beta=p["be2"])
    prep("l3", p["w3"], gamma=p["g3"], beta=p["be3"])
    prep("l4", p["w4"], gamma=p["g4"], beta=p["be4"])
    prep("l5", p["w5"], bias=p["b5"])
    return arrays, meta


def init_params(key, channels_img, features_d):
    ks = jax.random.split(key, 8)
    wn = lambda k, shape: 0.02 * jax.random.normal(k, shape, jnp.float32)
    fd = features_d
    return {
        "w1": wn(ks[0], (fd, channels_img, 4, 4)),
        "b1": wn(ks[1], (fd,)),
        "w2": wn(ks[2], (fd * 2, fd, 4, 4)),
        "g2": jnp.ones((fd * 2,), jnp.float32),
        "be2": jnp.zeros((fd * 2,), jnp.float32),
        "w3": wn(ks[3], (fd * 4, fd * 2, 4, 4)),
        "g3": jnp.ones((fd * 4,), jnp.float32),
        "be3": jnp.zeros((fd * 4,), jnp.float32),
        "w4": wn(ks[4], (fd * 8, fd * 4, 4, 4)),
        "g4": jnp.ones((fd * 8,), jnp.float32),
        "be4": jnp.zeros((fd * 8,), jnp.float32),
        "w5": wn(ks[5], (1, fd * 8, 4, 4)),
        "b5": wn(ks[6], (1,)),
    }


if __name__ == "__main__":
    channels_img, features_d = 3, 8
    batch, spatial = 2, 32  # 32 -> 16 -> 8 -> 4 -> 2 -> 1

    key = jax.random.PRNGKey(0)
    pkey, xkey = jax.random.split(key)
    params = init_params(pkey, channels_img, features_d)
    arrays, meta = prepare_params(params)      # one-time prep, outside the jit
    x = jax.random.normal(xkey, (batch, channels_img, spatial, spatial), jnp.float32)

    fwd = jax.jit(lambda xx, aa: discriminator_forward(xx, aa, meta))
    out = jax.block_until_ready(fwd(x, arrays))

    assert out.shape == (batch, 1, 1, 1), out.shape
    assert bool(jnp.all(jnp.isfinite(out)))
    assert bool(jnp.all((out >= 0.0) & (out <= 1.0)))  # sigmoid range
    print("KERNEL_OK")
</pallas_src>

<mosaic_0001>
module attributes {stable_mosaic.version = 11 : i64} {
  func.func @kernel(%arg0: i32, %arg1: memref<256x128xbf16, #tpu.memory_space<vmem>>, %arg2: memref<128x128xbf16, #tpu.memory_space<vmem>>, %arg3: memref<1x128xf32, #tpu.memory_space<vmem>>, %arg4: memref<256x128xbf16, #tpu.memory_space<vmem>>) attributes {dimension_semantics = [#tpu.dimension_semantics<parallel>], iteration_bounds = array<i64: 2>, scalar_prefetch = 0 : i64, scratch_operands = 0 : i64, tpu.core_type = #tpu.core_type<tc>, window_params = [{transform_indices = @transform_0, window_bounds = array<i64: 256, 128>}, {pipeline_mode = #tpu.pipeline_mode<synchronous>, transform_indices = @transform_1, window_bounds = array<i64: 128, 128>}, {pipeline_mode = #tpu.pipeline_mode<synchronous>, transform_indices = @transform_2, window_bounds = array<i64: 1, 128>}, {transform_indices = @transform_3, window_bounds = array<i64: 256, 128>}]} {
    %c0 = arith.constant 0 : index
    %c0_0 = arith.constant 0 : index
    %0 = vector.load %arg1[%c0, %c0_0] : memref<256x128xbf16, #tpu.memory_space<vmem>>, vector<256x128xbf16>
    %c0_1 = arith.constant 0 : index
    %c0_2 = arith.constant 0 : index
    %1 = vector.load %arg2[%c0_1, %c0_2] : memref<128x128xbf16, #tpu.memory_space<vmem>>, vector<128x128xbf16>
    %cst = arith.constant dense<0.000000e+00> : vector<256x128xf32>
    %2 = tpu.matmul %0, %1, %cst {dimension_numbers = #tpu.dot_dimension_numbers<[1], [0], [0], [1], [0, 0, 1, 1], [], []>} : vector<256x128xbf16>, vector<128x128xbf16>, vector<256x128xf32> -> vector<256x128xf32>
    %c0_3 = arith.constant 0 : index
    %c0_4 = arith.constant 0 : index
    %3 = vector.load %arg3[%c0_3, %c0_4] : memref<1x128xf32, #tpu.memory_space<vmem>>, vector<1x128xf32>
    %4 = vector.broadcast %3 : vector<1x128xf32> to vector<256x128xf32>
    %5 = arith.addf %2, %4 : vector<256x128xf32>
    %cst_5 = arith.constant 0.000000e+00 : f32
    %6 = vector.broadcast %cst_5 : f32 to vector<256x128xf32>
    %7 = arith.cmpf oge, %5, %6 : vector<256x128xf32>
    %cst_6 = arith.constant 2.000000e-01 : f32
    %8 = vector.broadcast %cst_6 : f32 to vector<256x128xf32>
    %9 = arith.mulf %8, %5 : vector<256x128xf32>
    %10 = arith.select %7, %5, %9 : vector<256x128xi1>, vector<256x128xf32>
    %11 = arith.truncf %10 : vector<256x128xf32> to vector<256x128xbf16>
    %c0_7 = arith.constant 0 : index
    %c0_8 = arith.constant 0 : index
    %12 = vector.load %arg4[%c0_7, %c0_8] : memref<256x128xbf16, #tpu.memory_space<vmem>>, vector<256x128xbf16>
    tpu.vector_store %arg4[%c0_7, %c0_8], %11 {strides = array<i32>} : memref<256x128xbf16, #tpu.memory_space<vmem>>, vector<256x128xbf16>,
    return
  }
  func.func @transform_0(%arg0: i32) -> (i32, i32) {
    %c0_i32 = arith.constant 0 : i32
    %c0_i32_0 = arith.constant 0 : i32
    return %arg0, %c0_i32 : i32, i32
  }
  func.func @transform_1(%arg0: i32) -> (i32, i32) {
    %c0_i32 = arith.constant 0 : i32
    %c0_i32_0 = arith.constant 0 : i32
    %c0_i32_1 = arith.constant 0 : i32
    return %c0_i32, %c0_i32_0 : i32, i32
  }
  func.func @transform_2(%arg0: i32) -> (i32, i32) {
    %c0_i32 = arith.constant 0 : i32
    %c0_i32_0 = arith.constant 0 : i32
    %c0_i32_1 = arith.constant 0 : i32
    return %c0_i32, %c0_i32_0 : i32, i32
  }
  func.func @transform_3(%arg0: i32) -> (i32, i32) {
    %c0_i32 = arith.constant 0 : i32
    %c0_i32_0 = arith.constant 0 : i32
    return %arg0, %c0_i32 : i32, i32
  }
}

module attributes {stable_mosaic.version = 11 : i64} {
  func.func @_gemm_stats_kernel(%arg0: i32, %arg1: memref<64x128xbf16, #tpu.memory_space<vmem>>, %arg2: memref<128x128xbf16, #tpu.memory_space<vmem>>, %arg3: memref<64x128xbf16, #tpu.memory_space<vmem>>, %arg4: memref<1x2x128xf32, #tpu.memory_space<vmem>>) attributes {dimension_semantics = [#tpu.dimension_semantics<parallel>], iteration_bounds = array<i64: 2>, scalar_prefetch = 0 : i64, scratch_operands = 0 : i64, tpu.core_type = #tpu.core_type<tc>, window_params = [{transform_indices = @transform_0, window_bounds = array<i64: 64, 128>}, {pipeline_mode = #tpu.pipeline_mode<synchronous>, transform_indices = @transform_1, window_bounds = array<i64: 128, 128>}, {transform_indices = @transform_2, window_bounds = array<i64: 64, 128>}, {transform_indices = @transform_3, window_bounds = array<i64: 1, 2, 128>}]} {
    %c0 = arith.constant 0 : index
    %c0_0 = arith.constant 0 : index
    %0 = vector.load %arg1[%c0, %c0_0] : memref<64x128xbf16, #tpu.memory_space<vmem>>, vector<64x128xbf16>
    %c0_1 = arith.constant 0 : index
    %c0_2 = arith.constant 0 : index
    %1 = vector.load %arg2[%c0_1, %c0_2] : memref<128x128xbf16, #tpu.memory_space<vmem>>, vector<128x128xbf16>
    %cst = arith.constant dense<0.000000e+00> : vector<64x128xf32>
    %2 = tpu.matmul %0, %1, %cst {dimension_numbers = #tpu.dot_dimension_numbers<[1], [0], [0], [1], [0, 0, 1, 1], [], []>} : vector<64x128xbf16>, vector<128x128xbf16>, vector<64x128xf32> -> vector<64x128xf32>
    %3 = arith.truncf %2 : vector<64x128xf32> to vector<64x128xbf16>
    %c0_3 = arith.constant 0 : index
    %c0_4 = arith.constant 0 : index
    %4 = vector.load %arg3[%c0_3, %c0_4] : memref<64x128xbf16, #tpu.memory_space<vmem>>, vector<64x128xbf16>
    tpu.vector_store %arg3[%c0_3, %c0_4], %3 {strides = array<i32>} : memref<64x128xbf16, #tpu.memory_space<vmem>>, vector<64x128xbf16>,
    %cst_5 = arith.constant dense<0.000000e+00> : vector<128xf32>
    %5 = vector.multi_reduction <add>, %2, %cst_5 [0] : vector<64x128xf32> to vector<128xf32>
    %6 = vector.shape_cast %5 : vector<128xf32> to vector<1x128xf32>
    %7 = arith.mulf %2, %2 : vector<64x128xf32>
    %cst_6 = arith.constant dense<0.000000e+00> : vector<128xf32>
    %8 = vector.multi_reduction <add>, %7, %cst_6 [0] : vector<64x128xf32> to vector<128xf32>
    %9 = vector.shape_cast %8 : vector<128xf32> to vector<1x128xf32>
    %10 = tpu.concatenate %6, %9 in 0 : vector<1x128xf32>, vector<1x128xf32> -> vector<2x128xf32>
    %11 = vector.shape_cast %10 : vector<2x128xf32> to vector<1x2x128xf32>
    %c0_7 = arith.constant 0 : index
    %c0_8 = arith.constant 0 : index
    %c0_9 = arith.constant 0 : index
    %12 = vector.load %arg4[%c0_7, %c0_8, %c0_9] : memref<1x2x128xf32, #tpu.memory_space<vmem>>, vector<1x2x128xf32>
    tpu.vector_store %arg4[%c0_7, %c0_8, %c0_9], %11 {strides = array<i32>} : memref<1x2x128xf32, #tpu.memory_space<vmem>>, vector<1x2x128xf32>,
    return
  }
  func.func @transform_0(%arg0: i32) -> (i32, i32) {
    %c0_i32 = arith.constant 0 : i32
    %c0_i32_0 = arith.constant 0 : i32
    return %arg0, %c0_i32 : i32, i32
  }
  func.func @transform_1(%arg0: i32) -> (i32, i32) {
    %c0_i32 = arith.constant 0 : i32
    %c0_i32_0 = arith.constant 0 : i32
    %c0_i32_1 = arith.constant 0 : i32
    return %c0_i32, %c0_i32_0 : i32, i32
  }
  func.func @transform_2(%arg0: i32) -> (i32, i32) {
    %c0_i32 = arith.constant 0 : i32
    %c0_i32_0 = arith.constant 0 : i32
    return %arg0, %c0_i32 : i32, i32
  }
  func.func @transform_3(%arg0: i32) -> (i32, i32, i32) {
    %c0_i32 = arith.constant 0 : i32
    %c0_i32_0 = arith.constant 0 : i32
    %c0_i32_1 = arith.constant 0 : i32
    return %arg0, %c0_i32, %c0_i32_0 : i32, i32, i32
  }
}

module attributes {stable_mosaic.version = 11 : i64} {
  func.func @_gemm_stats_kernel(%arg0: i32, %arg1: memref<16x256xbf16, #tpu.memory_space<vmem>>, %arg2: memref<256x128xbf16, #tpu.memory_space<vmem>>, %arg3: memref<16x128xbf16, #tpu.memory_space<vmem>>, %arg4: memref<1x2x128xf32, #tpu.memory_space<vmem>>) attributes {dimension_semantics = [#tpu.dimension_semantics<parallel>], iteration_bounds = array<i64: 2>, scalar_prefetch = 0 : i64, scratch_operands = 0 : i64, tpu.core_type = #tpu.core_type<tc>, window_params = [{transform_indices = @transform_0, window_bounds = array<i64: 16, 256>}, {pipeline_mode = #tpu.pipeline_mode<synchronous>, transform_indices = @transform_1, window_bounds = array<i64: 256, 128>}, {transform_indices = @transform_2, window_bounds = array<i64: 16, 128>}, {transform_indices = @transform_3, window_bounds = array<i64: 1, 2, 128>}]} {
    %c0 = arith.constant 0 : index
    %c0_0 = arith.constant 0 : index
    %0 = vector.load %arg1[%c0, %c0_0] : memref<16x256xbf16, #tpu.memory_space<vmem>>, vector<16x256xbf16>
    %c0_1 = arith.constant 0 : index
    %c0_2 = arith.constant 0 : index
    %1 = vector.load %arg2[%c0_1, %c0_2] : memref<256x128xbf16, #tpu.memory_space<vmem>>, vector<256x128xbf16>
    %cst = arith.constant dense<0.000000e+00> : vector<16x128xf32>
    %2 = tpu.matmul %0, %1, %cst {dimension_numbers = #tpu.dot_dimension_numbers<[1], [0], [0], [1], [0, 0, 1, 1], [], []>} : vector<16x256xbf16>, vector<256x128xbf16>, vector<16x128xf32> -> vector<16x128xf32>
    %3 = arith.truncf %2 : vector<16x128xf32> to vector<16x128xbf16>
    %c0_3 = arith.constant 0 : index
    %c0_4 = arith.constant 0 : index
    %4 = vector.load %arg3[%c0_3, %c0_4] : memref<16x128xbf16, #tpu.memory_space<vmem>>, vector<16x128xbf16>
    tpu.vector_store %arg3[%c0_3, %c0_4], %3 {strides = array<i32>} : memref<16x128xbf16, #tpu.memory_space<vmem>>, vector<16x128xbf16>,
    %cst_5 = arith.constant dense<0.000000e+00> : vector<128xf32>
    %5 = vector.multi_reduction <add>, %2, %cst_5 [0] : vector<16x128xf32> to vector<128xf32>
    %6 = vector.shape_cast %5 : vector<128xf32> to vector<1x128xf32>
    %7 = arith.mulf %2, %2 : vector<16x128xf32>
    %cst_6 = arith.constant dense<0.000000e+00> : vector<128xf32>
    %8 = vector.multi_reduction <add>, %7, %cst_6 [0] : vector<16x128xf32> to vector<128xf32>
    %9 = vector.shape_cast %8 : vector<128xf32> to vector<1x128xf32>
    %10 = tpu.concatenate %6, %9 in 0 : vector<1x128xf32>, vector<1x128xf32> -> vector<2x128xf32>
    %11 = vector.shape_cast %10 : vector<2x128xf32> to vector<1x2x128xf32>
    %c0_7 = arith.constant 0 : index
    %c0_8 = arith.constant 0 : index
    %c0_9 = arith.constant 0 : index
    %12 = vector.load %arg4[%c0_7, %c0_8, %c0_9] : memref<1x2x128xf32, #tpu.memory_space<vmem>>, vector<1x2x128xf32>
    tpu.vector_store %arg4[%c0_7, %c0_8, %c0_9], %11 {strides = array<i32>} : memref<1x2x128xf32, #tpu.memory_space<vmem>>, vector<1x2x128xf32>,
    return
  }
  func.func @transform_0(%arg0: i32) -> (i32, i32) {
    %c0_i32 = arith.constant 0 : i32
    %c0_i32_0 = arith.constant 0 : i32
    return %arg0, %c0_i32 : i32, i32
  }
  func.func @transform_1(%arg0: i32) -> (i32, i32) {
    %c0_i32 = arith.constant 0 : i32
    %c0_i32_0 = arith.constant 0 : i32
    %c0_i32_1 = arith.constant 0 : i32
    return %c0_i32, %c0_i32_0 : i32, i32
  }
  func.func @transform_2(%arg0: i32) -> (i32, i32) {
    %c0_i32 = arith.constant 0 : i32
    %c0_i32_0 = arith.constant 0 : i32
    return %arg0, %c0_i32 : i32, i32
  }
  func.func @transform_3(%arg0: i32) -> (i32, i32, i32) {
    %c0_i32 = arith.constant 0 : i32
    %c0_i32_0 = arith.constant 0 : i32
    %c0_i32_1 = arith.constant 0 : i32
    return %arg0, %c0_i32, %c0_i32_0 : i32, i32, i32
  }
}

module attributes {stable_mosaic.version = 11 : i64} {
  func.func @_gemm_stats_kernel(%arg0: i32, %arg1: memref<8x512xbf16, #tpu.memory_space<vmem>>, %arg2: memref<512x128xbf16, #tpu.memory_space<vmem>>, %arg3: memref<8x128xbf16, #tpu.memory_space<vmem>>, %arg4: memref<1x2x128xf32, #tpu.memory_space<vmem>>) attributes {dimension_semantics = [#tpu.dimension_semantics<parallel>], iteration_bounds = array<i64: 2>, scalar_prefetch = 0 : i64, scratch_operands = 0 : i64, tpu.core_type = #tpu.core_type<tc>, window_params = [{transform_indices = @transform_0, window_bounds = array<i64: 8, 512>}, {pipeline_mode = #tpu.pipeline_mode<synchronous>, transform_indices = @transform_1, window_bounds = array<i64: 512, 128>}, {transform_indices = @transform_2, window_bounds = array<i64: 8, 128>}, {transform_indices = @transform_3, window_bounds = array<i64: 1, 2, 128>}]} {
    %c0 = arith.constant 0 : index
    %c0_0 = arith.constant 0 : index
    %0 = vector.load %arg1[%c0, %c0_0] : memref<8x512xbf16, #tpu.memory_space<vmem>>, vector<8x512xbf16>
    %c0_1 = arith.constant 0 : index
    %c0_2 = arith.constant 0 : index
    %1 = vector.load %arg2[%c0_1, %c0_2] : memref<512x128xbf16, #tpu.memory_space<vmem>>, vector<512x128xbf16>
    %cst = arith.constant dense<0.000000e+00> : vector<8x128xf32>
    %2 = tpu.matmul %0, %1, %cst {dimension_numbers = #tpu.dot_dimension_numbers<[1], [0], [0], [1], [0, 0, 1, 1], [], []>} : vector<8x512xbf16>, vector<512x128xbf16>, vector<8x128xf32> -> vector<8x128xf32>
    %3 = arith.truncf %2 : vector<8x128xf32> to vector<8x128xbf16>
    %c0_3 = arith.constant 0 : index
    %c0_4 = arith.constant 0 : index
    %4 = vector.load %arg3[%c0_3, %c0_4] : memref<8x128xbf16, #tpu.memory_space<vmem>>, vector<8x128xbf16>
    tpu.vector_store %arg3[%c0_3, %c0_4], %3 {strides = array<i32>} : memref<8x128xbf16, #tpu.memory_space<vmem>>, vector<8x128xbf16>,
    %cst_5 = arith.constant dense<0.000000e+00> : vector<128xf32>
    %5 = vector.multi_reduction <add>, %2, %cst_5 [0] : vector<8x128xf32> to vector<128xf32>
    %6 = vector.shape_cast %5 : vector<128xf32> to vector<1x128xf32>
    %7 = arith.mulf %2, %2 : vector<8x128xf32>
    %cst_6 = arith.constant dense<0.000000e+00> : vector<128xf32>
    %8 = vector.multi_reduction <add>, %7, %cst_6 [0] : vector<8x128xf32> to vector<128xf32>
    %9 = vector.shape_cast %8 : vector<128xf32> to vector<1x128xf32>
    %10 = tpu.concatenate %6, %9 in 0 : vector<1x128xf32>, vector<1x128xf32> -> vector<2x128xf32>
    %11 = vector.shape_cast %10 : vector<2x128xf32> to vector<1x2x128xf32>
    %c0_7 = arith.constant 0 : index
    %c0_8 = arith.constant 0 : index
    %c0_9 = arith.constant 0 : index
    %12 = vector.load %arg4[%c0_7, %c0_8, %c0_9] : memref<1x2x128xf32, #tpu.memory_space<vmem>>, vector<1x2x128xf32>
    tpu.vector_store %arg4[%c0_7, %c0_8, %c0_9], %11 {strides = array<i32>} : memref<1x2x128xf32, #tpu.memory_space<vmem>>, vector<1x2x128xf32>,
    return
  }
  func.func @transform_0(%arg0: i32) -> (i32, i32) {
    %c0_i32 = arith.constant 0 : i32
    %c0_i32_0 = arith.constant 0 : i32
    return %arg0, %c0_i32 : i32, i32
  }
  func.func @transform_1(%arg0: i32) -> (i32, i32) {
    %c0_i32 = arith.constant 0 : i32
    %c0_i32_0 = arith.constant 0 : i32
    %c0_i32_1 = arith.constant 0 : i32
    return %c0_i32, %c0_i32_0 : i32, i32
  }
  func.func @transform_2(%arg0: i32) -> (i32, i32) {
    %c0_i32 = arith.constant 0 : i32
    %c0_i32_0 = arith.constant 0 : i32
    return %arg0, %c0_i32 : i32, i32
  }
  func.func @transform_3(%arg0: i32) -> (i32, i32, i32) {
    %c0_i32 = arith.constant 0 : i32
    %c0_i32_0 = arith.constant 0 : i32
    %c0_i32_1 = arith.constant 0 : i32
    return %arg0, %c0_i32, %c0_i32_0 : i32, i32, i32
  }
}

module attributes {stable_mosaic.version = 11 : i64} {
  func.func @kernel(%arg0: i32, %arg1: memref<8x1024xbf16, #tpu.memory_space<vmem>>, %arg2: memref<1024x128xbf16, #tpu.memory_space<vmem>>, %arg3: memref<1x128xf32, #tpu.memory_space<vmem>>, %arg4: memref<8x128xf32, #tpu.memory_space<vmem>>) attributes {dimension_semantics = [#tpu.dimension_semantics<parallel>], iteration_bounds = array<i64: 2>, scalar_prefetch = 0 : i64, scratch_operands = 0 : i64, tpu.core_type = #tpu.core_type<tc>, window_params = [{transform_indices = @transform_0, window_bounds = array<i64: 8, 1024>}, {pipeline_mode = #tpu.pipeline_mode<synchronous>, transform_indices = @transform_1, window_bounds = array<i64: 1024, 128>}, {pipeline_mode = #tpu.pipeline_mode<synchronous>, transform_indices = @transform_2, window_bounds = array<i64: 1, 128>}, {transform_indices = @transform_3, window_bounds = array<i64: 8, 128>}]} {
    %c0 = arith.constant 0 : index
    %c0_0 = arith.constant 0 : index
    %0 = vector.load %arg1[%c0, %c0_0] : memref<8x1024xbf16, #tpu.memory_space<vmem>>, vector<8x1024xbf16>
    %c0_1 = arith.constant 0 : index
    %c0_2 = arith.constant 0 : index
    %1 = vector.load %arg2[%c0_1, %c0_2] : memref<1024x128xbf16, #tpu.memory_space<vmem>>, vector<1024x128xbf16>
    %cst = arith.constant dense<0.000000e+00> : vector<8x128xf32>
    %2 = tpu.matmul %0, %1, %cst {dimension_numbers = #tpu.dot_dimension_numbers<[1], [0], [0], [1], [0, 0, 1, 1], [], []>} : vector<8x1024xbf16>, vector<1024x128xbf16>, vector<8x128xf32> -> vector<8x128xf32>
    %c0_3 = arith.constant 0 : index
    %c0_4 = arith.constant 0 : index
    %3 = vector.load %arg3[%c0_3, %c0_4] : memref<1x128xf32, #tpu.memory_space<vmem>>, vector<1x128xf32>
    %4 = vector.broadcast %3 : vector<1x128xf32> to vector<8x128xf32>
    %5 = arith.addf %2, %4 : vector<8x128xf32>
    %cst_5 = arith.constant 0.000000e+00 : f32
    %6 = vector.broadcast %cst_5 : f32 to vector<8x128xf32>
    %7 = arith.subf %6, %5 : vector<8x128xf32>
    %8 = math.exp %7 : vector<8x128xf32>
    %cst_6 = arith.constant 1.000000e+00 : f32
    %9 = vector.broadcast %cst_6 : f32 to vector<8x128xf32>
    %10 = arith.addf %9, %8 : vector<8x128xf32>
    %cst_7 = arith.constant 1.000000e+00 : f32
    %11 = vector.broadcast %cst_7 : f32 to vector<8x128xf32>
    %12 = arith.divf %11, %10 : vector<8x128xf32>
    %c0_8 = arith.constant 0 : index
    %c0_9 = arith.constant 0 : index
    %13 = vector.load %arg4[%c0_8, %c0_9] : memref<8x128xf32, #tpu.memory_space<vmem>>, vector<8x128xf32>
    tpu.vector_store %arg4[%c0_8, %c0_9], %12 {strides = array<i32>} : memref<8x128xf32, #tpu.memory_space<vmem>>, vector<8x128xf32>,
    return
  }
  func.func @transform_0(%arg0: i32) -> (i32, i32) {
    %c0_i32 = arith.constant 0 : i32
    %c0_i32_0 = arith.constant 0 : i32
    return %arg0, %c0_i32 : i32, i32
  }
  func.func @transform_1(%arg0: i32) -> (i32, i32) {
    %c0_i32 = arith.constant 0 : i32
    %c0_i32_0 = arith.constant 0 : i32
    %c0_i32_1 = arith.constant 0 : i32
    return %c0_i32, %c0_i32_0 : i32, i32
  }
  func.func @transform_2(%arg0: i32) -> (i32, i32) {
    %c0_i32 = arith.constant 0 : i32
    %c0_i32_0 = arith.constant 0 : i32
    %c0_i32_1 = arith.constant 0 : i32
    return %c0_i32, %c0_i32_0 : i32, i32
  }
  func.func @transform_3(%arg0: i32) -> (i32, i32) {
    %c0_i32 = arith.constant 0 : i32
    %c0_i32_0 = arith.constant 0 : i32
    return %arg0, %c0_i32 : i32, i32
  }
}

</mosaic_0001>

<llo_original>
// kernel: _lambda_.5
$region0: #{_lambda_.5}
  #allocation0 [shape = 'u32[]', space=smem, size = 0x4, offset = 0x4, fixed_abs, tag = 'smem constant byte address 0x4 - core index']
  #allocation1 [shape = 'u32[144,128]{1,0:T(1,128)}', space=vmem, size = 0x12000, scoped, tag = 'internal scratch']
  %s0 = inlined_call_operand.vmem [shape: bf16[512,128], index: 0, kind: input, shape index: {}]
  %s1 = inlined_call_operand.vmem [shape: bf16[128,128], index: 1, kind: input, shape index: {}]
  %s2 = inlined_call_operand.vmem [shape: f32[1,128], index: 2, kind: input, shape index: {}]
  %s3 = inlined_call_operand.vmem [shape: bf16[512,128], index: 3, kind: output, shape index: {}]
  %s4 = sld [smem:[#allocation0]]
  $region45: #{_lambda_.5} parent=0
    _
  %s6 = ssub.s32 1, %s4
  %s7 = scalar_select 0, %s6, %s4
  loop: start=0, step=1, limit=4
  $region2: #{_lambda_.5} parent=0 // loop_pre_header
    _
  $region3: #{_lambda_.5} parent=0 // loop_header
    %s9 = sphi 0, %s13
    %p10 = scmp.ge.s32.totalorder %s9, 4
    %s19 = sphi 0, %s21
    %s22 = sphi 0, %s19
    %s23 = sphi 0, %s22
    %s39 = sphi 0, %s23
    %s43 = sphi 0, %s43
    %s45 = sphi 0, %s43
    %s46 = sphi 0, %s45
    %s60 = sphi 0, %s46
    %s64 = sphi 0, %s64
    %s66 = sphi 0, %s64
    %s67 = sphi 0, %s66
    %s81 = sphi 0, %s67
    %s87 = sphi 0, %s89
    %s90 = sphi 0, %s87
    %s91 = sphi 0, %s90
    %s107 = sphi 0, %s91
  $region4: #{_lambda_.5} parent=0 // loop_header_branch
    %12 = sbr.rel (%p10) target = $region8
  $region5: #{_lambda_.5} parent=0 // loop_body
    %s14 = ssub.s32 %s9, 1
    %s15 = ssub.s32 %s9, 2
    %s16 = sadd.s32 %s9, 1
    %s17 = ssub.s32 %s9, %s16
    %p18 = scmp.eq.s32.totalorder %s17, 0
    %s20 = sadd.s32 %s19, 1
    %s21 = scalar_select %p18, %s19, %s20
    %p24 = pneg %p18
    %p25 = scmp.eq.s32.totalorder %s9, 1
    %p26 = por %p24, %p25
    %p27 = scmp.ne.s32.totalorder %s19, %s22
    %p28 = scmp.eq.s32.totalorder %s9, 0
    %p29 = por %p27, %p28
    %p30 = scmp.ne.s32.totalorder %s19, %s22
    %p31 = scmp.eq.s32.totalorder %s14, 1
    %p32 = por %p30, %p31
    %p33 = scmp.ne.s32.totalorder %s22, %s23
    %p34 = scmp.eq.s32.totalorder %s14, 0
    %p35 = por %p33, %p34
    %p36 = scmp.ne.s32.totalorder %s22, %s23
    %p37 = scmp.eq.s32.totalorder %s15, 1
    %p38 = por %p36, %p37
    %p40 = scmp.ne.s32.totalorder %s23, %s39
    %p41 = scmp.eq.s32.totalorder %s15, 0
    %p42 = por %p40, %p41
    %s44 = sadd.s32 %s43, 1
    %p47 = scmp.eq.s32.totalorder %s9, 1
    %p48 = scmp.ne.s32.totalorder %s43, %s45
    %p49 = scmp.eq.s32.totalorder %s9, 0
    %p50 = por %p48, %p49
    %p51 = scmp.ne.s32.totalorder %s43, %s45
    %p52 = scmp.eq.s32.totalorder %s14, 1
    %p53 = por %p51, %p52
    %p54 = scmp.ne.s32.totalorder %s45, %s46
    %p55 = scmp.eq.s32.totalorder %s14, 0
    %p56 = por %p54, %p55
    %p57 = scmp.ne.s32.totalorder %s45, %s46
    %p58 = scmp.eq.s32.totalorder %s15, 1
    %p59 = por %p57, %p58
    %p61 = scmp.ne.s32.totalorder %s46, %s60
    %p62 = scmp.eq.s32.totalorder %s15, 0
    %p63 = por %p61, %p62
    %s65 = sadd.s32 %s64, 1
    %p68 = scmp.eq.s32.totalorder %s9, 1
    %p69 = scmp.ne.s32.totalorder %s64, %s66
    %p70 = scmp.eq.s32.totalorder %s9, 0
    %p71 = por %p69, %p70
    %p72 = scmp.ne.s32.totalorder %s64, %s66
    %p73 = scmp.eq.s32.totalorder %s14, 1
    %p74 = por %p72, %p73
    %p75 = scmp.ne.s32.totalorder %s66, %s67
    %p76 = scmp.eq.s32.totalorder %s14, 0
    %p77 = por %p75, %p76
    %p78 = scmp.ne.s32.totalorder %s66, %s67
    %p79 = scmp.eq.s32.totalorder %s15, 1
    %p80 = por %p78, %p79
    %p82 = scmp.ne.s32.totalorder %s67, %s81
    %p83 = scmp.eq.s32.totalorder %s15, 0
    %p84 = por %p82, %p83
    %s85 = ssub.s32 %s9, %s16
    %p86 = scmp.eq.s32.totalorder %s85, 0
    %s88 = sadd.s32 %s87, 1
    %s89 = scalar_select %p86, %s87, %s88
    %p92 = pneg %p86
    %p93 = scmp.eq.s32.totalorder %s9, 1
    %p94 = por %p92, %p93
    %p95 = scmp.ne.s32.totalorder %s87, %s90
    %p96 = scmp.eq.s32.totalorder %s9, 0
    %p97 = por %p95, %p96
    %p98 = scmp.ne.s32.totalorder %s87, %s90
    %p99 = scmp.eq.s32.totalorder %s14, 1
    %p100 = por %p98, %p99
    %p101 = scmp.ne.s32.totalorder %s90, %s91
    %p102 = scmp.eq.s32.totalorder %s14, 0
    %p103 = por %p101, %p102
    %p104 = scmp.ne.s32.totalorder %s90, %s91
    %p105 = scmp.eq.s32.totalorder %s15, 1
    %p106 = por %p104, %p105
    %p108 = scmp.ne.s32.totalorder %s91, %s107
    %p109 = scmp.eq.s32.totalorder %s15, 0
    %p110 = por %p108, %p109
    %p111 = scmp.le.s32.totalorder 1, %s9
    %p112 = scmp.lt.s32.totalorder %s9, 3
    %p113 = pnand %p111, %p112
    %p114 = pneg %p113
    // Predicated region
    $region9: #{_lambda_.5} parent=5 // pred_check
      _
    $region10: #{_lambda_.5} parent=5 // pred_check_branch
      %116 = sbr.rel (%p113) target = $region12
    $region11: #{_lambda_.5} parent=5 // pred_region
      %s117 = ssub.s32 %s9, 1
      // Predicated region
      $region13: #{_lambda_.5} parent=11 // pred_check
        %p118 = pneg %p56
      $region14: #{_lambda_.5} parent=11 // pred_check_branch
        %120 = sbr.rel (%p118) target = $region16
      $region15: #{_lambda_.5} parent=11 // pred_region
        _
      $region16: #{_lambda_.5} parent=11 // pred_fallthru
        _
      // Predicated region
      $region17: #{_lambda_.5} parent=11 // pred_check
        %p121 = pneg %p77
      $region18: #{_lambda_.5} parent=11 // pred_check_branch
        %123 = sbr.rel (%p121) target = $region20
      $region19: #{_lambda_.5} parent=11 // pred_region
        _
      $region20: #{_lambda_.5} parent=11 // pred_fallthru
        _
    $region12: #{_lambda_.5} parent=5 // pred_fallthru
      _
    %p124 = scmp.lt.s32.totalorder %s9, 2
    // Predicated region
    $region21: #{_lambda_.5} parent=5 // pred_check
      %p125 = pneg %p124
    $region22: #{_lambda_.5} parent=5 // pred_check_branch
      %127 = sbr.rel (%p125) target = $region24
    $region23: #{_lambda_.5} parent=5 // pred_region
      // Predicated region
      $region25: #{_lambda_.5} parent=23 // pred_check
        %p128 = pneg %p29
      $region26: #{_lambda_.5} parent=23 // pred_check_branch
        %130 = sbr.rel (%p128) target = $region28
      $region27: #{_lambda_.5} parent=23 // pred_region
        %s131 = smul.u32 32, %s9
        %p132 = scmp.lt.s32.totalorder %s131, 63
        %s133 = scalar_select %p132, %s131, 63
        %s134 = smul.addr %s133, 4
        %s135 = scalar_lea.vmem %s0, %s134
        %s136 = smul.u32 32, %s9
      $region28: #{_lambda_.5} parent=23 // pred_fallthru
        _
    $region24: #{_lambda_.5} parent=5 // pred_fallthru
      _
    %p137 = scmp.le.s32.totalorder 1, %s9
    %p138 = scmp.lt.s32.totalorder %s9, 3
    %p139 = pnand %p137, %p138
    %p140 = pneg %p139
    // Predicated region
    $region29: #{_lambda_.5} parent=5 // pred_check
      _
    $region30: #{_lambda_.5} parent=5 // pred_check_branch
      %142 = sbr.rel (%p139) target = $region32
    $region31: #{_lambda_.5} parent=5 // pred_region
      %s143 = ssub.s32 %s9, 1
      %s144 = smul.u32 32, %s14
      %p145 = scmp.lt.s32.totalorder %s144, 63
      %s146 = scalar_select %p145, %s144, 63
      %s147 = smul.addr %s146, 4
      %s148 = scalar_lea.vmem %s0, %s147
      %p149 = pneg %p35
      %p150 = pneg %p32
      %p151 = pneg %p56
      %p152 = pneg %p53
      %p153 = pneg %p77
      %p154 = pneg %p74
      %p155 = pneg %p103
      %p156 = pneg %p100
      %s157 = smul.u32 32, %s14
      %p158 = scmp.lt.s32.totalorder %s157, 63
      %s159 = scalar_select %p158, %s157, 63
      %s160 = smul.addr %s159, 4
      %s161 = scalar_lea.vmem %s3, %s160
      %s162 = smul.u32 32, %s14
      %p163 = scmp.lt.s32.totalorder %s162, 63
      %s164 = scalar_select %p163, %s162, 63
      %s165 = smul.addr %s164, 4
      %s166 = scalar_lea.vmem %s0, %s165
      %s167 = smul.u32 32, %s14
      %s168 = smul.u32 32, %s14
      %p169 = scmp.lt.s32.totalorder %s168, 63
      %s170 = scalar_select %p169, %s168, 63
      %s171 = smul.addr %s170, 4
      %s172 = scalar_lea.vmem %s3, %s171
      %s173 = smul.u32 32, %s14
      %v175 = vld [vmem:[%s166] sm:$0xf]
      %v176 = vld [vmem:[%s166 + $0x4] sm:$0xf]
      %v177 = vld [vmem:[%s166 + $0x8] sm:$0xf]
      %v178 = vld [vmem:[%s166 + $0xc] sm:$0xf]
      %v179 = vld [vmem:[%s166 + $0x10] sm:$0xf]
      %v180 = vld [vmem:[%s166 + $0x14] sm:$0xf]
      %v181 = vld [vmem:[%s166 + $0x18] sm:$0xf]
      %v182 = vld [vmem:[%s166 + $0x1c] sm:$0xf]
      %v183 = vld [vmem:[%s166 + $0x20] sm:$0xf]
      %v184 = vld [vmem:[%s166 + $0x24] sm:$0xf]
      %v185 = vld [vmem:[%s166 + $0x28] sm:$0xf]
      %v186 = vld [vmem:[%s166 + $0x2c] sm:$0xf]
      %v187 = vld [vmem:[%s166 + $0x30] sm:$0xf]
      %v188 = vld [vmem:[%s166 + $0x34] sm:$0xf]
      %v189 = vld [vmem:[%s166 + $0x38] sm:$0xf]
      %v190 = vld [vmem:[%s166 + $0x3c] sm:$0xf]
      %v191 = vld [vmem:[%s166 + $0x40] sm:$0xf]
      %v192 = vld [vmem:[%s166 + $0x44] sm:$0xf]
      %v193 = vld [vmem:[%s166 + $0x48] sm:$0xf]
      %v194 = vld [vmem:[%s166 + $0x4c] sm:$0xf]
      %v195 = vld [vmem:[%s166 + $0x50] sm:$0xf]
      %v196 = vld [vmem:[%s166 + $0x54] sm:$0xf]
      %v197 = vld [vmem:[%s166 + $0x58] sm:$0xf]
      %v198 = vld [vmem:[%s166 + $0x5c] sm:$0xf]
      %v199 = vld [vmem:[%s166 + $0x60] sm:$0xf]
      %v200 = vld [vmem:[%s166 + $0x64] sm:$0xf]
      %v201 = vld [vmem:[%s166 + $0x68] sm:$0xf]
      %v202 = vld [vmem:[%s166 + $0x6c] sm:$0xf]
      %v203 = vld [vmem:[%s166 + $0x70] sm:$0xf]
      %v204 = vld [vmem:[%s166 + $0x74] sm:$0xf]
      %v205 = vld [vmem:[%s166 + $0x78] sm:$0xf]
      %v206 = vld [vmem:[%s166 + $0x7c] sm:$0xf]
      %v207 = vld [vmem:[%s1] sm:$0xf]
      %v208 = vld [vmem:[%s1 + $0x4] sm:$0xf]
      %v209 = vld [vmem:[%s1 + $0x8] sm:$0xf]
      %v210 = vld [vmem:[%s1 + $0xc] sm:$0xf]
      %v211 = vld [vmem:[%s1 + $0x10] sm:$0xf]
      %v212 = vld [vmem:[%s1 + $0x14] sm:$0xf]
      %v213 = vld [vmem:[%s1 + $0x18] sm:$0xf]
      %v214 = vld [vmem:[%s1 + $0x1c] sm:$0xf]
      %v215 = vld [vmem:[%s1 + $0x20] sm:$0xf]
      %v216 = vld [vmem:[%s1 + $0x24] sm:$0xf]
      %v217 = vld [vmem:[%s1 + $0x28] sm:$0xf]
      %v218 = vld [vmem:[%s1 + $0x2c] sm:$0xf]
      %v219 = vld [vmem:[%s1 + $0x30] sm:$0xf]
      %v220 = vld [vmem:[%s1 + $0x34] sm:$0xf]
      %v221 = vld [vmem:[%s1 + $0x38] sm:$0xf]
      %v222 = vld [vmem:[%s1 + $0x3c] sm:$0xf]
      %v223 = vld [vmem:[%s2] sm:$0x1]
      %v225 = vlaneseq
      %v226 = vshrl.u32 %v225, 7
      %v227 = vsub.s32 0, %v226
      %v228 = vrot.slane %v223, %v227
      %v262 = vunpack.c.l.b16 %v175
      %v263 = vunpack.c.l.b16 %v176
      %v264 = vunpack.c.l.b16 %v177
      %v265 = vunpack.c.l.b16 %v178
      %v266 = vunpack.c.l.b16 %v179
      %v267 = vunpack.c.l.b16 %v180
      %v268 = vunpack.c.l.b16 %v181
      %v269 = vunpack.c.l.b16 %v182
      %v270 = vunpack.c.l.b16 %v183
      %v271 = vunpack.c.l.b16 %v184
      %v272 = vunpack.c.l.b16 %v185
      %v273 = vunpack.c.l.b16 %v186
      %v274 = vunpack.c.l.b16 %v187
      %v275 = vunpack.c.l.b16 %v188
      %v276 = vunpack.c.l.b16 %v189
      %v277 = vunpack.c.l.b16 %v190
      %v278 = vunpack.c.l.b16 %v191
      %v279 = vunpack.c.l.b16 %v192
      %v280 = vunpack.c.l.b16 %v193
      %v281 = vunpack.c.l.b16 %v194
      %v282 = vunpack.c.l.b16 %v195
      %v283 = vunpack.c.l.b16 %v196
      %v284 = vunpack.c.l.b16 %v197
      %v285 = vunpack.c.l.b16 %v198
      %v286 = vunpack.c.l.b16 %v199
      %v287 = vunpack.c.l.b16 %v200
      %v288 = vunpack.c.l.b16 %v201
      %v289 = vunpack.c.l.b16 %v202
      %v290 = vunpack.c.l.b16 %v203
      %v291 = vunpack.c.l.b16 %v204
      %v292 = vunpack.c.l.b16 %v205
      %v293 = vunpack.c.l.b16 %v206
      %v294 = vpack.c.b16 %v263, %v262
      %v295 = vpack.c.b16 %v265, %v264
      %v296 = vpack.c.b16 %v267, %v266
      %v297 = vpack.c.b16 %v269, %v268
      %v298 = vpack.c.b16 %v271, %v270
      %v299 = vpack.c.b16 %v273, %v272
      %v300 = vpack.c.b16 %v275, %v274
      %v301 = vpack.c.b16 %v277, %v276
      %v302 = vpack.c.b16 %v279, %v278
      %v303 = vpack.c.b16 %v281, %v280
      %v304 = vpack.c.b16 %v283, %v282
      %v305 = vpack.c.b16 %v285, %v284
      %v306 = vpack.c.b16 %v287, %v286
      %v307 = vpack.c.b16 %v289, %v288
      %v308 = vpack.c.b16 %v291, %v290
      %v309 = vpack.c.b16 %v293, %v292
      %v342 = vunpack.c.l.b16 %v207
      %v343 = vunpack.c.l.b16 %v208
      %v344 = vunpack.c.l.b16 %v209
      %v345 = vunpack.c.l.b16 %v210
      %v346 = vunpack.c.l.b16 %v211
      %v347 = vunpack.c.l.b16 %v212
      %v348 = vunpack.c.l.b16 %v213
      %v349 = vunpack.c.l.b16 %v214
      %v350 = vunpack.c.l.b16 %v215
      %v351 = vunpack.c.l.b16 %v216
      %v352 = vunpack.c.l.b16 %v217
      %v353 = vunpack.c.l.b16 %v218
      %v354 = vunpack.c.l.b16 %v219
      %v355 = vunpack.c.l.b16 %v220
      %v356 = vunpack.c.l.b16 %v221
      %v357 = vunpack.c.l.b16 %v222
      %v358 = vpack.c.b16 %v343, %v342
      %v359 = vpack.c.b16 %v345, %v344
      %v360 = vpack.c.b16 %v347, %v346
      %v361 = vpack.c.b16 %v349, %v348
      %v362 = vpack.c.b16 %v351, %v350
      %v363 = vpack.c.b16 %v353, %v352
      %v364 = vpack.c.b16 %v355, %v354
      %v365 = vpack.c.b16 %v357, %v356
      %374 = vmatprep.subr.bf16.mxu0 0
      %375 = vmatpush1.bf16.msra.mxu0 %v358
      %376 = vmatprep.subr.bf16.mxu0 0
      %377 = vmatpush1.bf16.msra.mxu0 %v359
      %378 = vmatprep.subr.bf16.mxu0 0
      %379 = vmatpush1.bf16.msra.mxu0 %v360
      %380 = vmatprep.subr.bf16.mxu0 0
      %381 = vmatpush1.bf16.msra.mxu0 %v361
      %382 = vmatprep.subr.bf16.mxu0 0
      %383 = vmatpush1.bf16.msra.mxu0 %v362
      %384 = vmatprep.subr.bf16.mxu0 0
      %385 = vmatpush1.bf16.msra.mxu0 %v363
      %386 = vmatprep.subr.bf16.mxu0 0
      %387 = vmatpush1.bf16.msra.mxu0 %v364
      %388 = vmatprep.subr.bf16.mxu0 0
      %389 = vmatpush1.bf16.msra.mxu0 %v365
      %390 = vmatprep.subr.bf16.mxu0 0
      %391 = vmatpush1.bf16.msra.mxu0 0
      %392 = vmatprep.subr.bf16.mxu0 0
      %393 = vmatpush1.bf16.msra.mxu0 0
      %394 = vmatprep.subr.bf16.mxu0 0
      %395 = vmatpush1.bf16.msra.mxu0 0
      %396 = vmatprep.subr.bf16.mxu0 0
      %397 = vmatpush1.bf16.msra.mxu0 0
      %398 = vmatprep.subr.bf16.mxu0 0
      %399 = vmatpush1.bf16.msra.mxu0 0
      %400 = vmatprep.subr.bf16.mxu0 0
      %401 = vmatpush1.bf16.msra.mxu0 0
      %402 = vmatprep.subr.bf16.mxu0 0
      %403 = vmatpush1.bf16.msra.mxu0 0
      %404 = vmatprep.subr.bf16.mxu0 0
      %405 = vmatpush1.bf16.msra.mxu0 0
      %406 = vmatprep.mubr.bf16.mxu0 0
      %407 = vmatmul.mubr.bf16.gmra.mrb[0].mxu0 %v294
      %v408 = vpop.f32.mrb[0].mxu0
      %v409 = vadd.f32 %v228, %v408
      %v410 = vpop.f32.mrb[0].mxu0
      %v411 = vpop.f32.mrb[0].mxu0
      %v412 = vadd.f32 %v228, %v411
      %v413 = vpop.f32.mrb[0].mxu0
      %414 = vmatprep.mubr.bf16.mxu0 0
      %415 = vmatmul.mubr.bf16.gmra.mrb[0].mxu0 %v295
      %v416 = vpop.f32.mrb[0].mxu0
      %v417 = vadd.f32 %v228, %v416
      %v418 = vpop.f32.mrb[0].mxu0
      %v419 = vpop.f32.mrb[0].mxu0
      %v420 = vadd.f32 %v228, %v419
      %v421 = vpop.f32.mrb[0].mxu0
      %422 = vmatprep.mubr.bf16.mxu0 0
      %423 = vmatmul.mubr.bf16.gmra.mrb[0].mxu0 %v296
      %v424 = vpop.f32.mrb[0].mxu0
      %v425 = vadd.f32 %v228, %v424
      %v426 = vpop.f32.mrb[0].mxu0
      %v427 = vpop.f32.mrb[0].mxu0
      %v428 = vadd.f32 %v228, %v427
      %v429 = vpop.f32.mrb[0].mxu0
      %430 = vmatprep.mubr.bf16.mxu0 0
      %431 = vmatmul.mubr.bf16.gmra.mrb[0].mxu0 %v297
      %v432 = vpop.f32.mrb[0].mxu0
      %v433 = vadd.f32 %v228, %v432
      %v434 = vpop.f32.mrb[0].mxu0
      %v435 = vpop.f32.mrb[0].mxu0
      %v436 = vadd.f32 %v228, %v435
      %v437 = vpop.f32.mrb[0].mxu0
      %438 = vmatprep.mubr.bf16.mxu0 0
      %439 = vmatmul.mubr.bf16.gmra.mrb[0].mxu0 %v298
      %v440 = vpop.f32.mrb[0].mxu0
      %v441 = vadd.f32 %v228, %v440
      %v442 = vpop.f32.mrb[0].mxu0
      %v443 = vpop.f32.mrb[0].mxu0
      %v444 = vadd.f32 %v228, %v443
      %v445 = vpop.f32.mrb[0].mxu0
      %446 = vmatprep.mubr.bf16.mxu0 0
      %447 = vmatmul.mubr.bf16.gmra.mrb[0].mxu0 %v299
      %v448 = vpop.f32.mrb[0].mxu0
      %v449 = vadd.f32 %v228, %v448
      %v450 = vpop.f32.mrb[0].mxu0
      %v451 = vpop.f32.mrb[0].mxu0
      %v452 = vadd.f32 %v228, %v451
      %v453 = vpop.f32.mrb[0].mxu0
      %454 = vmatprep.mubr.bf16.mxu0 0
      %455 = vmatmul.mubr.bf16.gmra.mrb[0].mxu0 %v300
      %v456 = vpop.f32.mrb[0].mxu0
      %v457 = vadd.f32 %v228, %v456
      %v458 = vpop.f32.mrb[0].mxu0
      %v459 = vpop.f32.mrb[0].mxu0
      %v460 = vadd.f32 %v228, %v459
      %v461 = vpop.f32.mrb[0].mxu0
      %462 = vmatprep.mubr.bf16.mxu0 0
      %463 = vmatmul.mubr.bf16.gmra.mrb[0].mxu0 %v301
      %v464 = vpop.f32.mrb[0].mxu0
      %v465 = vadd.f32 %v228, %v464
      %v466 = vpop.f32.mrb[0].mxu0
      %v467 = vpop.f32.mrb[0].mxu0
      %v468 = vadd.f32 %v228, %v467
      %v469 = vpop.f32.mrb[0].mxu0
      %470 = vmatprep.mubr.bf16.mxu0 0
      %471 = vmatmul.mubr.bf16.gmra.mrb[0].mxu0 %v302
      %v472 = vpop.f32.mrb[0].mxu0
      %v473 = vadd.f32 %v228, %v472
      %v474 = vpop.f32.mrb[0].mxu0
      %v475 = vpop.f32.mrb[0].mxu0
      %v476 = vadd.f32 %v228, %v475
      %v477 = vpop.f32.mrb[0].mxu0
      %478 = vmatprep.mubr.bf16.mxu0 0
      %479 = vmatmul.mubr.bf16.gmra.mrb[0].mxu0 %v303
      %v480 = vpop.f32.mrb[0].mxu0
      %v481 = vadd.f32 %v228, %v480
      %v482 = vpop.f32.mrb[0].mxu0
      %v483 = vpop.f32.mrb[0].mxu0
      %v484 = vadd.f32 %v228, %v483
      %v485 = vpop.f32.mrb[0].mxu0
      %486 = vmatprep.mubr.bf16.mxu0 0
      %487 = vmatmul.mubr.bf16.gmra.mrb[0].mxu0 %v304
      %v488 = vpop.f32.mrb[0].mxu0
      %v489 = vadd.f32 %v228, %v488
      %v490 = vpop.f32.mrb[0].mxu0
      %v491 = vpop.f32.mrb[0].mxu0
      %v492 = vadd.f32 %v228, %v491
      %v493 = vpop.f32.mrb[0].mxu0
      %494 = vmatprep.mubr.bf16.mxu0 0
      %495 = vmatmul.mubr.bf16.gmra.mrb[0].mxu0 %v305
      %v496 = vpop.f32.mrb[0].mxu0
      %v497 = vadd.f32 %v228, %v496
      %v498 = vpop.f32.mrb[0].mxu0
      %v499 = vpop.f32.mrb[0].mxu0
      %v500 = vadd.f32 %v228, %v499
      %v501 = vpop.f32.mrb[0].mxu0
      %502 = vmatprep.mubr.bf16.mxu0 0
      %503 = vmatmul.mubr.bf16.gmra.mrb[0].mxu0 %v306
      %v504 = vpop.f32.mrb[0].mxu0
      %v505 = vadd.f32 %v228, %v504
      %v506 = vpop.f32.mrb[0].mxu0
      %v507 = vpop.f32.mrb[0].mxu0
      %v508 = vadd.f32 %v228, %v507
      %v509 = vpop.f32.mrb[0].mxu0
      %510 = vmatprep.mubr.bf16.mxu0 0
      %511 = vmatmul.mubr.bf16.gmra.mrb[0].mxu0 %v307
      %v512 = vpop.f32.mrb[0].mxu0
      %v513 = vadd.f32 %v228, %v512
      %v514 = vpop.f32.mrb[0].mxu0
      %v515 = vpop.f32.mrb[0].mxu0
      %v516 = vadd.f32 %v228, %v515
      %v517 = vpop.f32.mrb[0].mxu0
      %518 = vmatprep.mubr.bf16.mxu0 0
      %519 = vmatmul.mubr.bf16.gmra.mrb[0].mxu0 %v308
      %v520 = vpop.f32.mrb[0].mxu0
      %v521 = vadd.f32 %v228, %v520
      %v522 = vpop.f32.mrb[0].mxu0
      %v523 = vpop.f32.mrb[0].mxu0
      %v524 = vadd.f32 %v228, %v523
      %v525 = vpop.f32.mrb[0].mxu0
      %526 = vmatprep.mubr.bf16.mxu0 0
      %527 = vmatmul.mubr.bf16.gmra.mrb[0].mxu0 %v309
      %v528 = vpop.f32.mrb[0].mxu0
      %v529 = vadd.f32 %v228, %v528
      %v530 = vpop.f32.mrb[0].mxu0
      %v531 = vpop.f32.mrb[0].mxu0
      %v532 = vadd.f32 %v228, %v531
      %v533 = vpop.f32.mrb[0].mxu0
      %534 = vdwg.mxu0
      %vm535 = vcmp.ge.f32.partialorder %v409, 0.0
      %vm536 = vcmp.ge.f32.partialorder %v412, 0.0
      %vm537 = vcmp.ge.f32.partialorder %v417, 0.0
      %vm538 = vcmp.ge.f32.partialorder %v420, 0.0
      %vm539 = vcmp.ge.f32.partialorder %v425, 0.0
      %vm540 = vcmp.ge.f32.partialorder %v428, 0.0
      %vm541 = vcmp.ge.f32.partialorder %v433, 0.0
      %vm542 = vcmp.ge.f32.partialorder %v436, 0.0
      %vm543 = vcmp.ge.f32.partialorder %v441, 0.0
      %vm544 = vcmp.ge.f32.partialorder %v444, 0.0
      %vm545 = vcmp.ge.f32.partialorder %v449, 0.0
      %vm546 = vcmp.ge.f32.partialorder %v452, 0.0
      %vm547 = vcmp.ge.f32.partialorder %v457, 0.0
      %vm548 = vcmp.ge.f32.partialorder %v460, 0.0
      %vm549 = vcmp.ge.f32.partialorder %v465, 0.0
      %vm550 = vcmp.ge.f32.partialorder %v468, 0.0
      %vm551 = vcmp.ge.f32.partialorder %v473, 0.0
      %vm552 = vcmp.ge.f32.partialorder %v476, 0.0
      %vm553 = vcmp.ge.f32.partialorder %v481, 0.0
      %vm554 = vcmp.ge.f32.partialorder %v484, 0.0
      %vm555 = vcmp.ge.f32.partialorder %v489, 0.0
      %vm556 = vcmp.ge.f32.partialorder %v492, 0.0
      %vm557 = vcmp.ge.f32.partialorder %v497, 0.0
      %vm558 = vcmp.ge.f32.partialorder %v500, 0.0
      %vm559 = vcmp.ge.f32.partialorder %v505, 0.0
      %vm560 = vcmp.ge.f32.partialorder %v508, 0.0
      %vm561 = vcmp.ge.f32.partialorder %v513, 0.0
      %vm562 = vcmp.ge.f32.partialorder %v516, 0.0
      %vm563 = vcmp.ge.f32.partialorder %v521, 0.0
      %vm564 = vcmp.ge.f32.partialorder %v524, 0.0
      %vm565 = vcmp.ge.f32.partialorder %v529, 0.0
      %vm566 = vcmp.ge.f32.partialorder %v532, 0.0
      %v567 = vmul.f32 %v409, 0.2
      %v568 = vmul.f32 %v412, 0.2
      %v569 = vmul.f32 %v417, 0.2
      %v570 = vmul.f32 %v420, 0.2
      %v571 = vmul.f32 %v425, 0.2
      %v572 = vmul.f32 %v428, 0.2
      %v573 = vmul.f32 %v433, 0.2
      %v574 = vmul.f32 %v436, 0.2
      %v575 = vmul.f32 %v441, 0.2
      %v576 = vmul.f32 %v444, 0.2
      %v577 = vmul.f32 %v449, 0.2
      %v578 = vmul.f32 %v452, 0.2
      %v579 = vmul.f32 %v457, 0.2
      %v580 = vmul.f32 %v460, 0.2
      %v581 = vmul.f32 %v465, 0.2
      %v582 = vmul.f32 %v468, 0.2
      %v583 = vmul.f32 %v473, 0.2
      %v584 = vmul.f32 %v476, 0.2
      %v585 = vmul.f32 %v481, 0.2
      %v586 = vmul.f32 %v484, 0.2
      %v587 = vmul.f32 %v489, 0.2
      %v588 = vmul.f32 %v492, 0.2
      %v589 = vmul.f32 %v497, 0.2
      %v590 = vmul.f32 %v500, 0.2
      %v591 = vmul.f32 %v505, 0.2
      %v592 = vmul.f32 %v508, 0.2
      %v593 = vmul.f32 %v513, 0.2
      %v594 = vmul.f32 %v516, 0.2
      %v595 = vmul.f32 %v521, 0.2
      %v596 = vmul.f32 %v524, 0.2
      %v597 = vmul.f32 %v529, 0.2
      %v598 = vmul.f32 %v532, 0.2
      %v599 = vsel %vm535, %v409, %v567
      %v600 = vsel %vm536, %v412, %v568
      %v601 = vsel %vm537, %v417, %v569
      %v602 = vsel %vm538, %v420, %v570
      %v603 = vsel %vm539, %v425, %v571
      %v604 = vsel %vm540, %v428, %v572
      %v605 = vsel %vm541, %v433, %v573
      %v606 = vsel %vm542, %v436, %v574
      %v607 = vsel %vm543, %v441, %v575
      %v608 = vsel %vm544, %v444, %v576
      %v609 = vsel %vm545, %v449, %v577
      %v610 = vsel %vm546, %v452, %v578
      %v611 = vsel %vm547, %v457, %v579
      %v612 = vsel %vm548, %v460, %v580
      %v613 = vsel %vm549, %v465, %v581
      %v614 = vsel %vm550, %v468, %v582
      %v615 = vsel %vm551, %v473, %v583
      %v616 = vsel %vm552, %v476, %v584
      %v617 = vsel %vm553, %v481, %v585
      %v618 = vsel %vm554, %v484, %v586
      %v619 = vsel %vm555, %v489, %v587
      %v620 = vsel %vm556, %v492, %v588
      %v621 = vsel %vm557, %v497, %v589
      %v622 = vsel %vm558, %v500, %v590
      %v623 = vsel %vm559, %v505, %v591
      %v624 = vsel %vm560, %v508, %v592
      %v625 = vsel %vm561, %v513, %v593
      %v626 = vsel %vm562, %v516, %v594
      %v627 = vsel %vm563, %v521, %v595
      %v628 = vsel %vm564, %v524, %v596
      %v629 = vsel %vm565, %v529, %v597
      %v630 = vsel %vm566, %v532, %v598
      %v631 = vpack.c.bf16 %v600, %v599
      %v632 = vpack.c.bf16 %v602, %v601
      %v633 = vpack.c.bf16 %v604, %v603
      %v634 = vpack.c.bf16 %v606, %v605
      %v635 = vpack.c.bf16 %v608, %v607
      %v636 = vpack.c.bf16 %v610, %v609
      %v637 = vpack.c.bf16 %v612, %v611
      %v638 = vpack.c.bf16 %v614, %v613
      %v639 = vpack.c.bf16 %v616, %v615
      %v640 = vpack.c.bf16 %v618, %v617
      %v641 = vpack.c.bf16 %v620, %v619
      %v642 = vpack.c.bf16 %v622, %v621
      %v643 = vpack.c.bf16 %v624, %v623
      %v644 = vpack.c.bf16 %v626, %v625
      %v645 = vpack.c.bf16 %v628, %v627
      %v646 = vpack.c.bf16 %v630, %v629
      %v663 = vunpack.c.l.b16 %v631
      %v664 = vunpack.c.h.b16 %v631
      %v665 = vunpack.c.l.b16 %v632
      %v666 = vunpack.c.h.b16 %v632
      %v667 = vunpack.c.l.b16 %v633
      %v668 = vunpack.c.h.b16 %v633
      %v669 = vunpack.c.l.b16 %v634
      %v670 = vunpack.c.h.b16 %v634
      %v671 = vunpack.c.l.b16 %v635
      %v672 = vunpack.c.h.b16 %v635
      %v673 = vunpack.c.l.b16 %v636
      %v674 = vunpack.c.h.b16 %v636
      %v675 = vunpack.c.l.b16 %v637
      %v676 = vunpack.c.h.b16 %v637
      %v677 = vunpack.c.l.b16 %v638
      %v678 = vunpack.c.h.b16 %v638
      %v679 = vunpack.c.l.b16 %v639
      %v680 = vunpack.c.h.b16 %v639
      %v681 = vunpack.c.l.b16 %v640
      %v682 = vunpack.c.h.b16 %v640
      %v683 = vunpack.c.l.b16 %v641
      %v684 = vunpack.c.h.b16 %v641
      %v685 = vunpack.c.l.b16 %v642
      %v686 = vunpack.c.h.b16 %v642
      %v687 = vunpack.c.l.b16 %v643
      %v688 = vunpack.c.h.b16 %v643
      %v689 = vunpack.c.l.b16 %v644
      %v690 = vunpack.c.h.b16 %v644
      %v691 = vunpack.c.l.b16 %v645
      %v692 = vunpack.c.h.b16 %v645
      %v693 = vunpack.c.l.b16 %v646
      %v694 = vunpack.c.h.b16 %v646
      %v695 = vpack.c.b16 %v663, %v663
      %v696 = vpack.c.b16 %v664, %v664
      %v697 = vpack.c.b16 %v665, %v665
      %v698 = vpack.c.b16 %v666, %v666
      %v699 = vpack.c.b16 %v667, %v667
      %v700 = vpack.c.b16 %v668, %v668
      %v701 = vpack.c.b16 %v669, %v669
      %v702 = vpack.c.b16 %v670, %v670
      %v703 = vpack.c.b16 %v671, %v671
      %v704 = vpack.c.b16 %v672, %v672
      %v705 = vpack.c.b16 %v673, %v673
      %v706 = vpack.c.b16 %v674, %v674
      %v707 = vpack.c.b16 %v675, %v675
      %v708 = vpack.c.b16 %v676, %v676
      %v709 = vpack.c.b16 %v677, %v677
      %v710 = vpack.c.b16 %v678, %v678
      %v711 = vpack.c.b16 %v679, %v679
      %v712 = vpack.c.b16 %v680, %v680
      %v713 = vpack.c.b16 %v681, %v681
      %v714 = vpack.c.b16 %v682, %v682
      %v715 = vpack.c.b16 %v683, %v683
      %v716 = vpack.c.b16 %v684, %v684
      %v717 = vpack.c.b16 %v685, %v685
      %v718 = vpack.c.b16 %v686, %v686
      %v719 = vpack.c.b16 %v687, %v687
      %v720 = vpack.c.b16 %v688, %v688
      %v721 = vpack.c.b16 %v689, %v689
      %v722 = vpack.c.b16 %v690, %v690
      %v723 = vpack.c.b16 %v691, %v691
      %v724 = vpack.c.b16 %v692, %v692
      %v725 = vpack.c.b16 %v693, %v693
      %v726 = vpack.c.b16 %v694, %v694
      %759 = vst [vmem:[%s172] sm:$0xf] %v695
      %760 = vst [vmem:[%s172 + $0x4] sm:$0xf] %v696
      %761 = vst [vmem:[%s172 + $0x8] sm:$0xf] %v697
      %762 = vst [vmem:[%s172 + $0xc] sm:$0xf] %v698
      %763 = vst [vmem:[%s172 + $0x10] sm:$0xf] %v699
      %764 = vst [vmem:[%s172 + $0x14] sm:$0xf] %v700
      %765 = vst [vmem:[%s172 + $0x18] sm:$0xf] %v701
      %766 = vst [vmem:[%s172 + $0x1c] sm:$0xf] %v702
      %767 = vst [vmem:[%s172 + $0x20] sm:$0xf] %v703
      %768 = vst [vmem:[%s172 + $0x24] sm:$0xf] %v704
      %769 = vst [vmem:[%s172 + $0x28] sm:$0xf] %v705
      %770 = vst [vmem:[%s172 + $0x2c] sm:$0xf] %v706
      %771 = vst [vmem:[%s172 + $0x30] sm:$0xf] %v707
      %772 = vst [vmem:[%s172 + $0x34] sm:$0xf] %v708
      %773 = vst [vmem:[%s172 + $0x38] sm:$0xf] %v709
      %774 = vst [vmem:[%s172 + $0x3c] sm:$0xf] %v710
      %775 = vst [vmem:[%s172 + $0x40] sm:$0xf] %v711
      %776 = vst [vmem:[%s172 + $0x44] sm:$0xf] %v712
      %777 = vst [vmem:[%s172 + $0x48] sm:$0xf] %v713
      %778 = vst [vmem:[%s172 + $0x4c] sm:$0xf] %v714
      %779 = vst [vmem:[%s172 + $0x50] sm:$0xf] %v715
      %780 = vst [vmem:[%s172 + $0x54] sm:$0xf] %v716
      %781 = vst [vmem:[%s172 + $0x58] sm:$0xf] %v717
      %782 = vst [vmem:[%s172 + $0x5c] sm:$0xf] %v718
      %783 = vst [vmem:[%s172 + $0x60] sm:$0xf] %v719
      %784 = vst [vmem:[%s172 + $0x64] sm:$0xf] %v720
      %785 = vst [vmem:[%s172 + $0x68] sm:$0xf] %v721
      %786 = vst [vmem:[%s172 + $0x6c] sm:$0xf] %v722
      %787 = vst [vmem:[%s172 + $0x70] sm:$0xf] %v723
      %788 = vst [vmem:[%s172 + $0x74] sm:$0xf] %v724
      %789 = vst [vmem:[%s172 + $0x78] sm:$0xf] %v725
      %790 = vst [vmem:[%s172 + $0x7c] sm:$0xf] %v726
      %s791 = smul.u32 32, %s14
      %p792 = scmp.lt.s32.totalorder %s791, 63
      %s793 = scalar_select %p792, %s791, 63
      %s794 = smul.addr %s793, 4
      %s795 = scalar_lea.vmem %s3, %s794
      // Predicated region
      $region33: #{_lambda_.5} parent=31 // pred_check
        %p796 = pneg %p100
      $region34: #{_lambda_.5} parent=31 // pred_check_branch
        %798 = sbr.rel (%p796) target = $region36
      $region35: #{_lambda_.5} parent=31 // pred_region
        %s799 = smul.u32 32, %s14
      $region36: #{_lambda_.5} parent=31 // pred_fallthru
        _
    $region32: #{_lambda_.5} parent=5 // pred_fallthru
      _
    %p800 = scmp.le.s32.totalorder 2, %s9
    // Predicated region
    $region37: #{_lambda_.5} parent=5 // pred_check
      %p801 = pneg %p800
    $region38: #{_lambda_.5} parent=5 // pred_check_branch
      %803 = sbr.rel (%p801) target = $region40
    $region39: #{_lambda_.5} parent=5 // pred_region
      %s804 = ssub.s32 %s9, 2
      // Predicated region
      $region41: #{_lambda_.5} parent=39 // pred_check
        %p805 = pneg %p106
      $region42: #{_lambda_.5} parent=39 // pred_check_branch
        %807 = sbr.rel (%p805) target = $region44
      $region43: #{_lambda_.5} parent=39 // pred_region
        %s808 = smul.u32 32, %s15
        %p809 = scmp.lt.s32.totalorder %s808, 63
        %s810 = scalar_select %p809, %s808, 63
        %s811 = smul.addr %s810, 4
        %s812 = scalar_lea.vmem %s3, %s811
      $region44: #{_lambda_.5} parent=39 // pred_fallthru
        _
    $region40: #{_lambda_.5} parent=5 // pred_fallthru
      _
  $region6: #{_lambda_.5} parent=0 // loop_footer
    %s13 = sadd.s32 1, %s9
  $region7: #{_lambda_.5} parent=0 // loop_footer_branch
    %8 = sbr.rel target = $region3
  $region8: #{_lambda_.5} parent=0 // loop_exit
    _

// kernel: _lambda_.6
$region0: #{_lambda_.6}
  #allocation0 [shape = 'u32[]', space=smem, size = 0x4, offset = 0x4, fixed_abs, tag = 'smem constant byte address 0x4 - core index']
  #allocation1 [shape = 'u32[144,128]{1,0:T(1,128)}', space=vmem, size = 0x12000, scoped, tag = 'internal scratch']
  %s0 = inlined_call_operand.vmem [shape: bf16[128,128], index: 0, kind: input, shape index: {}]
  %s1 = inlined_call_operand.vmem [shape: bf16[128,128], index: 1, kind: input, shape index: {}]
  %s2 = inlined_call_operand.vmem [shape: bf16[128,128], index: 2, kind: output, shape index: {0}]
  %s3 = inlined_call_operand.vmem [shape: f32[2,2,128], index: 3, kind: output, shape index: {1}]
  %4 = xla_tuple %s2, %s3
  %s5 = sld [smem:[#allocation0]]
  $region49: #{_lambda_.6} parent=0
    _
  %s7 = ssub.s32 1, %s5
  %s8 = scalar_select 0, %s7, %s5
  loop: start=0, step=1, limit=4
  $region2: #{_lambda_.6} parent=0 // loop_pre_header
    _
  $region3: #{_lambda_.6} parent=0 // loop_header
    %s10 = sphi 0, %s14
    %p11 = scmp.ge.s32.totalorder %s10, 4
    %s20 = sphi 0, %s22
    %s23 = sphi 0, %s20
    %s24 = sphi 0, %s23
    %s40 = sphi 0, %s24
    %s44 = sphi 0, %s44
    %s46 = sphi 0, %s44
    %s47 = sphi 0, %s46
    %s61 = sphi 0, %s47
    %s67 = sphi 0, %s69
    %s70 = sphi 0, %s67
    %s71 = sphi 0, %s70
    %s87 = sphi 0, %s71
    %s93 = sphi 0, %s95
    %s96 = sphi 0, %s93
    %s97 = sphi 0, %s96
    %s113 = sphi 0, %s97
  $region4: #{_lambda_.6} parent=0 // loop_header_branch
    %13 = sbr.rel (%p11) target = $region8
  $region5: #{_lambda_.6} parent=0 // loop_body
    %s15 = ssub.s32 %s10, 1
    %s16 = ssub.s32 %s10, 2
    %s17 = sadd.s32 %s10, 1
    %s18 = ssub.s32 %s10, %s17
    %p19 = scmp.eq.s32.totalorder %s18, 0
    %s21 = sadd.s32 %s20, 1
    %s22 = scalar_select %p19, %s20, %s21
    %p25 = pneg %p19
    %p26 = scmp.eq.s32.totalorder %s10, 1
    %p27 = por %p25, %p26
    %p28 = scmp.ne.s32.totalorder %s20, %s23
    %p29 = scmp.eq.s32.totalorder %s10, 0
    %p30 = por %p28, %p29
    %p31 = scmp.ne.s32.totalorder %s20, %s23
    %p32 = scmp.eq.s32.totalorder %s15, 1
    %p33 = por %p31, %p32
    %p34 = scmp.ne.s32.totalorder %s23, %s24
    %p35 = scmp.eq.s32.totalorder %s15, 0
    %p36 = por %p34, %p35
    %p37 = scmp.ne.s32.totalorder %s23, %s24
    %p38 = scmp.eq.s32.totalorder %s16, 1
    %p39 = por %p37, %p38
    %p41 = scmp.ne.s32.totalorder %s24, %s40
    %p42 = scmp.eq.s32.totalorder %s16, 0
    %p43 = por %p41, %p42
    %s45 = sadd.s32 %s44, 1
    %p48 = scmp.eq.s32.totalorder %s10, 1
    %p49 = scmp.ne.s32.totalorder %s44, %s46
    %p50 = scmp.eq.s32.totalorder %s10, 0
    %p51 = por %p49, %p50
    %p52 = scmp.ne.s32.totalorder %s44, %s46
    %p53 = scmp.eq.s32.totalorder %s15, 1
    %p54 = por %p52, %p53
    %p55 = scmp.ne.s32.totalorder %s46, %s47
    %p56 = scmp.eq.s32.totalorder %s15, 0
    %p57 = por %p55, %p56
    %p58 = scmp.ne.s32.totalorder %s46, %s47
    %p59 = scmp.eq.s32.totalorder %s16, 1
    %p60 = por %p58, %p59
    %p62 = scmp.ne.s32.totalorder %s47, %s61
    %p63 = scmp.eq.s32.totalorder %s16, 0
    %p64 = por %p62, %p63
    %s65 = ssub.s32 %s10, %s17
    %p66 = scmp.eq.s32.totalorder %s65, 0
    %s68 = sadd.s32 %s67, 1
    %s69 = scalar_select %p66, %s67, %s68
    %p72 = pneg %p66
    %p73 = scmp.eq.s32.totalorder %s10, 1
    %p74 = por %p72, %p73
    %p75 = scmp.ne.s32.totalorder %s67, %s70
    %p76 = scmp.eq.s32.totalorder %s10, 0
    %p77 = por %p75, %p76
    %p78 = scmp.ne.s32.totalorder %s67, %s70
    %p79 = scmp.eq.s32.totalorder %s15, 1
    %p80 = por %p78, %p79
    %p81 = scmp.ne.s32.totalorder %s70, %s71
    %p82 = scmp.eq.s32.totalorder %s15, 0
    %p83 = por %p81, %p82
    %p84 = scmp.ne.s32.totalorder %s70, %s71
    %p85 = scmp.eq.s32.totalorder %s16, 1
    %p86 = por %p84, %p85
    %p88 = scmp.ne.s32.totalorder %s71, %s87
    %p89 = scmp.eq.s32.totalorder %s16, 0
    %p90 = por %p88, %p89
    %s91 = ssub.s32 %s10, %s17
    %p92 = scmp.eq.s32.totalorder %s91, 0
    %s94 = sadd.s32 %s93, 1
    %s95 = scalar_select %p92, %s93, %s94
    %p98 = pneg %p92
    %p99 = scmp.eq.s32.totalorder %s10, 1
    %p100 = por %p98, %p99
    %p101 = scmp.ne.s32.totalorder %s93, %s96
    %p102 = scmp.eq.s32.totalorder %s10, 0
    %p103 = por %p101, %p102
    %p104 = scmp.ne.s32.totalorder %s93, %s96
    %p105 = scmp.eq.s32.totalorder %s15, 1
    %p106 = por %p104, %p105
    %p107 = scmp.ne.s32.totalorder %s96, %s97
    %p108 = scmp.eq.s32.totalorder %s15, 0
    %p109 = por %p107, %p108
    %p110 = scmp.ne.s32.totalorder %s96, %s97
    %p111 = scmp.eq.s32.totalorder %s16, 1
    %p112 = por %p110, %p111
    %p114 = scmp.ne.s32.totalorder %s97, %s113
    %p115 = scmp.eq.s32.totalorder %s16, 0
    %p116 = por %p114, %p115
    %p117 = scmp.le.s32.totalorder 1, %s10
    %p118 = scmp.lt.s32.totalorder %s10, 3
    %p119 = pnand %p117, %p118
    %p120 = pneg %p119
    // Predicated region
    $region9: #{_lambda_.6} parent=5 // pred_check
      _
    $region10: #{_lambda_.6} parent=5 // pred_check_branch
      %122 = sbr.rel (%p119) target = $region12
    $region11: #{_lambda_.6} parent=5 // pred_region
      %s123 = ssub.s32 %s10, 1
      // Predicated region
      $region13: #{_lambda_.6} parent=11 // pred_check
        %p124 = pneg %p57
      $region14: #{_lambda_.6} parent=11 // pred_check_branch
        %126 = sbr.rel (%p124) target = $region16
      $region15: #{_lambda_.6} parent=11 // pred_region
        _
      $region16: #{_lambda_.6} parent=11 // pred_fallthru
        _
    $region12: #{_lambda_.6} parent=5 // pred_fallthru
      _
    %p127 = scmp.lt.s32.totalorder %s10, 2
    // Predicated region
    $region17: #{_lambda_.6} parent=5 // pred_check
      %p128 = pneg %p127
    $region18: #{_lambda_.6} parent=5 // pred_check_branch
      %130 = sbr.rel (%p128) target = $region20
    $region19: #{_lambda_.6} parent=5 // pred_region
      // Predicated region
      $region21: #{_lambda_.6} parent=19 // pred_check
        %p131 = pneg %p30
      $region22: #{_lambda_.6} parent=19 // pred_check_branch
        %133 = sbr.rel (%p131) target = $region24
      $region23: #{_lambda_.6} parent=19 // pred_region
        %s134 = smul.u32 8, %s10
        %p135 = scmp.lt.s32.totalorder %s134, 15
        %s136 = scalar_select %p135, %s134, 15
        %s137 = smul.addr %s136, 4
        %s138 = scalar_lea.vmem %s0, %s137
        %s139 = smul.u32 8, %s10
      $region24: #{_lambda_.6} parent=19 // pred_fallthru
        _
    $region20: #{_lambda_.6} parent=5 // pred_fallthru
      _
    %p140 = scmp.le.s32.totalorder 1, %s10
    %p141 = scmp.lt.s32.totalorder %s10, 3
    %p142 = pnand %p140, %p141
    %p143 = pneg %p142
    // Predicated region
    $region25: #{_lambda_.6} parent=5 // pred_check
      _
    $region26: #{_lambda_.6} parent=5 // pred_check_branch
      %145 = sbr.rel (%p142) target = $region28
    $region27: #{_lambda_.6} parent=5 // pred_region
      %s146 = ssub.s32 %s10, 1
      %s147 = smul.u32 8, %s15
      %p148 = scmp.lt.s32.totalorder %s147, 15
      %s149 = scalar_select %p148, %s147, 15
      %s150 = smul.addr %s149, 4
      %s151 = scalar_lea.vmem %s0, %s150
      %p152 = pneg %p36
      %p153 = pneg %p33
      %p154 = pneg %p57
      %p155 = pneg %p54
      %p156 = pneg %p83
      %p157 = pneg %p80
      %s158 = smul.u32 8, %s15
      %p159 = scmp.lt.s32.totalorder %s158, 15
      %s160 = scalar_select %p159, %s158, 15
      %s161 = smul.addr %s160, 4
      %s162 = scalar_lea.vmem %s2, %s161
      %p163 = pneg %p109
      %p164 = pneg %p106
      %p165 = scmp.lt.s32.totalorder %s15, 1
      %s166 = scalar_select %p165, %s15, 1
      %s167 = smul.addr %s166, 2
      %s168 = scalar_lea.vmem %s3, %s167
      %s169 = smul.u32 8, %s15
      %p170 = scmp.lt.s32.totalorder %s169, 15
      %s171 = scalar_select %p170, %s169, 15
      %s172 = smul.addr %s171, 4
      %s173 = scalar_lea.vmem %s0, %s172
      %s174 = smul.u32 8, %s15
      %s175 = smul.u32 8, %s15
      %p176 = scmp.lt.s32.totalorder %s175, 15
      %s177 = scalar_select %p176, %s175, 15
      %s178 = smul.addr %s177, 4
      %s179 = scalar_lea.vmem %s2, %s178
      %s180 = smul.u32 8, %s15
      %p181 = scmp.lt.s32.totalorder %s15, 1
      %s182 = scalar_select %p181, %s15, 1
      %s183 = smul.addr %s182, 2
      %s184 = scalar_lea.vmem %s3, %s183
      %v186 = vld [vmem:[%s173] sm:$0xf]
      %v187 = vld [vmem:[%s173 + $0x4] sm:$0xf]
      %v188 = vld [vmem:[%s173 + $0x8] sm:$0xf]
      %v189 = vld [vmem:[%s173 + $0xc] sm:$0xf]
      %v190 = vld [vmem:[%s173 + $0x10] sm:$0xf]
      %v191 = vld [vmem:[%s173 + $0x14] sm:$0xf]
      %v192 = vld [vmem:[%s173 + $0x18] sm:$0xf]
      %v193 = vld [vmem:[%s173 + $0x1c] sm:$0xf]
      %v194 = vld [vmem:[%s1] sm:$0xf]
      %v195 = vld [vmem:[%s1 + $0x4] sm:$0xf]
      %v196 = vld [vmem:[%s1 + $0x8] sm:$0xf]
      %v197 = vld [vmem:[%s1 + $0xc] sm:$0xf]
      %v198 = vld [vmem:[%s1 + $0x10] sm:$0xf]
      %v199 = vld [vmem:[%s1 + $0x14] sm:$0xf]
      %v200 = vld [vmem:[%s1 + $0x18] sm:$0xf]
      %v201 = vld [vmem:[%s1 + $0x1c] sm:$0xf]
      %v202 = vld [vmem:[%s1 + $0x20] sm:$0xf]
      %v203 = vld [vmem:[%s1 + $0x24] sm:$0xf]
      %v204 = vld [vmem:[%s1 + $0x28] sm:$0xf]
      %v205 = vld [vmem:[%s1 + $0x2c] sm:$0xf]
      %v206 = vld [vmem:[%s1 + $0x30] sm:$0xf]
      %v207 = vld [vmem:[%s1 + $0x34] sm:$0xf]
      %v208 = vld [vmem:[%s1 + $0x38] sm:$0xf]
      %v209 = vld [vmem:[%s1 + $0x3c] sm:$0xf]
      %v218 = vunpack.c.l.b16 %v186
      %v219 = vunpack.c.l.b16 %v187
      %v220 = vunpack.c.l.b16 %v188
      %v221 = vunpack.c.l.b16 %v189
      %v222 = vunpack.c.l.b16 %v190
      %v223 = vunpack.c.l.b16 %v191
      %v224 = vunpack.c.l.b16 %v192
      %v225 = vunpack.c.l.b16 %v193
      %v226 = vpack.c.b16 %v219, %v218
      %v227 = vpack.c.b16 %v221, %v220
      %v228 = vpack.c.b16 %v223, %v222
      %v229 = vpack.c.b16 %v225, %v224
      %v250 = vunpack.c.l.b16 %v194
      %v251 = vunpack.c.l.b16 %v195
      %v252 = vunpack.c.l.b16 %v196
      %v253 = vunpack.c.l.b16 %v197
      %v254 = vunpack.c.l.b16 %v198
      %v255 = vunpack.c.l.b16 %v199
      %v256 = vunpack.c.l.b16 %v200
      %v257 = vunpack.c.l.b16 %v201
      %v258 = vunpack.c.l.b16 %v202
      %v259 = vunpack.c.l.b16 %v203
      %v260 = vunpack.c.l.b16 %v204
      %v261 = vunpack.c.l.b16 %v205
      %v262 = vunpack.c.l.b16 %v206
      %v263 = vunpack.c.l.b16 %v207
      %v264 = vunpack.c.l.b16 %v208
      %v265 = vunpack.c.l.b16 %v209
      %v266 = vpack.c.b16 %v251, %v250
      %v267 = vpack.c.b16 %v253, %v252
      %v268 = vpack.c.b16 %v255, %v254
      %v269 = vpack.c.b16 %v257, %v256
      %v270 = vpack.c.b16 %v259, %v258
      %v271 = vpack.c.b16 %v261, %v260
      %v272 = vpack.c.b16 %v263, %v262
      %v273 = vpack.c.b16 %v265, %v264
      %282 = vmatprep.subr.bf16.mxu0 0
      %283 = vmatpush1.bf16.msra.mxu0 %v266
      %284 = vmatprep.subr.bf16.mxu0 0
      %285 = vmatpush1.bf16.msra.mxu0 %v267
      %286 = vmatprep.subr.bf16.mxu0 0
      %287 = vmatpush1.bf16.msra.mxu0 %v268
      %288 = vmatprep.subr.bf16.mxu0 0
      %289 = vmatpush1.bf16.msra.mxu0 %v269
      %290 = vmatprep.subr.bf16.mxu0 0
      %291 = vmatpush1.bf16.msra.mxu0 %v270
      %292 = vmatprep.subr.bf16.mxu0 0
      %293 = vmatpush1.bf16.msra.mxu0 %v271
      %294 = vmatprep.subr.bf16.mxu0 0
      %295 = vmatpush1.bf16.msra.mxu0 %v272
      %296 = vmatprep.subr.bf16.mxu0 0
      %297 = vmatpush1.bf16.msra.mxu0 %v273
      %298 = vmatprep.subr.bf16.mxu0 0
      %299 = vmatpush1.bf16.msra.mxu0 0
      %300 = vmatprep.subr.bf16.mxu0 0
      %301 = vmatpush1.bf16.msra.mxu0 0
      %302 = vmatprep.subr.bf16.mxu0 0
      %303 = vmatpush1.bf16.msra.mxu0 0
      %304 = vmatprep.subr.bf16.mxu0 0
      %305 = vmatpush1.bf16.msra.mxu0 0
      %306 = vmatprep.subr.bf16.mxu0 0
      %307 = vmatpush1.bf16.msra.mxu0 0
      %308 = vmatprep.subr.bf16.mxu0 0
      %309 = vmatpush1.bf16.msra.mxu0 0
      %310 = vmatprep.subr.bf16.mxu0 0
      %311 = vmatpush1.bf16.msra.mxu0 0
      %312 = vmatprep.subr.bf16.mxu0 0
      %313 = vmatpush1.bf16.msra.mxu0 0
      %314 = vmatprep.mubr.bf16.mxu0 0
      %315 = vmatmul.mubr.bf16.gmra.mrb[0].mxu0 %v226
      %v316 = vpop.f32.mrb[0].mxu0
      %v317 = vadd.f32 0.0, %v316
      %v318 = vpop.f32.mrb[0].mxu0
      %v319 = vpop.f32.mrb[0].mxu0
      %v320 = vadd.f32 0.0, %v319
      %v321 = vpop.f32.mrb[0].mxu0
      %322 = vmatprep.mubr.bf16.mxu0 0
      %323 = vmatmul.mubr.bf16.gmra.mrb[0].mxu0 %v227
      %v324 = vpop.f32.mrb[0].mxu0
      %v325 = vadd.f32 0.0, %v324
      %v326 = vpop.f32.mrb[0].mxu0
      %v327 = vpop.f32.mrb[0].mxu0
      %v328 = vadd.f32 0.0, %v327
      %v329 = vpop.f32.mrb[0].mxu0
      %330 = vmatprep.mubr.bf16.mxu0 0
      %331 = vmatmul.mubr.bf16.gmra.mrb[0].mxu0 %v228
      %v332 = vpop.f32.mrb[0].mxu0
      %v333 = vadd.f32 0.0, %v332
      %v334 = vpop.f32.mrb[0].mxu0
      %v335 = vpop.f32.mrb[0].mxu0
      %v336 = vadd.f32 0.0, %v335
      %v337 = vpop.f32.mrb[0].mxu0
      %338 = vmatprep.mubr.bf16.mxu0 0
      %339 = vmatmul.mubr.bf16.gmra.mrb[0].mxu0 %v229
      %v340 = vpop.f32.mrb[0].mxu0
      %v341 = vadd.f32 0.0, %v340
      %v342 = vpop.f32.mrb[0].mxu0
      %v343 = vpop.f32.mrb[0].mxu0
      %v344 = vadd.f32 0.0, %v343
      %v345 = vpop.f32.mrb[0].mxu0
      %346 = vdwg.mxu0
      %v347 = vpack.c.bf16 %v320, %v317
      %v348 = vpack.c.bf16 %v328, %v325
      %v349 = vpack.c.bf16 %v336, %v333
      %v350 = vpack.c.bf16 %v344, %v341
      %v355 = vunpack.c.l.b16 %v347
      %v356 = vunpack.c.h.b16 %v347
      %v357 = vunpack.c.l.b16 %v348
      %v358 = vunpack.c.h.b16 %v348
      %v359 = vunpack.c.l.b16 %v349
      %v360 = vunpack.c.h.b16 %v349
      %v361 = vunpack.c.l.b16 %v350
      %v362 = vunpack.c.h.b16 %v350
      %v363 = vpack.c.b16 %v355, %v355
      %v364 = vpack.c.b16 %v356, %v356
      %v365 = vpack.c.b16 %v357, %v357
      %v366 = vpack.c.b16 %v358, %v358
      %v367 = vpack.c.b16 %v359, %v359
      %v368 = vpack.c.b16 %v360, %v360
      %v369 = vpack.c.b16 %v361, %v361
      %v370 = vpack.c.b16 %v362, %v362
      %379 = vst [vmem:[%s179] sm:$0xf] %v363
      %380 = vst [vmem:[%s179 + $0x4] sm:$0xf] %v364
      %381 = vst [vmem:[%s179 + $0x8] sm:$0xf] %v365
      %382 = vst [vmem:[%s179 + $0xc] sm:$0xf] %v366
      %383 = vst [vmem:[%s179 + $0x10] sm:$0xf] %v367
      %384 = vst [vmem:[%s179 + $0x14] sm:$0xf] %v368
      %385 = vst [vmem:[%s179 + $0x18] sm:$0xf] %v369
      %386 = vst [vmem:[%s179 + $0x1c] sm:$0xf] %v370
      %v387 = vadd.f32 %v317, %v320
      %v388 = vadd.f32 %v387, %v325
      %v389 = vadd.f32 %v388, %v328
      %v390 = vadd.f32 %v389, %v333
      %v391 = vadd.f32 %v390, %v336
      %v392 = vadd.f32 %v391, %v341
      %v393 = vadd.f32 %v392, %v344
      %v394 = vrot.slane %v393, 4
      %v395 = vadd.f32 %v393, %v394
      %v396 = vrot.slane %v395, 2
      %v397 = vadd.f32 %v395, %v396
      %v398 = vrot.slane %v397, 1
      %v399 = vadd.f32 %v397, %v398
      %v400 = vmul.f32 %v317, %v317
      %v401 = vmul.f32 %v320, %v320
      %v402 = vmul.f32 %v325, %v325
      %v403 = vmul.f32 %v328, %v328
      %v404 = vmul.f32 %v333, %v333
      %v405 = vmul.f32 %v336, %v336
      %v406 = vmul.f32 %v341, %v341
      %v407 = vmul.f32 %v344, %v344
      %v408 = vadd.f32 %v400, %v401
      %v409 = vadd.f32 %v408, %v402
      %v410 = vadd.f32 %v409, %v403
      %v411 = vadd.f32 %v410, %v404
      %v412 = vadd.f32 %v411, %v405
      %v413 = vadd.f32 %v412, %v406
      %v414 = vadd.f32 %v413, %v407
      %v415 = vrot.slane %v414, 4
      %v416 = vadd.f32 %v414, %v415
      %v417 = vrot.slane %v416, 2
      %v418 = vadd.f32 %v416, %v417
      %v419 = vrot.slane %v418, 1
      %v420 = vadd.f32 %v418, %v419
      %vm421 = vcmask 1040384
      %v422 = vsel %vm421, %v399, %v420
      %423 = vst [vmem:[%s184] sm:$0x3] %v422
      %s424 = smul.u32 8, %s15
      %p425 = scmp.lt.s32.totalorder %s424, 15
      %s426 = scalar_select %p425, %s424, 15
      %s427 = smul.addr %s426, 4
      %s428 = scalar_lea.vmem %s2, %s427
      %p429 = scmp.lt.s32.totalorder %s15, 1
      %s430 = scalar_select %p429, %s15, 1
      %s431 = smul.addr %s430, 2
      %s432 = scalar_lea.vmem %s3, %s431
      // Predicated region
      $region29: #{_lambda_.6} parent=27 // pred_check
        %p433 = pneg %p80
      $region30: #{_lambda_.6} parent=27 // pred_check_branch
        %435 = sbr.rel (%p433) target = $region32
      $region31: #{_lambda_.6} parent=27 // pred_region
        %s436 = smul.u32 8, %s15
      $region32: #{_lambda_.6} parent=27 // pred_fallthru
        _
      // Predicated region
      $region33: #{_lambda_.6} parent=27 // pred_check
        %p437 = pneg %p106
      $region34: #{_lambda_.6} parent=27 // pred_check_branch
        %439 = sbr.rel (%p437) target = $region36
      $region35: #{_lambda_.6} parent=27 // pred_region
        _
      $region36: #{_lambda_.6} parent=27 // pred_fallthru
        _
    $region28: #{_lambda_.6} parent=5 // pred_fallthru
      _
    %p440 = scmp.le.s32.totalorder 2, %s10
    // Predicated region
    $region37: #{_lambda_.6} parent=5 // pred_check
      %p441 = pneg %p440
    $region38: #{_lambda_.6} parent=5 // pred_check_branch
      %443 = sbr.rel (%p441) target = $region40
    $region39: #{_lambda_.6} parent=5 // pred_region
      %s444 = ssub.s32 %s10, 2
      // Predicated region
      $region41: #{_lambda_.6} parent=39 // pred_check
        %p445 = pneg %p86
      $region42: #{_lambda_.6} parent=39 // pred_check_branch
        %447 = sbr.rel (%p445) target = $region44
      $region43: #{_lambda_.6} parent=39 // pred_region
        %s448 = smul.u32 8, %s16
        %p449 = scmp.lt.s32.totalorder %s448, 15
        %s450 = scalar_select %p449, %s448, 15
        %s451 = smul.addr %s450, 4
        %s452 = scalar_lea.vmem %s2, %s451
      $region44: #{_lambda_.6} parent=39 // pred_fallthru
        _
      // Predicated region
      $region45: #{_lambda_.6} parent=39 // pred_check
        %p453 = pneg %p112
      $region46: #{_lambda_.6} parent=39 // pred_check_branch
        %455 = sbr.rel (%p453) target = $region48
      $region47: #{_lambda_.6} parent=39 // pred_region
        %p456 = scmp.lt.s32.totalorder %s16, 1
        %s457 = scalar_select %p456, %s16, 1
        %s458 = smul.addr %s457, 2
        %s459 = scalar_lea.vmem %s3, %s458
      $region48: #{_lambda_.6} parent=39 // pred_fallthru
        _
    $region40: #{_lambda_.6} parent=5 // pred_fallthru
      _
  $region6: #{_lambda_.6} parent=0 // loop_footer
    %s14 = sadd.s32 1, %s10
  $region7: #{_lambda_.6} parent=0 // loop_footer_branch
    %9 = sbr.rel target = $region3
  $region8: #{_lambda_.6} parent=0 // loop_exit
    _

// kernel: _lambda_.7
$region0: #{_lambda_.7}
  #allocation0 [shape = 'u32[]', space=smem, size = 0x4, offset = 0x4, fixed_abs, tag = 'smem constant byte address 0x4 - core index']
  #allocation1 [shape = 'u32[144,128]{1,0:T(1,128)}', space=vmem, size = 0x12000, scoped, tag = 'internal scratch']
  %s0 = inlined_call_operand.vmem [shape: bf16[32,256], index: 0, kind: input, shape index: {}]
  %s1 = inlined_call_operand.vmem [shape: bf16[256,128], index: 1, kind: input, shape index: {}]
  %s2 = inlined_call_operand.vmem [shape: bf16[32,128], index: 2, kind: output, shape index: {0}]
  %s3 = inlined_call_operand.vmem [shape: f32[2,2,128], index: 3, kind: output, shape index: {1}]
  %4 = xla_tuple %s2, %s3
  %s5 = sld [smem:[#allocation0]]
  $region49: #{_lambda_.7} parent=0
    _
  %s7 = ssub.s32 1, %s5
  %s8 = scalar_select 0, %s7, %s5
  loop: start=0, step=1, limit=4
  $region2: #{_lambda_.7} parent=0 // loop_pre_header
    _
  $region3: #{_lambda_.7} parent=0 // loop_header
    %s10 = sphi 0, %s14
    %p11 = scmp.ge.s32.totalorder %s10, 4
    %s20 = sphi 0, %s22
    %s23 = sphi 0, %s20
    %s24 = sphi 0, %s23
    %s40 = sphi 0, %s24
    %s44 = sphi 0, %s44
    %s46 = sphi 0, %s44
    %s47 = sphi 0, %s46
    %s61 = sphi 0, %s47
    %s67 = sphi 0, %s69
    %s70 = sphi 0, %s67
    %s71 = sphi 0, %s70
    %s87 = sphi 0, %s71
    %s93 = sphi 0, %s95
    %s96 = sphi 0, %s93
    %s97 = sphi 0, %s96
    %s113 = sphi 0, %s97
  $region4: #{_lambda_.7} parent=0 // loop_header_branch
    %13 = sbr.rel (%p11) target = $region8
  $region5: #{_lambda_.7} parent=0 // loop_body
    %s15 = ssub.s32 %s10, 1
    %s16 = ssub.s32 %s10, 2
    %s17 = sadd.s32 %s10, 1
    %s18 = ssub.s32 %s10, %s17
    %p19 = scmp.eq.s32.totalorder %s18, 0
    %s21 = sadd.s32 %s20, 1
    %s22 = scalar_select %p19, %s20, %s21
    %p25 = pneg %p19
    %p26 = scmp.eq.s32.totalorder %s10, 1
    %p27 = por %p25, %p26
    %p28 = scmp.ne.s32.totalorder %s20, %s23
    %p29 = scmp.eq.s32.totalorder %s10, 0
    %p30 = por %p28, %p29
    %p31 = scmp.ne.s32.totalorder %s20, %s23
    %p32 = scmp.eq.s32.totalorder %s15, 1
    %p33 = por %p31, %p32
    %p34 = scmp.ne.s32.totalorder %s23, %s24
    %p35 = scmp.eq.s32.totalorder %s15, 0
    %p36 = por %p34, %p35
    %p37 = scmp.ne.s32.totalorder %s23, %s24
    %p38 = scmp.eq.s32.totalorder %s16, 1
    %p39 = por %p37, %p38
    %p41 = scmp.ne.s32.totalorder %s24, %s40
    %p42 = scmp.eq.s32.totalorder %s16, 0
    %p43 = por %p41, %p42
    %s45 = sadd.s32 %s44, 1
    %p48 = scmp.eq.s32.totalorder %s10, 1
    %p49 = scmp.ne.s32.totalorder %s44, %s46
    %p50 = scmp.eq.s32.totalorder %s10, 0
    %p51 = por %p49, %p50
    %p52 = scmp.ne.s32.totalorder %s44, %s46
    %p53 = scmp.eq.s32.totalorder %s15, 1
    %p54 = por %p52, %p53
    %p55 = scmp.ne.s32.totalorder %s46, %s47
    %p56 = scmp.eq.s32.totalorder %s15, 0
    %p57 = por %p55, %p56
    %p58 = scmp.ne.s32.totalorder %s46, %s47
    %p59 = scmp.eq.s32.totalorder %s16, 1
    %p60 = por %p58, %p59
    %p62 = scmp.ne.s32.totalorder %s47, %s61
    %p63 = scmp.eq.s32.totalorder %s16, 0
    %p64 = por %p62, %p63
    %s65 = ssub.s32 %s10, %s17
    %p66 = scmp.eq.s32.totalorder %s65, 0
    %s68 = sadd.s32 %s67, 1
    %s69 = scalar_select %p66, %s67, %s68
    %p72 = pneg %p66
    %p73 = scmp.eq.s32.totalorder %s10, 1
    %p74 = por %p72, %p73
    %p75 = scmp.ne.s32.totalorder %s67, %s70
    %p76 = scmp.eq.s32.totalorder %s10, 0
    %p77 = por %p75, %p76
    %p78 = scmp.ne.s32.totalorder %s67, %s70
    %p79 = scmp.eq.s32.totalorder %s15, 1
    %p80 = por %p78, %p79
    %p81 = scmp.ne.s32.totalorder %s70, %s71
    %p82 = scmp.eq.s32.totalorder %s15, 0
    %p83 = por %p81, %p82
    %p84 = scmp.ne.s32.totalorder %s70, %s71
    %p85 = scmp.eq.s32.totalorder %s16, 1
    %p86 = por %p84, %p85
    %p88 = scmp.ne.s32.totalorder %s71, %s87
    %p89 = scmp.eq.s32.totalorder %s16, 0
    %p90 = por %p88, %p89
    %s91 = ssub.s32 %s10, %s17
    %p92 = scmp.eq.s32.totalorder %s91, 0
    %s94 = sadd.s32 %s93, 1
    %s95 = scalar_select %p92, %s93, %s94
    %p98 = pneg %p92
    %p99 = scmp.eq.s32.totalorder %s10, 1
    %p100 = por %p98, %p99
    %p101 = scmp.ne.s32.totalorder %s93, %s96
    %p102 = scmp.eq.s32.totalorder %s10, 0
    %p103 = por %p101, %p102
    %p104 = scmp.ne.s32.totalorder %s93, %s96
    %p105 = scmp.eq.s32.totalorder %s15, 1
    %p106 = por %p104, %p105
    %p107 = scmp.ne.s32.totalorder %s96, %s97
    %p108 = scmp.eq.s32.totalorder %s15, 0
    %p109 = por %p107, %p108
    %p110 = scmp.ne.s32.totalorder %s96, %s97
    %p111 = scmp.eq.s32.totalorder %s16, 1
    %p112 = por %p110, %p111
    %p114 = scmp.ne.s32.totalorder %s97, %s113
    %p115 = scmp.eq.s32.totalorder %s16, 0
    %p116 = por %p114, %p115
    %p117 = scmp.le.s32.totalorder 1, %s10
    %p118 = scmp.lt.s32.totalorder %s10, 3
    %p119 = pnand %p117, %p118
    %p120 = pneg %p119
    // Predicated region
    $region9: #{_lambda_.7} parent=5 // pred_check
      _
    $region10: #{_lambda_.7} parent=5 // pred_check_branch
      %122 = sbr.rel (%p119) target = $region12
    $region11: #{_lambda_.7} parent=5 // pred_region
      %s123 = ssub.s32 %s10, 1
      // Predicated region
      $region13: #{_lambda_.7} parent=11 // pred_check
        %p124 = pneg %p57
      $region14: #{_lambda_.7} parent=11 // pred_check_branch
        %126 = sbr.rel (%p124) target = $region16
      $region15: #{_lambda_.7} parent=11 // pred_region
        _
      $region16: #{_lambda_.7} parent=11 // pred_fallthru
        _
    $region12: #{_lambda_.7} parent=5 // pred_fallthru
      _
    %p127 = scmp.lt.s32.totalorder %s10, 2
    // Predicated region
    $region17: #{_lambda_.7} parent=5 // pred_check
      %p128 = pneg %p127
    $region18: #{_lambda_.7} parent=5 // pred_check_branch
      %130 = sbr.rel (%p128) target = $region20
    $region19: #{_lambda_.7} parent=5 // pred_region
      // Predicated region
      $region21: #{_lambda_.7} parent=19 // pred_check
        %p131 = pneg %p30
      $region22: #{_lambda_.7} parent=19 // pred_check_branch
        %133 = sbr.rel (%p131) target = $region24
      $region23: #{_lambda_.7} parent=19 // pred_region
        %s134 = smul.u32 2, %s10
        %p135 = scmp.lt.s32.totalorder %s134, 3
        %s136 = scalar_select %p135, %s134, 3
        %s137 = smul.addr %s136, 2
        %s138 = smul.addr %s137, 4
        %s139 = scalar_lea.vmem %s0, %s138
        %s140 = smul.u32 2, %s10
      $region24: #{_lambda_.7} parent=19 // pred_fallthru
        _
    $region20: #{_lambda_.7} parent=5 // pred_fallthru
      _
    %p141 = scmp.le.s32.totalorder 1, %s10
    %p142 = scmp.lt.s32.totalorder %s10, 3
    %p143 = pnand %p141, %p142
    %p144 = pneg %p143
    // Predicated region
    $region25: #{_lambda_.7} parent=5 // pred_check
      _
    $region26: #{_lambda_.7} parent=5 // pred_check_branch
      %146 = sbr.rel (%p143) target = $region28
    $region27: #{_lambda_.7} parent=5 // pred_region
      %s147 = ssub.s32 %s10, 1
      %s148 = smul.u32 2, %s15
      %p149 = scmp.lt.s32.totalorder %s148, 3
      %s150 = scalar_select %p149, %s148, 3
      %s151 = smul.addr %s150, 2
      %s152 = smul.addr %s151, 4
      %s153 = scalar_lea.vmem %s0, %s152
      %p154 = pneg %p36
      %p155 = pneg %p33
      %p156 = pneg %p57
      %p157 = pneg %p54
      %p158 = pneg %p83
      %p159 = pneg %p80
      %s160 = smul.u32 2, %s15
      %p161 = scmp.lt.s32.totalorder %s160, 3
      %s162 = scalar_select %p161, %s160, 3
      %s163 = smul.addr %s162, 4
      %s164 = scalar_lea.vmem %s2, %s163
      %p165 = pneg %p109
      %p166 = pneg %p106
      %p167 = scmp.lt.s32.totalorder %s15, 1
      %s168 = scalar_select %p167, %s15, 1
      %s169 = smul.addr %s168, 2
      %s170 = scalar_lea.vmem %s3, %s169
      %s171 = smul.u32 2, %s15
      %p172 = scmp.lt.s32.totalorder %s171, 3
      %s173 = scalar_select %p172, %s171, 3
      %s174 = smul.addr %s173, 2
      %s175 = smul.addr %s174, 4
      %s176 = scalar_lea.vmem %s0, %s175
      %s177 = smul.u32 2, %s15
      %s178 = smul.u32 2, %s15
      %p179 = scmp.lt.s32.totalorder %s178, 3
      %s180 = scalar_select %p179, %s178, 3
      %s181 = smul.addr %s180, 4
      %s182 = scalar_lea.vmem %s2, %s181
      %s183 = smul.u32 2, %s15
      %p184 = scmp.lt.s32.totalorder %s15, 1
      %s185 = scalar_select %p184, %s15, 1
      %s186 = smul.addr %s185, 2
      %s187 = scalar_lea.vmem %s3, %s186
      %v189 = vld [vmem:[%s176] sm:$0xff]
      %v190 = vld [vmem:[%s176 + $0x8] sm:$0xff]
      %v191 = vld [vmem:[%s1] sm:$0xf]
      %v192 = vld [vmem:[%s1 + $0x4] sm:$0xf]
      %v193 = vld [vmem:[%s1 + $0x8] sm:$0xf]
      %v194 = vld [vmem:[%s1 + $0xc] sm:$0xf]
      %v195 = vld [vmem:[%s1 + $0x10] sm:$0xf]
      %v196 = vld [vmem:[%s1 + $0x14] sm:$0xf]
      %v197 = vld [vmem:[%s1 + $0x18] sm:$0xf]
      %v198 = vld [vmem:[%s1 + $0x1c] sm:$0xf]
      %v199 = vld [vmem:[%s1 + $0x20] sm:$0xf]
      %v200 = vld [vmem:[%s1 + $0x24] sm:$0xf]
      %v201 = vld [vmem:[%s1 + $0x28] sm:$0xf]
      %v202 = vld [vmem:[%s1 + $0x2c] sm:$0xf]
      %v203 = vld [vmem:[%s1 + $0x30] sm:$0xf]
      %v204 = vld [vmem:[%s1 + $0x34] sm:$0xf]
      %v205 = vld [vmem:[%s1 + $0x38] sm:$0xf]
      %v206 = vld [vmem:[%s1 + $0x3c] sm:$0xf]
      %v207 = vld [vmem:[%s1 + $0x40] sm:$0xf]
      %v208 = vld [vmem:[%s1 + $0x44] sm:$0xf]
      %v209 = vld [vmem:[%s1 + $0x48] sm:$0xf]
      %v210 = vld [vmem:[%s1 + $0x4c] sm:$0xf]
      %v211 = vld [vmem:[%s1 + $0x50] sm:$0xf]
      %v212 = vld [vmem:[%s1 + $0x54] sm:$0xf]
      %v213 = vld [vmem:[%s1 + $0x58] sm:$0xf]
      %v214 = vld [vmem:[%s1 + $0x5c] sm:$0xf]
      %v215 = vld [vmem:[%s1 + $0x60] sm:$0xf]
      %v216 = vld [vmem:[%s1 + $0x64] sm:$0xf]
      %v217 = vld [vmem:[%s1 + $0x68] sm:$0xf]
      %v218 = vld [vmem:[%s1 + $0x6c] sm:$0xf]
      %v219 = vld [vmem:[%s1 + $0x70] sm:$0xf]
      %v220 = vld [vmem:[%s1 + $0x74] sm:$0xf]
      %v221 = vld [vmem:[%s1 + $0x78] sm:$0xf]
      %v222 = vld [vmem:[%s1 + $0x7c] sm:$0xf]
      %v225 = vunpack.c.l.b16 %v189
      %v226 = vunpack.c.h.b16 %v189
      %v227 = vunpack.c.l.b16 %v190
      %v228 = vunpack.c.h.b16 %v190
      %v229 = vpack.c.b16 %v227, %v225
      %v230 = vpack.c.b16 %v228, %v226
      %v265 = vunpack.c.l.b16 %v191
      %v266 = vunpack.c.l.b16 %v192
      %v267 = vunpack.c.l.b16 %v193
      %v268 = vunpack.c.l.b16 %v194
      %v269 = vunpack.c.l.b16 %v195
      %v270 = vunpack.c.l.b16 %v196
      %v271 = vunpack.c.l.b16 %v197
      %v272 = vunpack.c.l.b16 %v198
      %v273 = vunpack.c.l.b16 %v199
      %v274 = vunpack.c.l.b16 %v200
      %v275 = vunpack.c.l.b16 %v201
      %v276 = vunpack.c.l.b16 %v202
      %v277 = vunpack.c.l.b16 %v203
      %v278 = vunpack.c.l.b16 %v204
      %v279 = vunpack.c.l.b16 %v205
      %v280 = vunpack.c.l.b16 %v206
      %v281 = vunpack.c.l.b16 %v207
      %v282 = vunpack.c.l.b16 %v208
      %v283 = vunpack.c.l.b16 %v209
      %v284 = vunpack.c.l.b16 %v210
      %v285 = vunpack.c.l.b16 %v211
      %v286 = vunpack.c.l.b16 %v212
      %v287 = vunpack.c.l.b16 %v213
      %v288 = vunpack.c.l.b16 %v214
      %v289 = vunpack.c.l.b16 %v215
      %v290 = vunpack.c.l.b16 %v216
      %v291 = vunpack.c.l.b16 %v217
      %v292 = vunpack.c.l.b16 %v218
      %v293 = vunpack.c.l.b16 %v219
      %v294 = vunpack.c.l.b16 %v220
      %v295 = vunpack.c.l.b16 %v221
      %v296 = vunpack.c.l.b16 %v222
      %v297 = vpack.c.b16 %v266, %v265
      %v298 = vpack.c.b16 %v268, %v267
      %v299 = vpack.c.b16 %v270, %v269
      %v300 = vpack.c.b16 %v272, %v271
      %v301 = vpack.c.b16 %v274, %v273
      %v302 = vpack.c.b16 %v276, %v275
      %v303 = vpack.c.b16 %v278, %v277
      %v304 = vpack.c.b16 %v280, %v279
      %v305 = vpack.c.b16 %v282, %v281
      %v306 = vpack.c.b16 %v284, %v283
      %v307 = vpack.c.b16 %v286, %v285
      %v308 = vpack.c.b16 %v288, %v287
      %v309 = vpack.c.b16 %v290, %v289
      %v310 = vpack.c.b16 %v292, %v291
      %v311 = vpack.c.b16 %v294, %v293
      %v312 = vpack.c.b16 %v296, %v295
      %329 = vmatprep.subr.bf16.mxu0 0
      %330 = vmatpush1.bf16.msra.mxu0 %v297
      %331 = vmatprep.subr.bf16.mxu0 0
      %332 = vmatpush1.bf16.msra.mxu0 %v298
      %333 = vmatprep.subr.bf16.mxu0 0
      %334 = vmatpush1.bf16.msra.mxu0 %v299
      %335 = vmatprep.subr.bf16.mxu0 0
      %336 = vmatpush1.bf16.msra.mxu0 %v300
      %337 = vmatprep.subr.bf16.mxu0 0
      %338 = vmatpush1.bf16.msra.mxu0 %v301
      %339 = vmatprep.subr.bf16.mxu0 0
      %340 = vmatpush1.bf16.msra.mxu0 %v302
      %341 = vmatprep.subr.bf16.mxu0 0
      %342 = vmatpush1.bf16.msra.mxu0 %v303
      %343 = vmatprep.subr.bf16.mxu0 0
      %344 = vmatpush1.bf16.msra.mxu0 %v304
      %345 = vmatprep.subr.bf16.mxu0 0
      %346 = vmatpush1.bf16.msra.mxu0 %v305
      %347 = vmatprep.subr.bf16.mxu0 0
      %348 = vmatpush1.bf16.msra.mxu0 %v306
      %349 = vmatprep.subr.bf16.mxu0 0
      %350 = vmatpush1.bf16.msra.mxu0 %v307
      %351 = vmatprep.subr.bf16.mxu0 0
      %352 = vmatpush1.bf16.msra.mxu0 %v308
      %353 = vmatprep.subr.bf16.mxu0 0
      %354 = vmatpush1.bf16.msra.mxu0 %v309
      %355 = vmatprep.subr.bf16.mxu0 0
      %356 = vmatpush1.bf16.msra.mxu0 %v310
      %357 = vmatprep.subr.bf16.mxu0 0
      %358 = vmatpush1.bf16.msra.mxu0 %v311
      %359 = vmatprep.subr.bf16.mxu0 0
      %360 = vmatpush1.bf16.msra.mxu0 %v312
      %361 = vmatprep.mubr.bf16.mxu0 %v230
      %362 = vmatmul.mubr.bf16.gmra.mrb[0].mxu0 %v229
      %v363 = vpop.f32.mrb[0].mxu0
      %v364 = vadd.f32 0.0, %v363
      %v365 = vpop.f32.mrb[0].mxu0
      %v366 = vpop.f32.mrb[0].mxu0
      %v367 = vadd.f32 0.0, %v366
      %v368 = vpop.f32.mrb[0].mxu0
      %369 = vdwg.mxu0
      %v370 = vpack.c.bf16 %v367, %v364
      %v372 = vunpack.c.l.b16 %v370
      %v373 = vunpack.c.h.b16 %v370
      %v374 = vpack.c.b16 %v372, %v372
      %v375 = vpack.c.b16 %v373, %v373
      %378 = vst [vmem:[%s182] sm:$0xf] %v374
      %379 = vst [vmem:[%s182 + $0x4] sm:$0xf] %v375
      %v380 = vadd.f32 %v364, %v367
      %v381 = vrot.slane %v380, 4
      %v382 = vadd.f32 %v380, %v381
      %v383 = vrot.slane %v382, 2
      %v384 = vadd.f32 %v382, %v383
      %v385 = vrot.slane %v384, 1
      %v386 = vadd.f32 %v384, %v385
      %v387 = vmul.f32 %v364, %v364
      %v388 = vmul.f32 %v367, %v367
      %v389 = vadd.f32 %v387, %v388
      %v390 = vrot.slane %v389, 4
      %v391 = vadd.f32 %v389, %v390
      %v392 = vrot.slane %v391, 2
      %v393 = vadd.f32 %v391, %v392
      %v394 = vrot.slane %v393, 1
      %v395 = vadd.f32 %v393, %v394
      %vm396 = vcmask 1040384
      %v397 = vsel %vm396, %v386, %v395
      %398 = vst [vmem:[%s187] sm:$0x3] %v397
      %s399 = smul.u32 2, %s15
      %p400 = scmp.lt.s32.totalorder %s399, 3
      %s401 = scalar_select %p400, %s399, 3
      %s402 = smul.addr %s401, 4
      %s403 = scalar_lea.vmem %s2, %s402
      %p404 = scmp.lt.s32.totalorder %s15, 1
      %s405 = scalar_select %p404, %s15, 1
      %s406 = smul.addr %s405, 2
      %s407 = scalar_lea.vmem %s3, %s406
      // Predicated region
      $region29: #{_lambda_.7} parent=27 // pred_check
        %p408 = pneg %p80
      $region30: #{_lambda_.7} parent=27 // pred_check_branch
        %410 = sbr.rel (%p408) target = $region32
      $region31: #{_lambda_.7} parent=27 // pred_region
        %s411 = smul.u32 2, %s15
      $region32: #{_lambda_.7} parent=27 // pred_fallthru
        _
      // Predicated region
      $region33: #{_lambda_.7} parent=27 // pred_check
        %p412 = pneg %p106
      $region34: #{_lambda_.7} parent=27 // pred_check_branch
        %414 = sbr.rel (%p412) target = $region36
      $region35: #{_lambda_.7} parent=27 // pred_region
        _
      $region36: #{_lambda_.7} parent=27 // pred_fallthru
        _
    $region28: #{_lambda_.7} parent=5 // pred_fallthru
      _
    %p415 = scmp.le.s32.totalorder 2, %s10
    // Predicated region
    $region37: #{_lambda_.7} parent=5 // pred_check
      %p416 = pneg %p415
    $region38: #{_lambda_.7} parent=5 // pred_check_branch
      %418 = sbr.rel (%p416) target = $region40
    $region39: #{_lambda_.7} parent=5 // pred_region
      %s419 = ssub.s32 %s10, 2
      // Predicated region
      $region41: #{_lambda_.7} parent=39 // pred_check
        %p420 = pneg %p86
      $region42: #{_lambda_.7} parent=39 // pred_check_branch
        %422 = sbr.rel (%p420) target = $region44
      $region43: #{_lambda_.7} parent=39 // pred_region
        %s423 = smul.u32 2, %s16
        %p424 = scmp.lt.s32.totalorder %s423, 3
        %s425 = scalar_select %p424, %s423, 3
        %s426 = smul.addr %s425, 4
        %s427 = scalar_lea.vmem %s2, %s426
      $region44: #{_lambda_.7} parent=39 // pred_fallthru
        _
      // Predicated region
      $region45: #{_lambda_.7} parent=39 // pred_check
        %p428 = pneg %p112
      $region46: #{_lambda_.7} parent=39 // pred_check_branch
        %430 = sbr.rel (%p428) target = $region48
      $region47: #{_lambda_.7} parent=39 // pred_region
        %p431 = scmp.lt.s32.totalorder %s16, 1
        %s432 = scalar_select %p431, %s16, 1
        %s433 = smul.addr %s432, 2
        %s434 = scalar_lea.vmem %s3, %s433
      $region48: #{_lambda_.7} parent=39 // pred_fallthru
        _
    $region40: #{_lambda_.7} parent=5 // pred_fallthru
      _
  $region6: #{_lambda_.7} parent=0 // loop_footer
    %s14 = sadd.s32 1, %s10
  $region7: #{_lambda_.7} parent=0 // loop_footer_branch
    %9 = sbr.rel target = $region3
  $region8: #{_lambda_.7} parent=0 // loop_exit
    _

// kernel: _lambda_.8
$region0: #{_lambda_.8}
  #allocation0 [shape = 'u32[]', space=smem, size = 0x4, offset = 0x4, fixed_abs, tag = 'smem constant byte address 0x4 - core index']
  #allocation1 [shape = 'u32[144,128]{1,0:T(1,128)}', space=vmem, size = 0x12000, scoped, tag = 'internal scratch']
  %s0 = inlined_call_operand.vmem [shape: bf16[16,512], index: 0, kind: input, shape index: {}]
  %s1 = inlined_call_operand.vmem [shape: bf16[512,128], index: 1, kind: input, shape index: {}]
  %s2 = inlined_call_operand.vmem [shape: bf16[16,128], index: 2, kind: output, shape index: {0}]
  %s3 = inlined_call_operand.vmem [shape: f32[2,2,128], index: 3, kind: output, shape index: {1}]
  %4 = xla_tuple %s2, %s3
  %s5 = sld [smem:[#allocation0]]
  $region49: #{_lambda_.8} parent=0
    _
  %s7 = ssub.s32 1, %s5
  %s8 = scalar_select 0, %s7, %s5
  loop: start=0, step=1, limit=4
  $region2: #{_lambda_.8} parent=0 // loop_pre_header
    _
  $region3: #{_lambda_.8} parent=0 // loop_header
    %s10 = sphi 0, %s14
    %p11 = scmp.ge.s32.totalorder %s10, 4
    %s20 = sphi 0, %s22
    %s23 = sphi 0, %s20
    %s24 = sphi 0, %s23
    %s40 = sphi 0, %s24
    %s44 = sphi 0, %s44
    %s46 = sphi 0, %s44
    %s47 = sphi 0, %s46
    %s61 = sphi 0, %s47
    %s67 = sphi 0, %s69
    %s70 = sphi 0, %s67
    %s71 = sphi 0, %s70
    %s87 = sphi 0, %s71
    %s93 = sphi 0, %s95
    %s96 = sphi 0, %s93
    %s97 = sphi 0, %s96
    %s113 = sphi 0, %s97
  $region4: #{_lambda_.8} parent=0 // loop_header_branch
    %13 = sbr.rel (%p11) target = $region8
  $region5: #{_lambda_.8} parent=0 // loop_body
    %s15 = ssub.s32 %s10, 1
    %s16 = ssub.s32 %s10, 2
    %s17 = sadd.s32 %s10, 1
    %s18 = ssub.s32 %s10, %s17
    %p19 = scmp.eq.s32.totalorder %s18, 0
    %s21 = sadd.s32 %s20, 1
    %s22 = scalar_select %p19, %s20, %s21
    %p25 = pneg %p19
    %p26 = scmp.eq.s32.totalorder %s10, 1
    %p27 = por %p25, %p26
    %p28 = scmp.ne.s32.totalorder %s20, %s23
    %p29 = scmp.eq.s32.totalorder %s10, 0
    %p30 = por %p28, %p29
    %p31 = scmp.ne.s32.totalorder %s20, %s23
    %p32 = scmp.eq.s32.totalorder %s15, 1
    %p33 = por %p31, %p32
    %p34 = scmp.ne.s32.totalorder %s23, %s24
    %p35 = scmp.eq.s32.totalorder %s15, 0
    %p36 = por %p34, %p35
    %p37 = scmp.ne.s32.totalorder %s23, %s24
    %p38 = scmp.eq.s32.totalorder %s16, 1
    %p39 = por %p37, %p38
    %p41 = scmp.ne.s32.totalorder %s24, %s40
    %p42 = scmp.eq.s32.totalorder %s16, 0
    %p43 = por %p41, %p42
    %s45 = sadd.s32 %s44, 1
    %p48 = scmp.eq.s32.totalorder %s10, 1
    %p49 = scmp.ne.s32.totalorder %s44, %s46
    %p50 = scmp.eq.s32.totalorder %s10, 0
    %p51 = por %p49, %p50
    %p52 = scmp.ne.s32.totalorder %s44, %s46
    %p53 = scmp.eq.s32.totalorder %s15, 1
    %p54 = por %p52, %p53
    %p55 = scmp.ne.s32.totalorder %s46, %s47
    %p56 = scmp.eq.s32.totalorder %s15, 0
    %p57 = por %p55, %p56
    %p58 = scmp.ne.s32.totalorder %s46, %s47
    %p59 = scmp.eq.s32.totalorder %s16, 1
    %p60 = por %p58, %p59
    %p62 = scmp.ne.s32.totalorder %s47, %s61
    %p63 = scmp.eq.s32.totalorder %s16, 0
    %p64 = por %p62, %p63
    %s65 = ssub.s32 %s10, %s17
    %p66 = scmp.eq.s32.totalorder %s65, 0
    %s68 = sadd.s32 %s67, 1
    %s69 = scalar_select %p66, %s67, %s68
    %p72 = pneg %p66
    %p73 = scmp.eq.s32.totalorder %s10, 1
    %p74 = por %p72, %p73
    %p75 = scmp.ne.s32.totalorder %s67, %s70
    %p76 = scmp.eq.s32.totalorder %s10, 0
    %p77 = por %p75, %p76
    %p78 = scmp.ne.s32.totalorder %s67, %s70
    %p79 = scmp.eq.s32.totalorder %s15, 1
    %p80 = por %p78, %p79
    %p81 = scmp.ne.s32.totalorder %s70, %s71
    %p82 = scmp.eq.s32.totalorder %s15, 0
    %p83 = por %p81, %p82
    %p84 = scmp.ne.s32.totalorder %s70, %s71
    %p85 = scmp.eq.s32.totalorder %s16, 1
    %p86 = por %p84, %p85
    %p88 = scmp.ne.s32.totalorder %s71, %s87
    %p89 = scmp.eq.s32.totalorder %s16, 0
    %p90 = por %p88, %p89
    %s91 = ssub.s32 %s10, %s17
    %p92 = scmp.eq.s32.totalorder %s91, 0
    %s94 = sadd.s32 %s93, 1
    %s95 = scalar_select %p92, %s93, %s94
    %p98 = pneg %p92
    %p99 = scmp.eq.s32.totalorder %s10, 1
    %p100 = por %p98, %p99
    %p101 = scmp.ne.s32.totalorder %s93, %s96
    %p102 = scmp.eq.s32.totalorder %s10, 0
    %p103 = por %p101, %p102
    %p104 = scmp.ne.s32.totalorder %s93, %s96
    %p105 = scmp.eq.s32.totalorder %s15, 1
    %p106 = por %p104, %p105
    %p107 = scmp.ne.s32.totalorder %s96, %s97
    %p108 = scmp.eq.s32.totalorder %s15, 0
    %p109 = por %p107, %p108
    %p110 = scmp.ne.s32.totalorder %s96, %s97
    %p111 = scmp.eq.s32.totalorder %s16, 1
    %p112 = por %p110, %p111
    %p114 = scmp.ne.s32.totalorder %s97, %s113
    %p115 = scmp.eq.s32.totalorder %s16, 0
    %p116 = por %p114, %p115
    %p117 = scmp.le.s32.totalorder 1, %s10
    %p118 = scmp.lt.s32.totalorder %s10, 3
    %p119 = pnand %p117, %p118
    %p120 = pneg %p119
    // Predicated region
    $region9: #{_lambda_.8} parent=5 // pred_check
      _
    $region10: #{_lambda_.8} parent=5 // pred_check_branch
      %122 = sbr.rel (%p119) target = $region12
    $region11: #{_lambda_.8} parent=5 // pred_region
      %s123 = ssub.s32 %s10, 1
      // Predicated region
      $region13: #{_lambda_.8} parent=11 // pred_check
        %p124 = pneg %p57
      $region14: #{_lambda_.8} parent=11 // pred_check_branch
        %126 = sbr.rel (%p124) target = $region16
      $region15: #{_lambda_.8} parent=11 // pred_region
        _
      $region16: #{_lambda_.8} parent=11 // pred_fallthru
        _
    $region12: #{_lambda_.8} parent=5 // pred_fallthru
      _
    %p127 = scmp.lt.s32.totalorder %s10, 2
    // Predicated region
    $region17: #{_lambda_.8} parent=5 // pred_check
      %p128 = pneg %p127
    $region18: #{_lambda_.8} parent=5 // pred_check_branch
      %130 = sbr.rel (%p128) target = $region20
    $region19: #{_lambda_.8} parent=5 // pred_region
      // Predicated region
      $region21: #{_lambda_.8} parent=19 // pred_check
        %p131 = pneg %p30
      $region22: #{_lambda_.8} parent=19 // pred_check_branch
        %133 = sbr.rel (%p131) target = $region24
      $region23: #{_lambda_.8} parent=19 // pred_region
        %p134 = scmp.lt.s32.totalorder %s10, 1
        %s135 = scalar_select %p134, %s10, 1
        %s136 = smul.addr %s135, 4
        %s137 = smul.addr %s136, 4
        %s138 = scalar_lea.vmem %s0, %s137
      $region24: #{_lambda_.8} parent=19 // pred_fallthru
        _
    $region20: #{_lambda_.8} parent=5 // pred_fallthru
      _
    %p139 = scmp.le.s32.totalorder 1, %s10
    %p140 = scmp.lt.s32.totalorder %s10, 3
    %p141 = pnand %p139, %p140
    %p142 = pneg %p141
    // Predicated region
    $region25: #{_lambda_.8} parent=5 // pred_check
      _
    $region26: #{_lambda_.8} parent=5 // pred_check_branch
      %144 = sbr.rel (%p141) target = $region28
    $region27: #{_lambda_.8} parent=5 // pred_region
      %s145 = ssub.s32 %s10, 1
      %p146 = scmp.lt.s32.totalorder %s15, 1
      %s147 = scalar_select %p146, %s15, 1
      %s148 = smul.addr %s147, 4
      %s149 = smul.addr %s148, 4
      %s150 = scalar_lea.vmem %s0, %s149
      %p151 = pneg %p36
      %p152 = pneg %p33
      %p153 = pneg %p57
      %p154 = pneg %p54
      %p155 = pneg %p83
      %p156 = pneg %p80
      %p157 = scmp.lt.s32.totalorder %s15, 1
      %s158 = scalar_select %p157, %s15, 1
      %s159 = smul.addr %s158, 4
      %s160 = scalar_lea.vmem %s2, %s159
      %p161 = pneg %p109
      %p162 = pneg %p106
      %p163 = scmp.lt.s32.totalorder %s15, 1
      %s164 = scalar_select %p163, %s15, 1
      %s165 = smul.addr %s164, 2
      %s166 = scalar_lea.vmem %s3, %s165
      %p167 = scmp.lt.s32.totalorder %s15, 1
      %s168 = scalar_select %p167, %s15, 1
      %s169 = smul.addr %s168, 4
      %s170 = smul.addr %s169, 4
      %s171 = scalar_lea.vmem %s0, %s170
      %p172 = scmp.lt.s32.totalorder %s15, 1
      %s173 = scalar_select %p172, %s15, 1
      %s174 = smul.addr %s173, 4
      %s175 = scalar_lea.vmem %s2, %s174
      %p176 = scmp.lt.s32.totalorder %s15, 1
      %s177 = scalar_select %p176, %s15, 1
      %s178 = smul.addr %s177, 2
      %s179 = scalar_lea.vmem %s3, %s178
      %v181 = vld [vmem:[%s171] sm:$0xff]
      %v182 = vld [vmem:[%s171 + $0x8] sm:$0xff]
      %v183 = vld [vmem:[%s1] sm:$0xf]
      %v184 = vld [vmem:[%s1 + $0x4] sm:$0xf]
      %v185 = vld [vmem:[%s1 + $0x8] sm:$0xf]
      %v186 = vld [vmem:[%s1 + $0xc] sm:$0xf]
      %v187 = vld [vmem:[%s1 + $0x10] sm:$0xf]
      %v188 = vld [vmem:[%s1 + $0x14] sm:$0xf]
      %v189 = vld [vmem:[%s1 + $0x18] sm:$0xf]
      %v190 = vld [vmem:[%s1 + $0x1c] sm:$0xf]
      %v191 = vld [vmem:[%s1 + $0x20] sm:$0xf]
      %v192 = vld [vmem:[%s1 + $0x24] sm:$0xf]
      %v193 = vld [vmem:[%s1 + $0x28] sm:$0xf]
      %v194 = vld [vmem:[%s1 + $0x2c] sm:$0xf]
      %v195 = vld [vmem:[%s1 + $0x30] sm:$0xf]
      %v196 = vld [vmem:[%s1 + $0x34] sm:$0xf]
      %v197 = vld [vmem:[%s1 + $0x38] sm:$0xf]
      %v198 = vld [vmem:[%s1 + $0x3c] sm:$0xf]
      %v199 = vld [vmem:[%s1 + $0x40] sm:$0xf]
      %v200 = vld [vmem:[%s1 + $0x44] sm:$0xf]
      %v201 = vld [vmem:[%s1 + $0x48] sm:$0xf]
      %v202 = vld [vmem:[%s1 + $0x4c] sm:$0xf]
      %v203 = vld [vmem:[%s1 + $0x50] sm:$0xf]
      %v204 = vld [vmem:[%s1 + $0x54] sm:$0xf]
      %v205 = vld [vmem:[%s1 + $0x58] sm:$0xf]
      %v206 = vld [vmem:[%s1 + $0x5c] sm:$0xf]
      %v207 = vld [vmem:[%s1 + $0x60] sm:$0xf]
      %v208 = vld [vmem:[%s1 + $0x64] sm:$0xf]
      %v209 = vld [vmem:[%s1 + $0x68] sm:$0xf]
      %v210 = vld [vmem:[%s1 + $0x6c] sm:$0xf]
      %v211 = vld [vmem:[%s1 + $0x70] sm:$0xf]
      %v212 = vld [vmem:[%s1 + $0x74] sm:$0xf]
      %v213 = vld [vmem:[%s1 + $0x78] sm:$0xf]
      %v214 = vld [vmem:[%s1 + $0x7c] sm:$0xf]
      %v215 = vld [vmem:[%s1 + $0x80] sm:$0xf]
      %v216 = vld [vmem:[%s1 + $0x84] sm:$0xf]
      %v217 = vld [vmem:[%s1 + $0x88] sm:$0xf]
      %v218 = vld [vmem:[%s1 + $0x8c] sm:$0xf]
      %v219 = vld [vmem:[%s1 + $0x90] sm:$0xf]
      %v220 = vld [vmem:[%s1 + $0x94] sm:$0xf]
      %v221 = vld [vmem:[%s1 + $0x98] sm:$0xf]
      %v222 = vld [vmem:[%s1 + $0x9c] sm:$0xf]
      %v223 = vld [vmem:[%s1 + $0xa0] sm:$0xf]
      %v224 = vld [vmem:[%s1 + $0xa4] sm:$0xf]
      %v225 = vld [vmem:[%s1 + $0xa8] sm:$0xf]
      %v226 = vld [vmem:[%s1 + $0xac] sm:$0xf]
      %v227 = vld [vmem:[%s1 + $0xb0] sm:$0xf]
      %v228 = vld [vmem:[%s1 + $0xb4] sm:$0xf]
      %v229 = vld [vmem:[%s1 + $0xb8] sm:$0xf]
      %v230 = vld [vmem:[%s1 + $0xbc] sm:$0xf]
      %v231 = vld [vmem:[%s1 + $0xc0] sm:$0xf]
      %v232 = vld [vmem:[%s1 + $0xc4] sm:$0xf]
      %v233 = vld [vmem:[%s1 + $0xc8] sm:$0xf]
      %v234 = vld [vmem:[%s1 + $0xcc] sm:$0xf]
      %v235 = vld [vmem:[%s1 + $0xd0] sm:$0xf]
      %v236 = vld [vmem:[%s1 + $0xd4] sm:$0xf]
      %v237 = vld [vmem:[%s1 + $0xd8] sm:$0xf]
      %v238 = vld [vmem:[%s1 + $0xdc] sm:$0xf]
      %v239 = vld [vmem:[%s1 + $0xe0] sm:$0xf]
      %v240 = vld [vmem:[%s1 + $0xe4] sm:$0xf]
      %v241 = vld [vmem:[%s1 + $0xe8] sm:$0xf]
      %v242 = vld [vmem:[%s1 + $0xec] sm:$0xf]
      %v243 = vld [vmem:[%s1 + $0xf0] sm:$0xf]
      %v244 = vld [vmem:[%s1 + $0xf4] sm:$0xf]
      %v245 = vld [vmem:[%s1 + $0xf8] sm:$0xf]
      %v246 = vld [vmem:[%s1 + $0xfc] sm:$0xf]
      %v249 = vunpack.c.l.b16 %v181
      %v250 = vunpack.c.h.b16 %v181
      %v251 = vunpack.c.l.b16 %v182
      %v252 = vunpack.c.h.b16 %v182
      %v253 = vpack.c.b16 %v249, %v249
      %v254 = vpack.c.b16 %v250, %v250
      %v255 = vpack.c.b16 %v251, %v251
      %v256 = vpack.c.b16 %v252, %v252
      %v325 = vunpack.c.l.b16 %v183
      %v326 = vunpack.c.l.b16 %v184
      %v327 = vunpack.c.l.b16 %v185
      %v328 = vunpack.c.l.b16 %v186
      %v329 = vunpack.c.l.b16 %v187
      %v330 = vunpack.c.l.b16 %v188
      %v331 = vunpack.c.l.b16 %v189
      %v332 = vunpack.c.l.b16 %v190
      %v333 = vunpack.c.l.b16 %v191
      %v334 = vunpack.c.l.b16 %v192
      %v335 = vunpack.c.l.b16 %v193
      %v336 = vunpack.c.l.b16 %v194
      %v337 = vunpack.c.l.b16 %v195
      %v338 = vunpack.c.l.b16 %v196
      %v339 = vunpack.c.l.b16 %v197
      %v340 = vunpack.c.l.b16 %v198
      %v341 = vunpack.c.l.b16 %v199
      %v342 = vunpack.c.l.b16 %v200
      %v343 = vunpack.c.l.b16 %v201
      %v344 = vunpack.c.l.b16 %v202
      %v345 = vunpack.c.l.b16 %v203
      %v346 = vunpack.c.l.b16 %v204
      %v347 = vunpack.c.l.b16 %v205
      %v348 = vunpack.c.l.b16 %v206
      %v349 = vunpack.c.l.b16 %v207
      %v350 = vunpack.c.l.b16 %v208
      %v351 = vunpack.c.l.b16 %v209
      %v352 = vunpack.c.l.b16 %v210
      %v353 = vunpack.c.l.b16 %v211
      %v354 = vunpack.c.l.b16 %v212
      %v355 = vunpack.c.l.b16 %v213
      %v356 = vunpack.c.l.b16 %v214
      %v357 = vunpack.c.l.b16 %v215
      %v358 = vunpack.c.l.b16 %v216
      %v359 = vunpack.c.l.b16 %v217
      %v360 = vunpack.c.l.b16 %v218
      %v361 = vunpack.c.l.b16 %v219
      %v362 = vunpack.c.l.b16 %v220
      %v363 = vunpack.c.l.b16 %v221
      %v364 = vunpack.c.l.b16 %v222
      %v365 = vunpack.c.l.b16 %v223
      %v366 = vunpack.c.l.b16 %v224
      %v367 = vunpack.c.l.b16 %v225
      %v368 = vunpack.c.l.b16 %v226
      %v369 = vunpack.c.l.b16 %v227
      %v370 = vunpack.c.l.b16 %v228
      %v371 = vunpack.c.l.b16 %v229
      %v372 = vunpack.c.l.b16 %v230
      %v373 = vunpack.c.l.b16 %v231
      %v374 = vunpack.c.l.b16 %v232
      %v375 = vunpack.c.l.b16 %v233
      %v376 = vunpack.c.l.b16 %v234
      %v377 = vunpack.c.l.b16 %v235
      %v378 = vunpack.c.l.b16 %v236
      %v379 = vunpack.c.l.b16 %v237
      %v380 = vunpack.c.l.b16 %v238
      %v381 = vunpack.c.l.b16 %v239
      %v382 = vunpack.c.l.b16 %v240
      %v383 = vunpack.c.l.b16 %v241
      %v384 = vunpack.c.l.b16 %v242
      %v385 = vunpack.c.l.b16 %v243
      %v386 = vunpack.c.l.b16 %v244
      %v387 = vunpack.c.l.b16 %v245
      %v388 = vunpack.c.l.b16 %v246
      %v389 = vpack.c.b16 %v326, %v325
      %v390 = vpack.c.b16 %v328, %v327
      %v391 = vpack.c.b16 %v330, %v329
      %v392 = vpack.c.b16 %v332, %v331
      %v393 = vpack.c.b16 %v334, %v333
      %v394 = vpack.c.b16 %v336, %v335
      %v395 = vpack.c.b16 %v338, %v337
      %v396 = vpack.c.b16 %v340, %v339
      %v397 = vpack.c.b16 %v342, %v341
      %v398 = vpack.c.b16 %v344, %v343
      %v399 = vpack.c.b16 %v346, %v345
      %v400 = vpack.c.b16 %v348, %v347
      %v401 = vpack.c.b16 %v350, %v349
      %v402 = vpack.c.b16 %v352, %v351
      %v403 = vpack.c.b16 %v354, %v353
      %v404 = vpack.c.b16 %v356, %v355
      %v405 = vpack.c.b16 %v358, %v357
      %v406 = vpack.c.b16 %v360, %v359
      %v407 = vpack.c.b16 %v362, %v361
      %v408 = vpack.c.b16 %v364, %v363
      %v409 = vpack.c.b16 %v366, %v365
      %v410 = vpack.c.b16 %v368, %v367
      %v411 = vpack.c.b16 %v370, %v369
      %v412 = vpack.c.b16 %v372, %v371
      %v413 = vpack.c.b16 %v374, %v373
      %v414 = vpack.c.b16 %v376, %v375
      %v415 = vpack.c.b16 %v378, %v377
      %v416 = vpack.c.b16 %v380, %v379
      %v417 = vpack.c.b16 %v382, %v381
      %v418 = vpack.c.b16 %v384, %v383
      %v419 = vpack.c.b16 %v386, %v385
      %v420 = vpack.c.b16 %v388, %v387
      %453 = vmatprep.subr.bf16.mxu0 0
      %454 = vmatpush1.bf16.msra.mxu0 %v389
      %455 = vmatprep.subr.bf16.mxu0 0
      %456 = vmatpush1.bf16.msra.mxu0 %v390
      %457 = vmatprep.subr.bf16.mxu0 0
      %458 = vmatpush1.bf16.msra.mxu0 %v391
      %459 = vmatprep.subr.bf16.mxu0 0
      %460 = vmatpush1.bf16.msra.mxu0 %v392
      %461 = vmatprep.subr.bf16.mxu0 0
      %462 = vmatpush1.bf16.msra.mxu0 %v393
      %463 = vmatprep.subr.bf16.mxu0 0
      %464 = vmatpush1.bf16.msra.mxu0 %v394
      %465 = vmatprep.subr.bf16.mxu0 0
      %466 = vmatpush1.bf16.msra.mxu0 %v395
      %467 = vmatprep.subr.bf16.mxu0 0
      %468 = vmatpush1.bf16.msra.mxu0 %v396
      %469 = vmatprep.subr.bf16.mxu0 0
      %470 = vmatpush1.bf16.msra.mxu0 %v397
      %471 = vmatprep.subr.bf16.mxu0 0
      %472 = vmatpush1.bf16.msra.mxu0 %v398
      %473 = vmatprep.subr.bf16.mxu0 0
      %474 = vmatpush1.bf16.msra.mxu0 %v399
      %475 = vmatprep.subr.bf16.mxu0 0
      %476 = vmatpush1.bf16.msra.mxu0 %v400
      %477 = vmatprep.subr.bf16.mxu0 0
      %478 = vmatpush1.bf16.msra.mxu0 %v401
      %479 = vmatprep.subr.bf16.mxu0 0
      %480 = vmatpush1.bf16.msra.mxu0 %v402
      %481 = vmatprep.subr.bf16.mxu0 0
      %482 = vmatpush1.bf16.msra.mxu0 %v403
      %483 = vmatprep.subr.bf16.mxu0 0
      %484 = vmatpush1.bf16.msra.mxu0 %v404
      %485 = vmatprep.mubr.bf16.mxu0 %v254
      %486 = vmatmul.mubr.bf16.gmra.mrb[0].mxu0 %v253
      %v487 = vpop.f32.mrb[0].mxu0
      %v488 = vadd.f32 0.0, %v487
      %v489 = vpop.f32.mrb[0].mxu0
      %v490 = vpop.f32.mrb[0].mxu0
      %v491 = vpop.f32.mrb[0].mxu0
      %492 = vdwg.mxu0
      %493 = vmatprep.subr.bf16.mxu0 0
      %494 = vmatpush1.bf16.msra.mxu0 %v405
      %495 = vmatprep.subr.bf16.mxu0 0
      %496 = vmatpush1.bf16.msra.mxu0 %v406
      %497 = vmatprep.subr.bf16.mxu0 0
      %498 = vmatpush1.bf16.msra.mxu0 %v407
      %499 = vmatprep.subr.bf16.mxu0 0
      %500 = vmatpush1.bf16.msra.mxu0 %v408
      %501 = vmatprep.subr.bf16.mxu0 0
      %502 = vmatpush1.bf16.msra.mxu0 %v409
      %503 = vmatprep.subr.bf16.mxu0 0
      %504 = vmatpush1.bf16.msra.mxu0 %v410
      %505 = vmatprep.subr.bf16.mxu0 0
      %506 = vmatpush1.bf16.msra.mxu0 %v411
      %507 = vmatprep.subr.bf16.mxu0 0
      %508 = vmatpush1.bf16.msra.mxu0 %v412
      %509 = vmatprep.subr.bf16.mxu0 0
      %510 = vmatpush1.bf16.msra.mxu0 %v413
      %511 = vmatprep.subr.bf16.mxu0 0
      %512 = vmatpush1.bf16.msra.mxu0 %v414
      %513 = vmatprep.subr.bf16.mxu0 0
      %514 = vmatpush1.bf16.msra.mxu0 %v415
      %515 = vmatprep.subr.bf16.mxu0 0
      %516 = vmatpush1.bf16.msra.mxu0 %v416
      %517 = vmatprep.subr.bf16.mxu0 0
      %518 = vmatpush1.bf16.msra.mxu0 %v417
      %519 = vmatprep.subr.bf16.mxu0 0
      %520 = vmatpush1.bf16.msra.mxu0 %v418
      %521 = vmatprep.subr.bf16.mxu0 0
      %522 = vmatpush1.bf16.msra.mxu0 %v419
      %523 = vmatprep.subr.bf16.mxu0 0
      %524 = vmatpush1.bf16.msra.mxu0 %v420
      %525 = vmatprep.mubr.bf16.mxu0 %v256
      %526 = vmatmul.mubr.bf16.gmra.mrb[0].mxu0 %v255
      %v527 = vpop.f32.mrb[0].mxu0
      %v528 = vadd.f32 %v488, %v527
      %v529 = vpop.f32.mrb[0].mxu0
      %v530 = vpop.f32.mrb[0].mxu0
      %v531 = vpop.f32.mrb[0].mxu0
      %532 = vdwg.mxu0
      %v533 = vpack.c.bf16 %v528, %v528
      %534 = vst [vmem:[%s175] sm:$0xf] %v533
      %v535 = vrot.slane %v528, 4
      %v536 = vadd.f32 %v528, %v535
      %v537 = vrot.slane %v536, 2
      %v538 = vadd.f32 %v536, %v537
      %v539 = vrot.slane %v538, 1
      %v540 = vadd.f32 %v538, %v539
      %v541 = vmul.f32 %v528, %v528
      %v542 = vrot.slane %v541, 4
      %v543 = vadd.f32 %v541, %v542
      %v544 = vrot.slane %v543, 2
      %v545 = vadd.f32 %v543, %v544
      %v546 = vrot.slane %v545, 1
      %v547 = vadd.f32 %v545, %v546
      %vm548 = vcmask 1040384
      %v549 = vsel %vm548, %v540, %v547
      %550 = vst [vmem:[%s179] sm:$0x3] %v549
      %p551 = scmp.lt.s32.totalorder %s15, 1
      %s552 = scalar_select %p551, %s15, 1
      %s553 = smul.addr %s552, 4
      %s554 = scalar_lea.vmem %s2, %s553
      %p555 = scmp.lt.s32.totalorder %s15, 1
      %s556 = scalar_select %p555, %s15, 1
      %s557 = smul.addr %s556, 2
      %s558 = scalar_lea.vmem %s3, %s557
      // Predicated region
      $region29: #{_lambda_.8} parent=27 // pred_check
        %p559 = pneg %p80
      $region30: #{_lambda_.8} parent=27 // pred_check_branch
        %561 = sbr.rel (%p559) target = $region32
      $region31: #{_lambda_.8} parent=27 // pred_region
        _
      $region32: #{_lambda_.8} parent=27 // pred_fallthru
        _
      // Predicated region
      $region33: #{_lambda_.8} parent=27 // pred_check
        %p562 = pneg %p106
      $region34: #{_lambda_.8} parent=27 // pred_check_branch
        %564 = sbr.rel (%p562) target = $region36
      $region35: #{_lambda_.8} parent=27 // pred_region
        _
      $region36: #{_lambda_.8} parent=27 // pred_fallthru
        _
    $region28: #{_lambda_.8} parent=5 // pred_fallthru
      _
    %p565 = scmp.le.s32.totalorder 2, %s10
    // Predicated region
    $region37: #{_lambda_.8} parent=5 // pred_check
      %p566 = pneg %p565
    $region38: #{_lambda_.8} parent=5 // pred_check_branch
      %568 = sbr.rel (%p566) target = $region40
    $region39: #{_lambda_.8} parent=5 // pred_region
      %s569 = ssub.s32 %s10, 2
      // Predicated region
      $region41: #{_lambda_.8} parent=39 // pred_check
        %p570 = pneg %p86
      $region42: #{_lambda_.8} parent=39 // pred_check_branch
        %572 = sbr.rel (%p570) target = $region44
      $region43: #{_lambda_.8} parent=39 // pred_region
        %p573 = scmp.lt.s32.totalorder %s16, 1
        %s574 = scalar_select %p573, %s16, 1
        %s575 = smul.addr %s574, 4
        %s576 = scalar_lea.vmem %s2, %s575
      $region44: #{_lambda_.8} parent=39 // pred_fallthru
        _
      // Predicated region
      $region45: #{_lambda_.8} parent=39 // pred_check
        %p577 = pneg %p112
      $region46: #{_lambda_.8} parent=39 // pred_check_branch
        %579 = sbr.rel (%p577) target = $region48
      $region47: #{_lambda_.8} parent=39 // pred_region
        %p580 = scmp.lt.s32.totalorder %s16, 1
        %s581 = scalar_select %p580, %s16, 1
        %s582 = smul.addr %s581, 2
        %s583 = scalar_lea.vmem %s3, %s582
      $region48: #{_lambda_.8} parent=39 // pred_fallthru
        _
    $region40: #{_lambda_.8} parent=5 // pred_fallthru
      _
  $region6: #{_lambda_.8} parent=0 // loop_footer
    %s14 = sadd.s32 1, %s10
  $region7: #{_lambda_.8} parent=0 // loop_footer_branch
    %9 = sbr.rel target = $region3
  $region8: #{_lambda_.8} parent=0 // loop_exit
    _

// kernel: _lambda_.9
$region0: #{_lambda_.9}
  #allocation0 [shape = 'u32[]', space=smem, size = 0x4, offset = 0x4, fixed_abs, tag = 'smem constant byte address 0x4 - core index']
  #allocation1 [shape = 'u32[144,128]{1,0:T(1,128)}', space=vmem, size = 0x12000, scoped, tag = 'internal scratch']
  %s0 = inlined_call_operand.vmem [shape: bf16[16,1024], index: 0, kind: input, shape index: {}]
  %s1 = inlined_call_operand.vmem [shape: bf16[1024,128], index: 1, kind: input, shape index: {}]
  %s2 = inlined_call_operand.vmem [shape: f32[1,128], index: 2, kind: input, shape index: {}]
  %s3 = inlined_call_operand.vmem [shape: f32[16,128], index: 3, kind: output, shape index: {}]
  %s4 = sld [smem:[#allocation0]]
  $region45: #{_lambda_.9} parent=0
    _
  %s6 = ssub.s32 1, %s4
  %s7 = scalar_select 0, %s6, %s4
  loop: start=0, step=1, limit=4
  $region2: #{_lambda_.9} parent=0 // loop_pre_header
    _
  $region3: #{_lambda_.9} parent=0 // loop_header
    %s9 = sphi 0, %s13
    %p10 = scmp.ge.s32.totalorder %s9, 4
    %s19 = sphi 0, %s21
    %s22 = sphi 0, %s19
    %s23 = sphi 0, %s22
    %s39 = sphi 0, %s23
    %s43 = sphi 0, %s43
    %s45 = sphi 0, %s43
    %s46 = sphi 0, %s45
    %s60 = sphi 0, %s46
    %s64 = sphi 0, %s64
    %s66 = sphi 0, %s64
    %s67 = sphi 0, %s66
    %s81 = sphi 0, %s67
    %s87 = sphi 0, %s89
    %s90 = sphi 0, %s87
    %s91 = sphi 0, %s90
    %s107 = sphi 0, %s91
  $region4: #{_lambda_.9} parent=0 // loop_header_branch
    %12 = sbr.rel (%p10) target = $region8
  $region5: #{_lambda_.9} parent=0 // loop_body
    %s14 = ssub.s32 %s9, 1
    %s15 = ssub.s32 %s9, 2
    %s16 = sadd.s32 %s9, 1
    %s17 = ssub.s32 %s9, %s16
    %p18 = scmp.eq.s32.totalorder %s17, 0
    %s20 = sadd.s32 %s19, 1
    %s21 = scalar_select %p18, %s19, %s20
    %p24 = pneg %p18
    %p25 = scmp.eq.s32.totalorder %s9, 1
    %p26 = por %p24, %p25
    %p27 = scmp.ne.s32.totalorder %s19, %s22
    %p28 = scmp.eq.s32.totalorder %s9, 0
    %p29 = por %p27, %p28
    %p30 = scmp.ne.s32.totalorder %s19, %s22
    %p31 = scmp.eq.s32.totalorder %s14, 1
    %p32 = por %p30, %p31
    %p33 = scmp.ne.s32.totalorder %s22, %s23
    %p34 = scmp.eq.s32.totalorder %s14, 0
    %p35 = por %p33, %p34
    %p36 = scmp.ne.s32.totalorder %s22, %s23
    %p37 = scmp.eq.s32.totalorder %s15, 1
    %p38 = por %p36, %p37
    %p40 = scmp.ne.s32.totalorder %s23, %s39
    %p41 = scmp.eq.s32.totalorder %s15, 0
    %p42 = por %p40, %p41
    %s44 = sadd.s32 %s43, 1
    %p47 = scmp.eq.s32.totalorder %s9, 1
    %p48 = scmp.ne.s32.totalorder %s43, %s45
    %p49 = scmp.eq.s32.totalorder %s9, 0
    %p50 = por %p48, %p49
    %p51 = scmp.ne.s32.totalorder %s43, %s45
    %p52 = scmp.eq.s32.totalorder %s14, 1
    %p53 = por %p51, %p52
    %p54 = scmp.ne.s32.totalorder %s45, %s46
    %p55 = scmp.eq.s32.totalorder %s14, 0
    %p56 = por %p54, %p55
    %p57 = scmp.ne.s32.totalorder %s45, %s46
    %p58 = scmp.eq.s32.totalorder %s15, 1
    %p59 = por %p57, %p58
    %p61 = scmp.ne.s32.totalorder %s46, %s60
    %p62 = scmp.eq.s32.totalorder %s15, 0
    %p63 = por %p61, %p62
    %s65 = sadd.s32 %s64, 1
    %p68 = scmp.eq.s32.totalorder %s9, 1
    %p69 = scmp.ne.s32.totalorder %s64, %s66
    %p70 = scmp.eq.s32.totalorder %s9, 0
    %p71 = por %p69, %p70
    %p72 = scmp.ne.s32.totalorder %s64, %s66
    %p73 = scmp.eq.s32.totalorder %s14, 1
    %p74 = por %p72, %p73
    %p75 = scmp.ne.s32.totalorder %s66, %s67
    %p76 = scmp.eq.s32.totalorder %s14, 0
    %p77 = por %p75, %p76
    %p78 = scmp.ne.s32.totalorder %s66, %s67
    %p79 = scmp.eq.s32.totalorder %s15, 1
    %p80 = por %p78, %p79
    %p82 = scmp.ne.s32.totalorder %s67, %s81
    %p83 = scmp.eq.s32.totalorder %s15, 0
    %p84 = por %p82, %p83
    %s85 = ssub.s32 %s9, %s16
    %p86 = scmp.eq.s32.totalorder %s85, 0
    %s88 = sadd.s32 %s87, 1
    %s89 = scalar_select %p86, %s87, %s88
    %p92 = pneg %p86
    %p93 = scmp.eq.s32.totalorder %s9, 1
    %p94 = por %p92, %p93
    %p95 = scmp.ne.s32.totalorder %s87, %s90
    %p96 = scmp.eq.s32.totalorder %s9, 0
    %p97 = por %p95, %p96
    %p98 = scmp.ne.s32.totalorder %s87, %s90
    %p99 = scmp.eq.s32.totalorder %s14, 1
    %p100 = por %p98, %p99
    %p101 = scmp.ne.s32.totalorder %s90, %s91
    %p102 = scmp.eq.s32.totalorder %s14, 0
    %p103 = por %p101, %p102
    %p104 = scmp.ne.s32.totalorder %s90, %s91
    %p105 = scmp.eq.s32.totalorder %s15, 1
    %p106 = por %p104, %p105
    %p108 = scmp.ne.s32.totalorder %s91, %s107
    %p109 = scmp.eq.s32.totalorder %s15, 0
    %p110 = por %p108, %p109
    %p111 = scmp.le.s32.totalorder 1, %s9
    %p112 = scmp.lt.s32.totalorder %s9, 3
    %p113 = pnand %p111, %p112
    %p114 = pneg %p113
    // Predicated region
    $region9: #{_lambda_.9} parent=5 // pred_check
      _
    $region10: #{_lambda_.9} parent=5 // pred_check_branch
      %116 = sbr.rel (%p113) target = $region12
    $region11: #{_lambda_.9} parent=5 // pred_region
      %s117 = ssub.s32 %s9, 1
      // Predicated region
      $region13: #{_lambda_.9} parent=11 // pred_check
        %p118 = pneg %p56
      $region14: #{_lambda_.9} parent=11 // pred_check_branch
        %120 = sbr.rel (%p118) target = $region16
      $region15: #{_lambda_.9} parent=11 // pred_region
        _
      $region16: #{_lambda_.9} parent=11 // pred_fallthru
        _
      // Predicated region
      $region17: #{_lambda_.9} parent=11 // pred_check
        %p121 = pneg %p77
      $region18: #{_lambda_.9} parent=11 // pred_check_branch
        %123 = sbr.rel (%p121) target = $region20
      $region19: #{_lambda_.9} parent=11 // pred_region
        _
      $region20: #{_lambda_.9} parent=11 // pred_fallthru
        _
    $region12: #{_lambda_.9} parent=5 // pred_fallthru
      _
    %p124 = scmp.lt.s32.totalorder %s9, 2
    // Predicated region
    $region21: #{_lambda_.9} parent=5 // pred_check
      %p125 = pneg %p124
    $region22: #{_lambda_.9} parent=5 // pred_check_branch
      %127 = sbr.rel (%p125) target = $region24
    $region23: #{_lambda_.9} parent=5 // pred_region
      // Predicated region
      $region25: #{_lambda_.9} parent=23 // pred_check
        %p128 = pneg %p29
      $region26: #{_lambda_.9} parent=23 // pred_check_branch
        %130 = sbr.rel (%p128) target = $region28
      $region27: #{_lambda_.9} parent=23 // pred_region
        %p131 = scmp.lt.s32.totalorder %s9, 1
        %s132 = scalar_select %p131, %s9, 1
        %s133 = smul.addr %s132, 8
        %s134 = smul.addr %s133, 4
        %s135 = scalar_lea.vmem %s0, %s134
      $region28: #{_lambda_.9} parent=23 // pred_fallthru
        _
    $region24: #{_lambda_.9} parent=5 // pred_fallthru
      _
    %p136 = scmp.le.s32.totalorder 1, %s9
    %p137 = scmp.lt.s32.totalorder %s9, 3
    %p138 = pnand %p136, %p137
    %p139 = pneg %p138
    // Predicated region
    $region29: #{_lambda_.9} parent=5 // pred_check
      _
    $region30: #{_lambda_.9} parent=5 // pred_check_branch
      %141 = sbr.rel (%p138) target = $region32
    $region31: #{_lambda_.9} parent=5 // pred_region
      %s142 = ssub.s32 %s9, 1
      %p143 = scmp.lt.s32.totalorder %s14, 1
      %s144 = scalar_select %p143, %s14, 1
      %s145 = smul.addr %s144, 8
      %s146 = smul.addr %s145, 4
      %s147 = scalar_lea.vmem %s0, %s146
      %p148 = pneg %p35
      %p149 = pneg %p32
      %p150 = pneg %p56
      %p151 = pneg %p53
      %p152 = pneg %p77
      %p153 = pneg %p74
      %p154 = pneg %p103
      %p155 = pneg %p100
      %p156 = scmp.lt.s32.totalorder %s14, 1
      %s157 = scalar_select %p156, %s14, 1
      %s158 = smul.addr %s157, 8
      %s159 = scalar_lea.vmem %s3, %s158
      %p160 = scmp.lt.s32.totalorder %s14, 1
      %s161 = scalar_select %p160, %s14, 1
      %s162 = smul.addr %s161, 8
      %s163 = smul.addr %s162, 4
      %s164 = scalar_lea.vmem %s0, %s163
      %p165 = scmp.lt.s32.totalorder %s14, 1
      %s166 = scalar_select %p165, %s14, 1
      %s167 = smul.addr %s166, 8
      %s168 = scalar_lea.vmem %s3, %s167
      %v170 = vld [vmem:[%s164] sm:$0xff]
      %v171 = vld [vmem:[%s164 + $0x8] sm:$0xff]
      %v172 = vld [vmem:[%s164 + $0x10] sm:$0xff]
      %v173 = vld [vmem:[%s164 + $0x18] sm:$0xff]
      %v174 = vld [vmem:[%s1] sm:$0xf]
      %v175 = vld [vmem:[%s1 + $0x4] sm:$0xf]
      %v176 = vld [vmem:[%s1 + $0x8] sm:$0xf]
      %v177 = vld [vmem:[%s1 + $0xc] sm:$0xf]
      %v178 = vld [vmem:[%s1 + $0x10] sm:$0xf]
      %v179 = vld [vmem:[%s1 + $0x14] sm:$0xf]
      %v180 = vld [vmem:[%s1 + $0x18] sm:$0xf]
      %v181 = vld [vmem:[%s1 + $0x1c] sm:$0xf]
      %v182 = vld [vmem:[%s1 + $0x20] sm:$0xf]
      %v183 = vld [vmem:[%s1 + $0x24] sm:$0xf]
      %v184 = vld [vmem:[%s1 + $0x28] sm:$0xf]
      %v185 = vld [vmem:[%s1 + $0x2c] sm:$0xf]
      %v186 = vld [vmem:[%s1 + $0x30] sm:$0xf]
      %v187 = vld [vmem:[%s1 + $0x34] sm:$0xf]
      %v188 = vld [vmem:[%s1 + $0x38] sm:$0xf]
      %v189 = vld [vmem:[%s1 + $0x3c] sm:$0xf]
      %v190 = vld [vmem:[%s1 + $0x40] sm:$0xf]
      %v191 = vld [vmem:[%s1 + $0x44] sm:$0xf]
      %v192 = vld [vmem:[%s1 + $0x48] sm:$0xf]
      %v193 = vld [vmem:[%s1 + $0x4c] sm:$0xf]
      %v194 = vld [vmem:[%s1 + $0x50] sm:$0xf]
      %v195 = vld [vmem:[%s1 + $0x54] sm:$0xf]
      %v196 = vld [vmem:[%s1 + $0x58] sm:$0xf]
      %v197 = vld [vmem:[%s1 + $0x5c] sm:$0xf]
      %v198 = vld [vmem:[%s1 + $0x60] sm:$0xf]
      %v199 = vld [vmem:[%s1 + $0x64] sm:$0xf]
      %v200 = vld [vmem:[%s1 + $0x68] sm:$0xf]
      %v201 = vld [vmem:[%s1 + $0x6c] sm:$0xf]
      %v202 = vld [vmem:[%s1 + $0x70] sm:$0xf]
      %v203 = vld [vmem:[%s1 + $0x74] sm:$0xf]
      %v204 = vld [vmem:[%s1 + $0x78] sm:$0xf]
      %v205 = vld [vmem:[%s1 + $0x7c] sm:$0xf]
      %v206 = vld [vmem:[%s1 + $0x80] sm:$0xf]
      %v207 = vld [vmem:[%s1 + $0x84] sm:$0xf]
      %v208 = vld [vmem:[%s1 + $0x88] sm:$0xf]
      %v209 = vld [vmem:[%s1 + $0x8c] sm:$0xf]
      %v210 = vld [vmem:[%s1 + $0x90] sm:$0xf]
      %v211 = vld [vmem:[%s1 + $0x94] sm:$0xf]
      %v212 = vld [vmem:[%s1 + $0x98] sm:$0xf]
      %v213 = vld [vmem:[%s1 + $0x9c] sm:$0xf]
      %v214 = vld [vmem:[%s1 + $0xa0] sm:$0xf]
      %v215 = vld [vmem:[%s1 + $0xa4] sm:$0xf]
      %v216 = vld [vmem:[%s1 + $0xa8] sm:$0xf]
      %v217 = vld [vmem:[%s1 + $0xac] sm:$0xf]
      %v218 = vld [vmem:[%s1 + $0xb0] sm:$0xf]
      %v219 = vld [vmem:[%s1 + $0xb4] sm:$0xf]
      %v220 = vld [vmem:[%s1 + $0xb8] sm:$0xf]
      %v221 = vld [vmem:[%s1 + $0xbc] sm:$0xf]
      %v222 = vld [vmem:[%s1 + $0xc0] sm:$0xf]
      %v223 = vld [vmem:[%s1 + $0xc4] sm:$0xf]
      %v224 = vld [vmem:[%s1 + $0xc8] sm:$0xf]
      %v225 = vld [vmem:[%s1 + $0xcc] sm:$0xf]
      %v226 = vld [vmem:[%s1 + $0xd0] sm:$0xf]
      %v227 = vld [vmem:[%s1 + $0xd4] sm:$0xf]
      %v228 = vld [vmem:[%s1 + $0xd8] sm:$0xf]
      %v229 = vld [vmem:[%s1 + $0xdc] sm:$0xf]
      %v230 = vld [vmem:[%s1 + $0xe0] sm:$0xf]
      %v231 = vld [vmem:[%s1 + $0xe4] sm:$0xf]
      %v232 = vld [vmem:[%s1 + $0xe8] sm:$0xf]
      %v233 = vld [vmem:[%s1 + $0xec] sm:$0xf]
      %v234 = vld [vmem:[%s1 + $0xf0] sm:$0xf]
      %v235 = vld [vmem:[%s1 + $0xf4] sm:$0xf]
      %v236 = vld [vmem:[%s1 + $0xf8] sm:$0xf]
      %v237 = vld [vmem:[%s1 + $0xfc] sm:$0xf]
      %v238 = vld [vmem:[%s1 + $0x100] sm:$0xf]
      %v239 = vld [vmem:[%s1 + $0x104] sm:$0xf]
      %v240 = vld [vmem:[%s1 + $0x108] sm:$0xf]
      %v241 = vld [vmem:[%s1 + $0x10c] sm:$0xf]
      %v242 = vld [vmem:[%s1 + $0x110] sm:$0xf]
      %v243 = vld [vmem:[%s1 + $0x114] sm:$0xf]
      %v244 = vld [vmem:[%s1 + $0x118] sm:$0xf]
      %v245 = vld [vmem:[%s1 + $0x11c] sm:$0xf]
      %v246 = vld [vmem:[%s1 + $0x120] sm:$0xf]
      %v247 = vld [vmem:[%s1 + $0x124] sm:$0xf]
      %v248 = vld [vmem:[%s1 + $0x128] sm:$0xf]
      %v249 = vld [vmem:[%s1 + $0x12c] sm:$0xf]
      %v250 = vld [vmem:[%s1 + $0x130] sm:$0xf]
      %v251 = vld [vmem:[%s1 + $0x134] sm:$0xf]
      %v252 = vld [vmem:[%s1 + $0x138] sm:$0xf]
      %v253 = vld [vmem:[%s1 + $0x13c] sm:$0xf]
      %v254 = vld [vmem:[%s1 + $0x140] sm:$0xf]
      %v255 = vld [vmem:[%s1 + $0x144] sm:$0xf]
      %v256 = vld [vmem:[%s1 + $0x148] sm:$0xf]
      %v257 = vld [vmem:[%s1 + $0x14c] sm:$0xf]
      %v258 = vld [vmem:[%s1 + $0x150] sm:$0xf]
      %v259 = vld [vmem:[%s1 + $0x154] sm:$0xf]
      %v260 = vld [vmem:[%s1 + $0x158] sm:$0xf]
      %v261 = vld [vmem:[%s1 + $0x15c] sm:$0xf]
      %v262 = vld [vmem:[%s1 + $0x160] sm:$0xf]
      %v263 = vld [vmem:[%s1 + $0x164] sm:$0xf]
      %v264 = vld [vmem:[%s1 + $0x168] sm:$0xf]
      %v265 = vld [vmem:[%s1 + $0x16c] sm:$0xf]
      %v266 = vld [vmem:[%s1 + $0x170] sm:$0xf]
      %v267 = vld [vmem:[%s1 + $0x174] sm:$0xf]
      %v268 = vld [vmem:[%s1 + $0x178] sm:$0xf]
      %v269 = vld [vmem:[%s1 + $0x17c] sm:$0xf]
      %v270 = vld [vmem:[%s1 + $0x180] sm:$0xf]
      %v271 = vld [vmem:[%s1 + $0x184] sm:$0xf]
      %v272 = vld [vmem:[%s1 + $0x188] sm:$0xf]
      %v273 = vld [vmem:[%s1 + $0x18c] sm:$0xf]
      %v274 = vld [vmem:[%s1 + $0x190] sm:$0xf]
      %v275 = vld [vmem:[%s1 + $0x194] sm:$0xf]
      %v276 = vld [vmem:[%s1 + $0x198] sm:$0xf]
      %v277 = vld [vmem:[%s1 + $0x19c] sm:$0xf]
      %v278 = vld [vmem:[%s1 + $0x1a0] sm:$0xf]
      %v279 = vld [vmem:[%s1 + $0x1a4] sm:$0xf]
      %v280 = vld [vmem:[%s1 + $0x1a8] sm:$0xf]
      %v281 = vld [vmem:[%s1 + $0x1ac] sm:$0xf]
      %v282 = vld [vmem:[%s1 + $0x1b0] sm:$0xf]
      %v283 = vld [vmem:[%s1 + $0x1b4] sm:$0xf]
      %v284 = vld [vmem:[%s1 + $0x1b8] sm:$0xf]
      %v285 = vld [vmem:[%s1 + $0x1bc] sm:$0xf]
      %v286 = vld [vmem:[%s1 + $0x1c0] sm:$0xf]
      %v287 = vld [vmem:[%s1 + $0x1c4] sm:$0xf]
      %v288 = vld [vmem:[%s1 + $0x1c8] sm:$0xf]
      %v289 = vld [vmem:[%s1 + $0x1cc] sm:$0xf]
      %v290 = vld [vmem:[%s1 + $0x1d0] sm:$0xf]
      %v291 = vld [vmem:[%s1 + $0x1d4] sm:$0xf]
      %v292 = vld [vmem:[%s1 + $0x1d8] sm:$0xf]
      %v293 = vld [vmem:[%s1 + $0x1dc] sm:$0xf]
      %v294 = vld [vmem:[%s1 + $0x1e0] sm:$0xf]
      %v295 = vld [vmem:[%s1 + $0x1e4] sm:$0xf]
      %v296 = vld [vmem:[%s1 + $0x1e8] sm:$0xf]
      %v297 = vld [vmem:[%s1 + $0x1ec] sm:$0xf]
      %v298 = vld [vmem:[%s1 + $0x1f0] sm:$0xf]
      %v299 = vld [vmem:[%s1 + $0x1f4] sm:$0xf]
      %v300 = vld [vmem:[%s1 + $0x1f8] sm:$0xf]
      %v301 = vld [vmem:[%s1 + $0x1fc] sm:$0xf]
      %v302 = vld [vmem:[%s2] sm:$0x1]
      %v304 = vlaneseq
      %v305 = vshrl.u32 %v304, 7
      %v306 = vsub.s32 0, %v305
      %v307 = vrot.slane %v302, %v306
      %v313 = vunpack.c.l.b16 %v170
      %v314 = vunpack.c.h.b16 %v170
      %v315 = vunpack.c.l.b16 %v171
      %v316 = vunpack.c.h.b16 %v171
      %v317 = vunpack.c.l.b16 %v172
      %v318 = vunpack.c.h.b16 %v172
      %v319 = vunpack.c.l.b16 %v173
      %v320 = vunpack.c.h.b16 %v173
      %v321 = vpack.c.b16 %v313, %v313
      %v322 = vpack.c.b16 %v314, %v314
      %v323 = vpack.c.b16 %v315, %v315
      %v324 = vpack.c.b16 %v316, %v316
      %v325 = vpack.c.b16 %v317, %v317
      %v326 = vpack.c.b16 %v318, %v318
      %v327 = vpack.c.b16 %v319, %v319
      %v328 = vpack.c.b16 %v320, %v320
      %v465 = vunpack.c.l.b16 %v174
      %v466 = vunpack.c.l.b16 %v175
      %v467 = vunpack.c.l.b16 %v176
      %v468 = vunpack.c.l.b16 %v177
      %v469 = vunpack.c.l.b16 %v178
      %v470 = vunpack.c.l.b16 %v179
      %v471 = vunpack.c.l.b16 %v180
      %v472 = vunpack.c.l.b16 %v181
      %v473 = vunpack.c.l.b16 %v182
      %v474 = vunpack.c.l.b16 %v183
      %v475 = vunpack.c.l.b16 %v184
      %v476 = vunpack.c.l.b16 %v185
      %v477 = vunpack.c.l.b16 %v186
      %v478 = vunpack.c.l.b16 %v187
      %v479 = vunpack.c.l.b16 %v188
      %v480 = vunpack.c.l.b16 %v189
      %v481 = vunpack.c.l.b16 %v190
      %v482 = vunpack.c.l.b16 %v191
      %v483 = vunpack.c.l.b16 %v192
      %v484 = vunpack.c.l.b16 %v193
      %v485 = vunpack.c.l.b16 %v194
      %v486 = vunpack.c.l.b16 %v195
      %v487 = vunpack.c.l.b16 %v196
      %v488 = vunpack.c.l.b16 %v197
      %v489 = vunpack.c.l.b16 %v198
      %v490 = vunpack.c.l.b16 %v199
      %v491 = vunpack.c.l.b16 %v200
      %v492 = vunpack.c.l.b16 %v201
      %v493 = vunpack.c.l.b16 %v202
      %v494 = vunpack.c.l.b16 %v203
      %v495 = vunpack.c.l.b16 %v204
      %v496 = vunpack.c.l.b16 %v205
      %v497 = vunpack.c.l.b16 %v206
      %v498 = vunpack.c.l.b16 %v207
      %v499 = vunpack.c.l.b16 %v208
      %v500 = vunpack.c.l.b16 %v209
      %v501 = vunpack.c.l.b16 %v210
      %v502 = vunpack.c.l.b16 %v211
      %v503 = vunpack.c.l.b16 %v212
      %v504 = vunpack.c.l.b16 %v213
      %v505 = vunpack.c.l.b16 %v214
      %v506 = vunpack.c.l.b16 %v215
      %v507 = vunpack.c.l.b16 %v216
      %v508 = vunpack.c.l.b16 %v217
      %v509 = vunpack.c.l.b16 %v218
      %v510 = vunpack.c.l.b16 %v219
      %v511 = vunpack.c.l.b16 %v220
      %v512 = vunpack.c.l.b16 %v221
      %v513 = vunpack.c.l.b16 %v222
      %v514 = vunpack.c.l.b16 %v223
      %v515 = vunpack.c.l.b16 %v224
      %v516 = vunpack.c.l.b16 %v225
      %v517 = vunpack.c.l.b16 %v226
      %v518 = vunpack.c.l.b16 %v227
      %v519 = vunpack.c.l.b16 %v228
      %v520 = vunpack.c.l.b16 %v229
      %v521 = vunpack.c.l.b16 %v230
      %v522 = vunpack.c.l.b16 %v231
      %v523 = vunpack.c.l.b16 %v232
      %v524 = vunpack.c.l.b16 %v233
      %v525 = vunpack.c.l.b16 %v234
      %v526 = vunpack.c.l.b16 %v235
      %v527 = vunpack.c.l.b16 %v236
      %v528 = vunpack.c.l.b16 %v237
      %v529 = vunpack.c.l.b16 %v238
      %v530 = vunpack.c.l.b16 %v239
      %v531 = vunpack.c.l.b16 %v240
      %v532 = vunpack.c.l.b16 %v241
      %v533 = vunpack.c.l.b16 %v242
      %v534 = vunpack.c.l.b16 %v243
      %v535 = vunpack.c.l.b16 %v244
      %v536 = vunpack.c.l.b16 %v245
      %v537 = vunpack.c.l.b16 %v246
      %v538 = vunpack.c.l.b16 %v247
      %v539 = vunpack.c.l.b16 %v248
      %v540 = vunpack.c.l.b16 %v249
      %v541 = vunpack.c.l.b16 %v250
      %v542 = vunpack.c.l.b16 %v251
      %v543 = vunpack.c.l.b16 %v252
      %v544 = vunpack.c.l.b16 %v253
      %v545 = vunpack.c.l.b16 %v254
      %v546 = vunpack.c.l.b16 %v255
      %v547 = vunpack.c.l.b16 %v256
      %v548 = vunpack.c.l.b16 %v257
      %v549 = vunpack.c.l.b16 %v258
      %v550 = vunpack.c.l.b16 %v259
      %v551 = vunpack.c.l.b16 %v260
      %v552 = vunpack.c.l.b16 %v261
      %v553 = vunpack.c.l.b16 %v262
      %v554 = vunpack.c.l.b16 %v263
      %v555 = vunpack.c.l.b16 %v264
      %v556 = vunpack.c.l.b16 %v265
      %v557 = vunpack.c.l.b16 %v266
      %v558 = vunpack.c.l.b16 %v267
      %v559 = vunpack.c.l.b16 %v268
      %v560 = vunpack.c.l.b16 %v269
      %v561 = vunpack.c.l.b16 %v270
      %v562 = vunpack.c.l.b16 %v271
      %v563 = vunpack.c.l.b16 %v272
      %v564 = vunpack.c.l.b16 %v273
      %v565 = vunpack.c.l.b16 %v274
      %v566 = vunpack.c.l.b16 %v275
      %v567 = vunpack.c.l.b16 %v276
      %v568 = vunpack.c.l.b16 %v277
      %v569 = vunpack.c.l.b16 %v278
      %v570 = vunpack.c.l.b16 %v279
      %v571 = vunpack.c.l.b16 %v280
      %v572 = vunpack.c.l.b16 %v281
      %v573 = vunpack.c.l.b16 %v282
      %v574 = vunpack.c.l.b16 %v283
      %v575 = vunpack.c.l.b16 %v284
      %v576 = vunpack.c.l.b16 %v285
      %v577 = vunpack.c.l.b16 %v286
      %v578 = vunpack.c.l.b16 %v287
      %v579 = vunpack.c.l.b16 %v288
      %v580 = vunpack.c.l.b16 %v289
      %v581 = vunpack.c.l.b16 %v290
      %v582 = vunpack.c.l.b16 %v291
      %v583 = vunpack.c.l.b16 %v292
      %v584 = vunpack.c.l.b16 %v293
      %v585 = vunpack.c.l.b16 %v294
      %v586 = vunpack.c.l.b16 %v295
      %v587 = vunpack.c.l.b16 %v296
      %v588 = vunpack.c.l.b16 %v297
      %v589 = vunpack.c.l.b16 %v298
      %v590 = vunpack.c.l.b16 %v299
      %v591 = vunpack.c.l.b16 %v300
      %v592 = vunpack.c.l.b16 %v301
      %v593 = vpack.c.b16 %v466, %v465
      %v594 = vpack.c.b16 %v468, %v467
      %v595 = vpack.c.b16 %v470, %v469
      %v596 = vpack.c.b16 %v472, %v471
      %v597 = vpack.c.b16 %v474, %v473
      %v598 = vpack.c.b16 %v476, %v475
      %v599 = vpack.c.b16 %v478, %v477
      %v600 = vpack.c.b16 %v480, %v479
      %v601 = vpack.c.b16 %v482, %v481
      %v602 = vpack.c.b16 %v484, %v483
      %v603 = vpack.c.b16 %v486, %v485
      %v604 = vpack.c.b16 %v488, %v487
      %v605 = vpack.c.b16 %v490, %v489
      %v606 = vpack.c.b16 %v492, %v491
      %v607 = vpack.c.b16 %v494, %v493
      %v608 = vpack.c.b16 %v496, %v495
      %v609 = vpack.c.b16 %v498, %v497
      %v610 = vpack.c.b16 %v500, %v499
      %v611 = vpack.c.b16 %v502, %v501
      %v612 = vpack.c.b16 %v504, %v503
      %v613 = vpack.c.b16 %v506, %v505
      %v614 = vpack.c.b16 %v508, %v507
      %v615 = vpack.c.b16 %v510, %v509
      %v616 = vpack.c.b16 %v512, %v511
      %v617 = vpack.c.b16 %v514, %v513
      %v618 = vpack.c.b16 %v516, %v515
      %v619 = vpack.c.b16 %v518, %v517
      %v620 = vpack.c.b16 %v520, %v519
      %v621 = vpack.c.b16 %v522, %v521
      %v622 = vpack.c.b16 %v524, %v523
      %v623 = vpack.c.b16 %v526, %v525
      %v624 = vpack.c.b16 %v528, %v527
      %v625 = vpack.c.b16 %v530, %v529
      %v626 = vpack.c.b16 %v532, %v531
      %v627 = vpack.c.b16 %v534, %v533
      %v628 = vpack.c.b16 %v536, %v535
      %v629 = vpack.c.b16 %v538, %v537
      %v630 = vpack.c.b16 %v540, %v539
      %v631 = vpack.c.b16 %v542, %v541
      %v632 = vpack.c.b16 %v544, %v543
      %v633 = vpack.c.b16 %v546, %v545
      %v634 = vpack.c.b16 %v548, %v547
      %v635 = vpack.c.b16 %v550, %v549
      %v636 = vpack.c.b16 %v552, %v551
      %v637 = vpack.c.b16 %v554, %v553
      %v638 = vpack.c.b16 %v556, %v555
      %v639 = vpack.c.b16 %v558, %v557
      %v640 = vpack.c.b16 %v560, %v559
      %v641 = vpack.c.b16 %v562, %v561
      %v642 = vpack.c.b16 %v564, %v563
      %v643 = vpack.c.b16 %v566, %v565
      %v644 = vpack.c.b16 %v568, %v567
      %v645 = vpack.c.b16 %v570, %v569
      %v646 = vpack.c.b16 %v572, %v571
      %v647 = vpack.c.b16 %v574, %v573
      %v648 = vpack.c.b16 %v576, %v575
      %v649 = vpack.c.b16 %v578, %v577
      %v650 = vpack.c.b16 %v580, %v579
      %v651 = vpack.c.b16 %v582, %v581
      %v652 = vpack.c.b16 %v584, %v583
      %v653 = vpack.c.b16 %v586, %v585
      %v654 = vpack.c.b16 %v588, %v587
      %v655 = vpack.c.b16 %v590, %v589
      %v656 = vpack.c.b16 %v592, %v591
      %721 = vmatprep.subr.bf16.mxu0 0
      %722 = vmatpush1.bf16.msra.mxu0 %v593
      %723 = vmatprep.subr.bf16.mxu0 0
      %724 = vmatpush1.bf16.msra.mxu0 %v594
      %725 = vmatprep.subr.bf16.mxu0 0
      %726 = vmatpush1.bf16.msra.mxu0 %v595
      %727 = vmatprep.subr.bf16.mxu0 0
      %728 = vmatpush1.bf16.msra.mxu0 %v596
      %729 = vmatprep.subr.bf16.mxu0 0
      %730 = vmatpush1.bf16.msra.mxu0 %v597
      %731 = vmatprep.subr.bf16.mxu0 0
      %732 = vmatpush1.bf16.msra.mxu0 %v598
      %733 = vmatprep.subr.bf16.mxu0 0
      %734 = vmatpush1.bf16.msra.mxu0 %v599
      %735 = vmatprep.subr.bf16.mxu0 0
      %736 = vmatpush1.bf16.msra.mxu0 %v600
      %737 = vmatprep.subr.bf16.mxu0 0
      %738 = vmatpush1.bf16.msra.mxu0 %v601
      %739 = vmatprep.subr.bf16.mxu0 0
      %740 = vmatpush1.bf16.msra.mxu0 %v602
      %741 = vmatprep.subr.bf16.mxu0 0
      %742 = vmatpush1.bf16.msra.mxu0 %v603
      %743 = vmatprep.subr.bf16.mxu0 0
      %744 = vmatpush1.bf16.msra.mxu0 %v604
      %745 = vmatprep.subr.bf16.mxu0 0
      %746 = vmatpush1.bf16.msra.mxu0 %v605
      %747 = vmatprep.subr.bf16.mxu0 0
      %748 = vmatpush1.bf16.msra.mxu0 %v606
      %749 = vmatprep.subr.bf16.mxu0 0
      %750 = vmatpush1.bf16.msra.mxu0 %v607
      %751 = vmatprep.subr.bf16.mxu0 0
      %752 = vmatpush1.bf16.msra.mxu0 %v608
      %753 = vmatprep.mubr.bf16.mxu0 %v322
      %754 = vmatmul.mubr.bf16.gmra.mrb[0].mxu0 %v321
      %v755 = vpop.f32.mrb[0].mxu0
      %v756 = vadd.f32 %v307, %v755
      %v757 = vpop.f32.mrb[0].mxu0
      %v758 = vpop.f32.mrb[0].mxu0
      %v759 = vpop.f32.mrb[0].mxu0
      %760 = vdwg.mxu0
      %761 = vmatprep.subr.bf16.mxu0 0
      %762 = vmatpush1.bf16.msra.mxu0 %v609
      %763 = vmatprep.subr.bf16.mxu0 0
      %764 = vmatpush1.bf16.msra.mxu0 %v610
      %765 = vmatprep.subr.bf16.mxu0 0
      %766 = vmatpush1.bf16.msra.mxu0 %v611
      %767 = vmatprep.subr.bf16.mxu0 0
      %768 = vmatpush1.bf16.msra.mxu0 %v612
      %769 = vmatprep.subr.bf16.mxu0 0
      %770 = vmatpush1.bf16.msra.mxu0 %v613
      %771 = vmatprep.subr.bf16.mxu0 0
      %772 = vmatpush1.bf16.msra.mxu0 %v614
      %773 = vmatprep.subr.bf16.mxu0 0
      %774 = vmatpush1.bf16.msra.mxu0 %v615
      %775 = vmatprep.subr.bf16.mxu0 0
      %776 = vmatpush1.bf16.msra.mxu0 %v616
      %777 = vmatprep.subr.bf16.mxu0 0
      %778 = vmatpush1.bf16.msra.mxu0 %v617
      %779 = vmatprep.subr.bf16.mxu0 0
      %780 = vmatpush1.bf16.msra.mxu0 %v618
      %781 = vmatprep.subr.bf16.mxu0 0
      %782 = vmatpush1.bf16.msra.mxu0 %v619
      %783 = vmatprep.subr.bf16.mxu0 0
      %784 = vmatpush1.bf16.msra.mxu0 %v620
      %785 = vmatprep.subr.bf16.mxu0 0
      %786 = vmatpush1.bf16.msra.mxu0 %v621
      %787 = vmatprep.subr.bf16.mxu0 0
      %788 = vmatpush1.bf16.msra.mxu0 %v622
      %789 = vmatprep.subr.bf16.mxu0 0
      %790 = vmatpush1.bf16.msra.mxu0 %v623
      %791 = vmatprep.subr.bf16.mxu0 0
      %792 = vmatpush1.bf16.msra.mxu0 %v624
      %793 = vmatprep.mubr.bf16.mxu0 %v324
      %794 = vmatmul.mubr.bf16.gmra.mrb[0].mxu0 %v323
      %v795 = vpop.f32.mrb[0].mxu0
      %v796 = vadd.f32 %v756, %v795
      %v797 = vpop.f32.mrb[0].mxu0
      %v798 = vpop.f32.mrb[0].mxu0
      %v799 = vpop.f32.mrb[0].mxu0
      %800 = vdwg.mxu0
      %801 = vmatprep.subr.bf16.mxu0 0
      %802 = vmatpush1.bf16.msra.mxu0 %v625
      %803 = vmatprep.subr.bf16.mxu0 0
      %804 = vmatpush1.bf16.msra.mxu0 %v626
      %805 = vmatprep.subr.bf16.mxu0 0
      %806 = vmatpush1.bf16.msra.mxu0 %v627
      %807 = vmatprep.subr.bf16.mxu0 0
      %808 = vmatpush1.bf16.msra.mxu0 %v628
      %809 = vmatprep.subr.bf16.mxu0 0
      %810 = vmatpush1.bf16.msra.mxu0 %v629
      %811 = vmatprep.subr.bf16.mxu0 0
      %812 = vmatpush1.bf16.msra.mxu0 %v630
      %813 = vmatprep.subr.bf16.mxu0 0
      %814 = vmatpush1.bf16.msra.mxu0 %v631
      %815 = vmatprep.subr.bf16.mxu0 0
      %816 = vmatpush1.bf16.msra.mxu0 %v632
      %817 = vmatprep.subr.bf16.mxu0 0
      %818 = vmatpush1.bf16.msra.mxu0 %v633
      %819 = vmatprep.subr.bf16.mxu0 0
      %820 = vmatpush1.bf16.msra.mxu0 %v634
      %821 = vmatprep.subr.bf16.mxu0 0
      %822 = vmatpush1.bf16.msra.mxu0 %v635
      %823 = vmatprep.subr.bf16.mxu0 0
      %824 = vmatpush1.bf16.msra.mxu0 %v636
      %825 = vmatprep.subr.bf16.mxu0 0
      %826 = vmatpush1.bf16.msra.mxu0 %v637
      %827 = vmatprep.subr.bf16.mxu0 0
      %828 = vmatpush1.bf16.msra.mxu0 %v638
      %829 = vmatprep.subr.bf16.mxu0 0
      %830 = vmatpush1.bf16.msra.mxu0 %v639
      %831 = vmatprep.subr.bf16.mxu0 0
      %832 = vmatpush1.bf16.msra.mxu0 %v640
      %833 = vmatprep.mubr.bf16.mxu0 %v326
      %834 = vmatmul.mubr.bf16.gmra.mrb[0].mxu0 %v325
      %v835 = vpop.f32.mrb[0].mxu0
      %v836 = vadd.f32 %v796, %v835
      %v837 = vpop.f32.mrb[0].mxu0
      %v838 = vpop.f32.mrb[0].mxu0
      %v839 = vpop.f32.mrb[0].mxu0
      %840 = vdwg.mxu0
      %841 = vmatprep.subr.bf16.mxu0 0
      %842 = vmatpush1.bf16.msra.mxu0 %v641
      %843 = vmatprep.subr.bf16.mxu0 0
      %844 = vmatpush1.bf16.msra.mxu0 %v642
      %845 = vmatprep.subr.bf16.mxu0 0
      %846 = vmatpush1.bf16.msra.mxu0 %v643
      %847 = vmatprep.subr.bf16.mxu0 0
      %848 = vmatpush1.bf16.msra.mxu0 %v644
      %849 = vmatprep.subr.bf16.mxu0 0
      %850 = vmatpush1.bf16.msra.mxu0 %v645
      %851 = vmatprep.subr.bf16.mxu0 0
      %852 = vmatpush1.bf16.msra.mxu0 %v646
      %853 = vmatprep.subr.bf16.mxu0 0
      %854 = vmatpush1.bf16.msra.mxu0 %v647
      %855 = vmatprep.subr.bf16.mxu0 0
      %856 = vmatpush1.bf16.msra.mxu0 %v648
      %857 = vmatprep.subr.bf16.mxu0 0
      %858 = vmatpush1.bf16.msra.mxu0 %v649
      %859 = vmatprep.subr.bf16.mxu0 0
      %860 = vmatpush1.bf16.msra.mxu0 %v650
      %861 = vmatprep.subr.bf16.mxu0 0
      %862 = vmatpush1.bf16.msra.mxu0 %v651
      %863 = vmatprep.subr.bf16.mxu0 0
      %864 = vmatpush1.bf16.msra.mxu0 %v652
      %865 = vmatprep.subr.bf16.mxu0 0
      %866 = vmatpush1.bf16.msra.mxu0 %v653
      %867 = vmatprep.subr.bf16.mxu0 0
      %868 = vmatpush1.bf16.msra.mxu0 %v654
      %869 = vmatprep.subr.bf16.mxu0 0
      %870 = vmatpush1.bf16.msra.mxu0 %v655
      %871 = vmatprep.subr.bf16.mxu0 0
      %872 = vmatpush1.bf16.msra.mxu0 %v656
      %873 = vmatprep.mubr.bf16.mxu0 %v328
      %874 = vmatmul.mubr.bf16.gmra.mrb[0].mxu0 %v327
      %v875 = vpop.f32.mrb[0].mxu0
      %v876 = vadd.f32 %v836, %v875
      %v877 = vpop.f32.mrb[0].mxu0
      %v878 = vpop.f32.mrb[0].mxu0
      %v879 = vpop.f32.mrb[0].mxu0
      %880 = vdwg.mxu0
      %v881 = vsub.f32 0.0, %v876
      %v882 = vmul.f32 %v881, 1.442695
      %v883 = vpow.pop %v882
      %v884 = vadd.f32 %v883, 1.0
      %v885 = vrcp.pop %v884
      %v886 = vmul.f32 1.0, %v885
      %887 = vst [vmem:[%s168] sm:$0xff] %v886
      %p888 = scmp.lt.s32.totalorder %s14, 1
      %s889 = scalar_select %p888, %s14, 1
      %s890 = smul.addr %s889, 8
      %s891 = scalar_lea.vmem %s3, %s890
      // Predicated region
      $region33: #{_lambda_.9} parent=31 // pred_check
        %p892 = pneg %p100
      $region34: #{_lambda_.9} parent=31 // pred_check_branch
        %894 = sbr.rel (%p892) target = $region36
      $region35: #{_lambda_.9} parent=31 // pred_region
        _
      $region36: #{_lambda_.9} parent=31 // pred_fallthru
        _
    $region32: #{_lambda_.9} parent=5 // pred_fallthru
      _
    %p895 = scmp.le.s32.totalorder 2, %s9
    // Predicated region
    $region37: #{_lambda_.9} parent=5 // pred_check
      %p896 = pneg %p895
    $region38: #{_lambda_.9} parent=5 // pred_check_branch
      %898 = sbr.rel (%p896) target = $region40
    $region39: #{_lambda_.9} parent=5 // pred_region
      %s899 = ssub.s32 %s9, 2
      // Predicated region
      $region41: #{_lambda_.9} parent=39 // pred_check
        %p900 = pneg %p106
      $region42: #{_lambda_.9} parent=39 // pred_check_branch
        %902 = sbr.rel (%p900) target = $region44
      $region43: #{_lambda_.9} parent=39 // pred_region
        %p903 = scmp.lt.s32.totalorder %s15, 1
        %s904 = scalar_select %p903, %s15, 1
        %s905 = smul.addr %s904, 8
        %s906 = scalar_lea.vmem %s3, %s905
      $region44: #{_lambda_.9} parent=39 // pred_fallthru
        _
    $region40: #{_lambda_.9} parent=5 // pred_fallthru
      _
  $region6: #{_lambda_.9} parent=0 // loop_footer
    %s13 = sadd.s32 1, %s9
  $region7: #{_lambda_.9} parent=0 // loop_footer_branch
    %8 = sbr.rel target = $region3
  $region8: #{_lambda_.9} parent=0 // loop_exit
    _

</llo_original>
